<compile_context>
chip_gen: v5e
topology: v5e:2x2
jax: 0.10.0
libtpu: 0.0.40
codegen_flags: <defaults>
</compile_context>

<pallas_src>
import numpy as np

import jax
import jax.numpy as jnp
from jax import lax
from jax.experimental import pallas as pl
from jax.experimental.pallas import tpu as pltpu

TB = 8          # images per grid step (multiple of 8 => f32 sublane-aligned reshapes)
OUT_PAD = 128   # FC output padded to one full lane width (unmasked store)


# ----------------------------------------------------------------------------
# Parameters (PyTorch layout) and one-time packing into kernel layout
# ----------------------------------------------------------------------------
def init_params(key, num_classes=10):
    k1, k2, k3, k4, k5, k6 = jax.random.split(key, 6)
    return {
        "conv1_w": 0.10 * jax.random.normal(k1, (20, 1, 5, 5), jnp.float32),
        "conv1_b": 0.10 * jax.random.normal(k2, (20,), jnp.float32),
        "conv2_w": 0.05 * jax.random.normal(k3, (50, 20, 5, 5), jnp.float32),
        "conv2_b": 0.05 * jax.random.normal(k4, (50,), jnp.float32),
        "fc_w": 0.02 * jax.random.normal(k5, (num_classes, 4 * 4 * 50), jnp.float32),
        "fc_b": 0.02 * jax.random.normal(k6, (num_classes,), jnp.float32),
    }


def prepare_params(params, num_classes):
    """Init-time packing: build banded (Toeplitz-along-W) conv weights for even/odd
    output columns, tile biases to the lane layout, and pre-permute + pad the FC
    weight so the kernel never transposes anything at run time."""
    assert num_classes <= OUT_PAD
    w1 = np.asarray(params["conv1_w"], np.float32)   # (20, 1, 5, 5)  [oc, c, kh, kw]
    b1 = np.asarray(params["conv1_b"], np.float32)   # (20,)
    w2 = np.asarray(params["conv2_w"], np.float32)   # (50, 20, 5, 5)
    b2 = np.asarray(params["conv2_b"], np.float32)   # (50,)
    wf = np.asarray(params["fc_w"], np.float32)      # (num_classes, 800)
    bf = np.asarray(params["fc_b"], np.float32)      # (num_classes,)

    # conv1: T1[par*5+i, wj, q*20+oc] = w1[oc, 0, i, j]  with wj = 2*q + par + j.
    # Row block i of the input (W axis, 28 wide) x T1 -> all conv1 columns of
    # parity `par` (output wo = 2q+par), lane index = q*20 + oc.
    t1 = np.zeros((2, 5, 28, 12, 20), np.float32)
    for par in range(2):
        for i in range(5):
            for q in range(12):
                for j in range(5):
                    t1[par, i, 2 * q + par + j, q, :] = w1[:, 0, i, j]
    t1 = t1.reshape(10, 28, 240)

    # conv2: input lanes are (q*20 + c) from pooled conv1; output lanes (q2*50 + oc).
    # T2[par*5+i, q*20+c, q2*50+oc] = w2[oc, c, i, j]  with q = 2*q2 + par + j.
    t2 = np.zeros((2, 5, 12, 20, 4, 50), np.float32)
    for par in range(2):
        for i in range(5):
            for q2 in range(4):
                for j in range(5):
                    t2[par, i, 2 * q2 + par + j, :, q2, :] = w2[:, :, i, j].T  # (c, oc)
    t2 = t2.reshape(10, 240, 200)

    # FC: PyTorch flattens (c, h, w) -> f = c*16 + h*4 + w.  The kernel's pooled
    # activation slice a2[h] has lanes ordered (w*50 + c).  Fold the permutation
    # into the weight and zero-pad the output dim to 128 lanes.
    wfp = np.zeros((4, 4, 50, OUT_PAD), np.float32)                       # (h, w, c, o)
    wfp[:, :, :, :num_classes] = wf.reshape(num_classes, 50, 4, 4).transpose(2, 3, 1, 0)
    wfp = wfp.reshape(4, 200, OUT_PAD)

    bfp = np.zeros((1, OUT_PAD), np.float32)
    bfp[0, :num_classes] = bf

    return {
        "t1": jnp.asarray(t1, jnp.bfloat16),
        "b1": jnp.asarray(np.tile(b1, 12).reshape(1, 240), jnp.float32),
        "t2": jnp.asarray(t2, jnp.bfloat16),
        "b2": jnp.asarray(np.tile(b2, 4).reshape(1, 200), jnp.float32),
        "wf": jnp.asarray(wfp, jnp.bfloat16),
        "bf": jnp.asarray(bfp, jnp.float32),
    }


# ----------------------------------------------------------------------------
# Fused Pallas kernel: conv1+ReLU+pool1 -> conv2+ReLU+pool2 -> fc, all in VMEM
# ----------------------------------------------------------------------------
def _mnist_fused_kernel(x_ref, t1_ref, b1_ref, t2_ref, b2_ref, wf_ref, bf_ref, o_ref):
    tb = x_ref.shape[1]
    x = x_ref[...]                                           # (28, TB, 28) f32

    # ---- conv1 (+bias, ReLU), even/odd output columns; 2x2 max-pool fused ----
    def conv1(par):
        acc = jnp.zeros((24 * tb, 240), jnp.float32) + b1_ref[...]
        for i in range(5):
            xi = x[i:i + 24].reshape(24 * tb, 28).astype(jnp.bfloat16)
            acc = acc + jnp.dot(xi, t1_ref[par * 5 + i],
                                preferred_element_type=jnp.float32)
        return jnp.maximum(acc, 0.0)                         # rows=(ho,b), lanes=(q,oc)

    a = jnp.maximum(conv1(0), conv1(1))                      # max over W pairs (24*TB,240)
    a = a.reshape(12, 2, tb, 240)
    a1 = jnp.maximum(a[:, 0], a[:, 1])                       # max over H pairs (12,TB,240)

    # ---- conv2 (+bias, ReLU), even/odd output columns; 2x2 max-pool fused ----
    def conv2(par):
        acc = jnp.zeros((8 * tb, 200), jnp.float32) + b2_ref[...]
        for i in range(5):
            ai = a1[i:i + 8].reshape(8 * tb, 240).astype(jnp.bfloat16)
            acc = acc + jnp.dot(ai, t2_ref[par * 5 + i],
                                preferred_element_type=jnp.float32)
        return jnp.maximum(acc, 0.0)                         # rows=(h2,b), lanes=(q2,oc2)

    c = jnp.maximum(conv2(0), conv2(1))                      # (8*TB, 200)
    c = c.reshape(4, 2, tb, 200)
    a2 = jnp.maximum(c[:, 0], c[:, 1])                       # (4, TB, 200)

    # ---- fully connected (output padded to 128 lanes -> unmasked store) ----
    acc = jnp.zeros((tb, OUT_PAD), jnp.float32) + bf_ref[...]
    for h in range(4):
        acc = acc + jnp.dot(a2[h].astype(jnp.bfloat16), wf_ref[h],
                            preferred_element_type=jnp.float32)
    o_ref[...] = acc


# ----------------------------------------------------------------------------
# Forward wrapper
# ----------------------------------------------------------------------------
def mnist_net_forward(packed, x_nchw, *, num_classes):
    B = x_nchw.shape[0]
    assert x_nchw.shape[1:] == (1, 28, 28), x_nchw.shape
    bp = ((B + TB - 1) // TB) * TB

    # Input glue only: (B,1,28,28) -> (28, B, 28)  [H, B, W], pad batch to TB.
    x = jnp.transpose(x_nchw.reshape(B, 28, 28), (1, 0, 2)).astype(jnp.float32)
    if bp != B:
        x = jnp.pad(x, ((0, 0), (0, bp - B), (0, 0)))

    out = pl.pallas_call(
        _mnist_fused_kernel,
        out_shape=jax.ShapeDtypeStruct((bp, OUT_PAD), jnp.float32),
        grid=(bp // TB,),
        in_specs=[
            pl.BlockSpec((28, TB, 28), lambda bt: (0, bt, 0)),       # input batch tile
            pl.BlockSpec((10, 28, 240), lambda bt: (0, 0, 0)),       # conv1 banded w
            pl.BlockSpec((1, 240), lambda bt: (0, 0)),               # conv1 bias (lane)
            pl.BlockSpec((10, 240, 200), lambda bt: (0, 0, 0)),      # conv2 banded w
            pl.BlockSpec((1, 200), lambda bt: (0, 0)),               # conv2 bias (lane)
            pl.BlockSpec((4, 200, OUT_PAD), lambda bt: (0, 0, 0)),   # fc weight (padded)
            pl.BlockSpec((1, OUT_PAD), lambda bt: (0, 0)),           # fc bias (padded)
        ],
        out_specs=pl.BlockSpec((TB, OUT_PAD), lambda bt: (bt, 0)),
        compiler_params=pltpu.CompilerParams(
            dimension_semantics=("parallel",),
            vmem_limit_bytes=32 * 1024 * 1024,
        ),
    )(x, packed["t1"], packed["b1"], packed["t2"], packed["b2"],
      packed["wf"], packed["bf"])

    return out[:B, :num_classes]


# ----------------------------------------------------------------------------
# Pure-JAX reference (f32) of the original PyTorch module, for validation
# ----------------------------------------------------------------------------
def _reference_forward(params, x_nchw):
    dn = ("NCHW", "OIHW", "NCHW")
    x = lax.conv_general_dilated(x_nchw, params["conv1_w"], (1, 1), "VALID",
                                 dimension_numbers=dn)
    x = jnp.maximum(x + params["conv1_b"][None, :, None, None], 0.0)
    x = lax.reduce_window(x, -jnp.inf, lax.max, (1, 1, 2, 2), (1, 1, 2, 2), "VALID")
    x = lax.conv_general_dilated(x, params["conv2_w"], (1, 1), "VALID",
                                 dimension_numbers=dn)
    x = jnp.maximum(x + params["conv2_b"][None, :, None, None], 0.0)
    x = lax.reduce_window(x, -jnp.inf, lax.max, (1, 1, 2, 2), (1, 1, 2, 2), "VALID")
    x = x.reshape(x.shape[0], -1)                     # (B, 50*4*4), (c,h,w) order
    return x @ params["fc_w"].T + params["fc_b"]


# ----------------------------------------------------------------------------
if __name__ == "__main__":
    num_classes = 10
    batch = 2                       # 28x28 input is required by the module (fc = 4*4*50)

    key = jax.random.PRNGKey(0)
    pkey, xkey = jax.random.split(key)
    params = init_params(pkey, num_classes=num_classes)
    packed = prepare_params(params, num_classes)
    x = jax.random.normal(xkey, (batch, 1, 28, 28), jnp.float32)

    fwd = jax.jit(lambda p, xx: mnist_net_forward(p, xx, num_classes=num_classes))
    logits = fwd(packed, x)
    jax.block_until_ready(logits)

    assert logits.shape == (batch, num_classes), logits.shape
    assert logits.dtype == jnp.float32

    # Validate fused-kernel semantics against the f32 reference (bf16 matmul
    # operands with f32 accumulation -> small expected drift).
    ref = _reference_forward(params, x)
    err = float(jnp.max(jnp.abs(logits - ref)))
    assert err < 1e-1, f"max |kernel - reference| = {err}"

    print("KERNEL_OK")
</pallas_src>

<mosaic_0001>
module attributes {stable_mosaic.version = 11 : i64} {
  func.func @_mnist_fused_kernel(%arg0: i32, %arg1: memref<28x8x28xf32, #tpu.memory_space<vmem>>, %arg2: memref<10x28x240xbf16, #tpu.memory_space<vmem>>, %arg3: memref<1x240xf32, #tpu.memory_space<vmem>>, %arg4: memref<10x240x200xbf16, #tpu.memory_space<vmem>>, %arg5: memref<1x200xf32, #tpu.memory_space<vmem>>, %arg6: memref<4x200x128xbf16, #tpu.memory_space<vmem>>, %arg7: memref<1x128xf32, #tpu.memory_space<vmem>>, %arg8: memref<8x128xf32, #tpu.memory_space<vmem>>) attributes {dimension_semantics = [#tpu.dimension_semantics<parallel>], iteration_bounds = array<i64: 1>, scalar_prefetch = 0 : i64, scratch_operands = 0 : i64, tpu.core_type = #tpu.core_type<tc>, window_params = [{transform_indices = @transform_0, window_bounds = array<i64: 28, 8, 28>}, {pipeline_mode = #tpu.pipeline_mode<synchronous>, transform_indices = @transform_1, window_bounds = array<i64: 10, 28, 240>}, {pipeline_mode = #tpu.pipeline_mode<synchronous>, transform_indices = @transform_2, window_bounds = array<i64: 1, 240>}, {pipeline_mode = #tpu.pipeline_mode<synchronous>, transform_indices = @transform_3, window_bounds = array<i64: 10, 240, 200>}, {pipeline_mode = #tpu.pipeline_mode<synchronous>, transform_indices = @transform_4, window_bounds = array<i64: 1, 200>}, {pipeline_mode = #tpu.pipeline_mode<synchronous>, transform_indices = @transform_5, window_bounds = array<i64: 4, 200, 128>}, {pipeline_mode = #tpu.pipeline_mode<synchronous>, transform_indices = @transform_6, window_bounds = array<i64: 1, 128>}, {transform_indices = @transform_7, window_bounds = array<i64: 8, 128>}]} {
    %c0 = arith.constant 0 : index
    %c0_0 = arith.constant 0 : index
    %c0_1 = arith.constant 0 : index
    %0 = vector.load %arg1[%c0, %c0_0, %c0_1] : memref<28x8x28xf32, #tpu.memory_space<vmem>>, vector<28x8x28xf32>
    %cst = arith.constant 0.000000e+00 : f32
    %1 = vector.broadcast %cst : f32 to vector<192x240xf32>
    %c0_2 = arith.constant 0 : index
    %c0_3 = arith.constant 0 : index
    %2 = vector.load %arg3[%c0_2, %c0_3] : memref<1x240xf32, #tpu.memory_space<vmem>>, vector<1x240xf32>
    %3 = vector.broadcast %2 : vector<1x240xf32> to vector<192x240xf32>
    %4 = arith.addf %1, %3 : vector<192x240xf32>
    %5 = vector.extract_strided_slice %0 {offsets = [0, 0, 0], sizes = [24, 8, 28], strides = [1, 1, 1]} : vector<28x8x28xf32> to vector<24x8x28xf32>
    %6 = vector.shape_cast %5 : vector<24x8x28xf32> to vector<192x28xf32>
    %7 = arith.truncf %6 : vector<192x28xf32> to vector<192x28xbf16>
    %c0_4 = arith.constant 0 : index
    %c0_5 = arith.constant 0 : index
    %c0_6 = arith.constant 0 : index
    %8 = vector.load %arg2[%c0_4, %c0_5, %c0_6] : memref<10x28x240xbf16, #tpu.memory_space<vmem>>, vector<1x28x240xbf16>
    %9 = vector.shape_cast %8 : vector<1x28x240xbf16> to vector<28x240xbf16>
    %cst_7 = arith.constant dense<0.000000e+00> : vector<192x240xf32>
    %10 = tpu.matmul %7, %9, %cst_7 {dimension_numbers = #tpu.dot_dimension_numbers<[1], [0], [0], [1], [0, 0, 1, 1], [], []>} : vector<192x28xbf16>, vector<28x240xbf16>, vector<192x240xf32> -> vector<192x240xf32>
    %11 = arith.addf %4, %10 : vector<192x240xf32>
    %12 = vector.extract_strided_slice %0 {offsets = [1, 0, 0], sizes = [24, 8, 28], strides = [1, 1, 1]} : vector<28x8x28xf32> to vector<24x8x28xf32>
    %13 = vector.shape_cast %12 : vector<24x8x28xf32> to vector<192x28xf32>
    %14 = arith.truncf %13 : vector<192x28xf32> to vector<192x28xbf16>
    %c1 = arith.constant 1 : index
    %c0_8 = arith.constant 0 : index
    %c0_9 = arith.constant 0 : index
    %15 = vector.load %arg2[%c1, %c0_8, %c0_9] : memref<10x28x240xbf16, #tpu.memory_space<vmem>>, vector<1x28x240xbf16>
    %16 = vector.shape_cast %15 : vector<1x28x240xbf16> to vector<28x240xbf16>
    %cst_10 = arith.constant dense<0.000000e+00> : vector<192x240xf32>
    %17 = tpu.matmul %14, %16, %cst_10 {dimension_numbers = #tpu.dot_dimension_numbers<[1], [0], [0], [1], [0, 0, 1, 1], [], []>} : vector<192x28xbf16>, vector<28x240xbf16>, vector<192x240xf32> -> vector<192x240xf32>
    %18 = arith.addf %11, %17 : vector<192x240xf32>
    %19 = vector.extract_strided_slice %0 {offsets = [2, 0, 0], sizes = [24, 8, 28], strides = [1, 1, 1]} : vector<28x8x28xf32> to vector<24x8x28xf32>
    %20 = vector.shape_cast %19 : vector<24x8x28xf32> to vector<192x28xf32>
    %21 = arith.truncf %20 : vector<192x28xf32> to vector<192x28xbf16>
    %c2 = arith.constant 2 : index
    %c0_11 = arith.constant 0 : index
    %c0_12 = arith.constant 0 : index
    %22 = vector.load %arg2[%c2, %c0_11, %c0_12] : memref<10x28x240xbf16, #tpu.memory_space<vmem>>, vector<1x28x240xbf16>
    %23 = vector.shape_cast %22 : vector<1x28x240xbf16> to vector<28x240xbf16>
    %cst_13 = arith.constant dense<0.000000e+00> : vector<192x240xf32>
    %24 = tpu.matmul %21, %23, %cst_13 {dimension_numbers = #tpu.dot_dimension_numbers<[1], [0], [0], [1], [0, 0, 1, 1], [], []>} : vector<192x28xbf16>, vector<28x240xbf16>, vector<192x240xf32> -> vector<192x240xf32>
    %25 = arith.addf %18, %24 : vector<192x240xf32>
    %26 = vector.extract_strided_slice %0 {offsets = [3, 0, 0], sizes = [24, 8, 28], strides = [1, 1, 1]} : vector<28x8x28xf32> to vector<24x8x28xf32>
    %27 = vector.shape_cast %26 : vector<24x8x28xf32> to vector<192x28xf32>
    %28 = arith.truncf %27 : vector<192x28xf32> to vector<192x28xbf16>
    %c3 = arith.constant 3 : index
    %c0_14 = arith.constant 0 : index
    %c0_15 = arith.constant 0 : index
    %29 = vector.load %arg2[%c3, %c0_14, %c0_15] : memref<10x28x240xbf16, #tpu.memory_space<vmem>>, vector<1x28x240xbf16>
    %30 = vector.shape_cast %29 : vector<1x28x240xbf16> to vector<28x240xbf16>
    %cst_16 = arith.constant dense<0.000000e+00> : vector<192x240xf32>
    %31 = tpu.matmul %28, %30, %cst_16 {dimension_numbers = #tpu.dot_dimension_numbers<[1], [0], [0], [1], [0, 0, 1, 1], [], []>} : vector<192x28xbf16>, vector<28x240xbf16>, vector<192x240xf32> -> vector<192x240xf32>
    %32 = arith.addf %25, %31 : vector<192x240xf32>
    %33 = vector.extract_strided_slice %0 {offsets = [4, 0, 0], sizes = [24, 8, 28], strides = [1, 1, 1]} : vector<28x8x28xf32> to vector<24x8x28xf32>
    %34 = vector.shape_cast %33 : vector<24x8x28xf32> to vector<192x28xf32>
    %35 = arith.truncf %34 : vector<192x28xf32> to vector<192x28xbf16>
    %c4 = arith.constant 4 : index
    %c0_17 = arith.constant 0 : index
    %c0_18 = arith.constant 0 : index
    %36 = vector.load %arg2[%c4, %c0_17, %c0_18] : memref<10x28x240xbf16, #tpu.memory_space<vmem>>, vector<1x28x240xbf16>
    %37 = vector.shape_cast %36 : vector<1x28x240xbf16> to vector<28x240xbf16>
    %cst_19 = arith.constant dense<0.000000e+00> : vector<192x240xf32>
    %38 = tpu.matmul %35, %37, %cst_19 {dimension_numbers = #tpu.dot_dimension_numbers<[1], [0], [0], [1], [0, 0, 1, 1], [], []>} : vector<192x28xbf16>, vector<28x240xbf16>, vector<192x240xf32> -> vector<192x240xf32>
    %39 = arith.addf %32, %38 : vector<192x240xf32>
    %cst_20 = arith.constant 0.000000e+00 : f32
    %40 = vector.broadcast %cst_20 : f32 to vector<192x240xf32>
    %41 = arith.maximumf %39, %40 : vector<192x240xf32>
    %cst_21 = arith.constant 0.000000e+00 : f32
    %42 = vector.broadcast %cst_21 : f32 to vector<192x240xf32>
    %c0_22 = arith.constant 0 : index
    %c0_23 = arith.constant 0 : index
    %43 = vector.load %arg3[%c0_22, %c0_23] : memref<1x240xf32, #tpu.memory_space<vmem>>, vector<1x240xf32>
    %44 = vector.broadcast %43 : vector<1x240xf32> to vector<192x240xf32>
    %45 = arith.addf %42, %44 : vector<192x240xf32>
    %46 = vector.extract_strided_slice %0 {offsets = [0, 0, 0], sizes = [24, 8, 28], strides = [1, 1, 1]} : vector<28x8x28xf32> to vector<24x8x28xf32>
    %47 = vector.shape_cast %46 : vector<24x8x28xf32> to vector<192x28xf32>
    %48 = arith.truncf %47 : vector<192x28xf32> to vector<192x28xbf16>
    %c5 = arith.constant 5 : index
    %c0_24 = arith.constant 0 : index
    %c0_25 = arith.constant 0 : index
    %49 = vector.load %arg2[%c5, %c0_24, %c0_25] : memref<10x28x240xbf16, #tpu.memory_space<vmem>>, vector<1x28x240xbf16>
    %50 = vector.shape_cast %49 : vector<1x28x240xbf16> to vector<28x240xbf16>
    %cst_26 = arith.constant dense<0.000000e+00> : vector<192x240xf32>
    %51 = tpu.matmul %48, %50, %cst_26 {dimension_numbers = #tpu.dot_dimension_numbers<[1], [0], [0], [1], [0, 0, 1, 1], [], []>} : vector<192x28xbf16>, vector<28x240xbf16>, vector<192x240xf32> -> vector<192x240xf32>
    %52 = arith.addf %45, %51 : vector<192x240xf32>
    %53 = vector.extract_strided_slice %0 {offsets = [1, 0, 0], sizes = [24, 8, 28], strides = [1, 1, 1]} : vector<28x8x28xf32> to vector<24x8x28xf32>
    %54 = vector.shape_cast %53 : vector<24x8x28xf32> to vector<192x28xf32>
    %55 = arith.truncf %54 : vector<192x28xf32> to vector<192x28xbf16>
    %c6 = arith.constant 6 : index
    %c0_27 = arith.constant 0 : index
    %c0_28 = arith.constant 0 : index
    %56 = vector.load %arg2[%c6, %c0_27, %c0_28] : memref<10x28x240xbf16, #tpu.memory_space<vmem>>, vector<1x28x240xbf16>
    %57 = vector.shape_cast %56 : vector<1x28x240xbf16> to vector<28x240xbf16>
    %cst_29 = arith.constant dense<0.000000e+00> : vector<192x240xf32>
    %58 = tpu.matmul %55, %57, %cst_29 {dimension_numbers = #tpu.dot_dimension_numbers<[1], [0], [0], [1], [0, 0, 1, 1], [], []>} : vector<192x28xbf16>, vector<28x240xbf16>, vector<192x240xf32> -> vector<192x240xf32>
    %59 = arith.addf %52, %58 : vector<192x240xf32>
    %60 = vector.extract_strided_slice %0 {offsets = [2, 0, 0], sizes = [24, 8, 28], strides = [1, 1, 1]} : vector<28x8x28xf32> to vector<24x8x28xf32>
    %61 = vector.shape_cast %60 : vector<24x8x28xf32> to vector<192x28xf32>
    %62 = arith.truncf %61 : vector<192x28xf32> to vector<192x28xbf16>
    %c7 = arith.constant 7 : index
    %c0_30 = arith.constant 0 : index
    %c0_31 = arith.constant 0 : index
    %63 = vector.load %arg2[%c7, %c0_30, %c0_31] : memref<10x28x240xbf16, #tpu.memory_space<vmem>>, vector<1x28x240xbf16>
    %64 = vector.shape_cast %63 : vector<1x28x240xbf16> to vector<28x240xbf16>
    %cst_32 = arith.constant dense<0.000000e+00> : vector<192x240xf32>
    %65 = tpu.matmul %62, %64, %cst_32 {dimension_numbers = #tpu.dot_dimension_numbers<[1], [0], [0], [1], [0, 0, 1, 1], [], []>} : vector<192x28xbf16>, vector<28x240xbf16>, vector<192x240xf32> -> vector<192x240xf32>
    %66 = arith.addf %59, %65 : vector<192x240xf32>
    %67 = vector.extract_strided_slice %0 {offsets = [3, 0, 0], sizes = [24, 8, 28], strides = [1, 1, 1]} : vector<28x8x28xf32> to vector<24x8x28xf32>
    %68 = vector.shape_cast %67 : vector<24x8x28xf32> to vector<192x28xf32>
    %69 = arith.truncf %68 : vector<192x28xf32> to vector<192x28xbf16>
    %c8 = arith.constant 8 : index
    %c0_33 = arith.constant 0 : index
    %c0_34 = arith.constant 0 : index
    %70 = vector.load %arg2[%c8, %c0_33, %c0_34] : memref<10x28x240xbf16, #tpu.memory_space<vmem>>, vector<1x28x240xbf16>
    %71 = vector.shape_cast %70 : vector<1x28x240xbf16> to vector<28x240xbf16>
    %cst_35 = arith.constant dense<0.000000e+00> : vector<192x240xf32>
    %72 = tpu.matmul %69, %71, %cst_35 {dimension_numbers = #tpu.dot_dimension_numbers<[1], [0], [0], [1], [0, 0, 1, 1], [], []>} : vector<192x28xbf16>, vector<28x240xbf16>, vector<192x240xf32> -> vector<192x240xf32>
    %73 = arith.addf %66, %72 : vector<192x240xf32>
    %74 = vector.extract_strided_slice %0 {offsets = [4, 0, 0], sizes = [24, 8, 28], strides = [1, 1, 1]} : vector<28x8x28xf32> to vector<24x8x28xf32>
    %75 = vector.shape_cast %74 : vector<24x8x28xf32> to vector<192x28xf32>
    %76 = arith.truncf %75 : vector<192x28xf32> to vector<192x28xbf16>
    %c9 = arith.constant 9 : index
    %c0_36 = arith.constant 0 : index
    %c0_37 = arith.constant 0 : index
    %77 = vector.load %arg2[%c9, %c0_36, %c0_37] : memref<10x28x240xbf16, #tpu.memory_space<vmem>>, vector<1x28x240xbf16>
    %78 = vector.shape_cast %77 : vector<1x28x240xbf16> to vector<28x240xbf16>
    %cst_38 = arith.constant dense<0.000000e+00> : vector<192x240xf32>
    %79 = tpu.matmul %76, %78, %cst_38 {dimension_numbers = #tpu.dot_dimension_numbers<[1], [0], [0], [1], [0, 0, 1, 1], [], []>} : vector<192x28xbf16>, vector<28x240xbf16>, vector<192x240xf32> -> vector<192x240xf32>
    %80 = arith.addf %73, %79 : vector<192x240xf32>
    %cst_39 = arith.constant 0.000000e+00 : f32
    %81 = vector.broadcast %cst_39 : f32 to vector<192x240xf32>
    %82 = arith.maximumf %80, %81 : vector<192x240xf32>
    %83 = arith.maximumf %41, %82 : vector<192x240xf32>
    %84 = vector.shape_cast %83 : vector<192x240xf32> to vector<12x2x8x240xf32>
    %85 = vector.extract_strided_slice %84 {offsets = [0, 0, 0, 0], sizes = [12, 1, 8, 240], strides = [1, 1, 1, 1]} : vector<12x2x8x240xf32> to vector<12x1x8x240xf32>
    %86 = vector.shape_cast %85 : vector<12x1x8x240xf32> to vector<12x8x240xf32>
    %87 = vector.extract_strided_slice %84 {offsets = [0, 1, 0, 0], sizes = [12, 1, 8, 240], strides = [1, 1, 1, 1]} : vector<12x2x8x240xf32> to vector<12x1x8x240xf32>
    %88 = vector.shape_cast %87 : vector<12x1x8x240xf32> to vector<12x8x240xf32>
    %89 = arith.maximumf %86, %88 : vector<12x8x240xf32>
    %cst_40 = arith.constant 0.000000e+00 : f32
    %90 = vector.broadcast %cst_40 : f32 to vector<64x200xf32>
    %c0_41 = arith.constant 0 : index
    %c0_42 = arith.constant 0 : index
    %91 = vector.load %arg5[%c0_41, %c0_42] : memref<1x200xf32, #tpu.memory_space<vmem>>, vector<1x200xf32>
    %92 = vector.broadcast %91 : vector<1x200xf32> to vector<64x200xf32>
    %93 = arith.addf %90, %92 : vector<64x200xf32>
    %94 = vector.extract_strided_slice %89 {offsets = [0, 0, 0], sizes = [8, 8, 240], strides = [1, 1, 1]} : vector<12x8x240xf32> to vector<8x8x240xf32>
    %95 = vector.shape_cast %94 : vector<8x8x240xf32> to vector<64x240xf32>
    %96 = arith.truncf %95 : vector<64x240xf32> to vector<64x240xbf16>
    %c0_43 = arith.constant 0 : index
    %c0_44 = arith.constant 0 : index
    %c0_45 = arith.constant 0 : index
    %97 = vector.load %arg4[%c0_43, %c0_44, %c0_45] : memref<10x240x200xbf16, #tpu.memory_space<vmem>>, vector<1x240x200xbf16>
    %98 = vector.shape_cast %97 : vector<1x240x200xbf16> to vector<240x200xbf16>
    %cst_46 = arith.constant dense<0.000000e+00> : vector<64x200xf32>
    %99 = tpu.matmul %96, %98, %cst_46 {dimension_numbers = #tpu.dot_dimension_numbers<[1], [0], [0], [1], [0, 0, 1, 1], [], []>} : vector<64x240xbf16>, vector<240x200xbf16>, vector<64x200xf32> -> vector<64x200xf32>
    %100 = arith.addf %93, %99 : vector<64x200xf32>
    %101 = vector.extract_strided_slice %89 {offsets = [1, 0, 0], sizes = [8, 8, 240], strides = [1, 1, 1]} : vector<12x8x240xf32> to vector<8x8x240xf32>
    %102 = vector.shape_cast %101 : vector<8x8x240xf32> to vector<64x240xf32>
    %103 = arith.truncf %102 : vector<64x240xf32> to vector<64x240xbf16>
    %c1_47 = arith.constant 1 : index
    %c0_48 = arith.constant 0 : index
    %c0_49 = arith.constant 0 : index
    %104 = vector.load %arg4[%c1_47, %c0_48, %c0_49] : memref<10x240x200xbf16, #tpu.memory_space<vmem>>, vector<1x240x200xbf16>
    %105 = vector.shape_cast %104 : vector<1x240x200xbf16> to vector<240x200xbf16>
    %cst_50 = arith.constant dense<0.000000e+00> : vector<64x200xf32>
    %106 = tpu.matmul %103, %105, %cst_50 {dimension_numbers = #tpu.dot_dimension_numbers<[1], [0], [0], [1], [0, 0, 1, 1], [], []>} : vector<64x240xbf16>, vector<240x200xbf16>, vector<64x200xf32> -> vector<64x200xf32>
    %107 = arith.addf %100, %106 : vector<64x200xf32>
    %108 = vector.extract_strided_slice %89 {offsets = [2, 0, 0], sizes = [8, 8, 240], strides = [1, 1, 1]} : vector<12x8x240xf32> to vector<8x8x240xf32>
    %109 = vector.shape_cast %108 : vector<8x8x240xf32> to vector<64x240xf32>
    %110 = arith.truncf %109 : vector<64x240xf32> to vector<64x240xbf16>
    %c2_51 = arith.constant 2 : index
    %c0_52 = arith.constant 0 : index
    %c0_53 = arith.constant 0 : index
    %111 = vector.load %arg4[%c2_51, %c0_52, %c0_53] : memref<10x240x200xbf16, #tpu.memory_space<vmem>>, vector<1x240x200xbf16>
    %112 = vector.shape_cast %111 : vector<1x240x200xbf16> to vector<240x200xbf16>
    %cst_54 = arith.constant dense<0.000000e+00> : vector<64x200xf32>
    %113 = tpu.matmul %110, %112, %cst_54 {dimension_numbers = #tpu.dot_dimension_numbers<[1], [0], [0], [1], [0, 0, 1, 1], [], []>} : vector<64x240xbf16>, vector<240x200xbf16>, vector<64x200xf32> -> vector<64x200xf32>
    %114 = arith.addf %107, %113 : vector<64x200xf32>
    %115 = vector.extract_strided_slice %89 {offsets = [3, 0, 0], sizes = [8, 8, 240], strides = [1, 1, 1]} : vector<12x8x240xf32> to vector<8x8x240xf32>
    %116 = vector.shape_cast %115 : vector<8x8x240xf32> to vector<64x240xf32>
    %117 = arith.truncf %116 : vector<64x240xf32> to vector<64x240xbf16>
    %c3_55 = arith.constant 3 : index
    %c0_56 = arith.constant 0 : index
    %c0_57 = arith.constant 0 : index
    %118 = vector.load %arg4[%c3_55, %c0_56, %c0_57] : memref<10x240x200xbf16, #tpu.memory_space<vmem>>, vector<1x240x200xbf16>
    %119 = vector.shape_cast %118 : vector<1x240x200xbf16> to vector<240x200xbf16>
    %cst_58 = arith.constant dense<0.000000e+00> : vector<64x200xf32>
    %120 = tpu.matmul %117, %119, %cst_58 {dimension_numbers = #tpu.dot_dimension_numbers<[1], [0], [0], [1], [0, 0, 1, 1], [], []>} : vector<64x240xbf16>, vector<240x200xbf16>, vector<64x200xf32> -> vector<64x200xf32>
    %121 = arith.addf %114, %120 : vector<64x200xf32>
    %122 = vector.extract_strided_slice %89 {offsets = [4, 0, 0], sizes = [8, 8, 240], strides = [1, 1, 1]} : vector<12x8x240xf32> to vector<8x8x240xf32>
    %123 = vector.shape_cast %122 : vector<8x8x240xf32> to vector<64x240xf32>
    %124 = arith.truncf %123 : vector<64x240xf32> to vector<64x240xbf16>
    %c4_59 = arith.constant 4 : index
    %c0_60 = arith.constant 0 : index
    %c0_61 = arith.constant 0 : index
    %125 = vector.load %arg4[%c4_59, %c0_60, %c0_61] : memref<10x240x200xbf16, #tpu.memory_space<vmem>>, vector<1x240x200xbf16>
    %126 = vector.shape_cast %125 : vector<1x240x200xbf16> to vector<240x200xbf16>
    %cst_62 = arith.constant dense<0.000000e+00> : vector<64x200xf32>
    %127 = tpu.matmul %124, %126, %cst_62 {dimension_numbers = #tpu.dot_dimension_numbers<[1], [0], [0], [1], [0, 0, 1, 1], [], []>} : vector<64x240xbf16>, vector<240x200xbf16>, vector<64x200xf32> -> vector<64x200xf32>
    %128 = arith.addf %121, %127 : vector<64x200xf32>
    %cst_63 = arith.constant 0.000000e+00 : f32
    %129 = vector.broadcast %cst_63 : f32 to vector<64x200xf32>
    %130 = arith.maximumf %128, %129 : vector<64x200xf32>
    %cst_64 = arith.constant 0.000000e+00 : f32
    %131 = vector.broadcast %cst_64 : f32 to vector<64x200xf32>
    %c0_65 = arith.constant 0 : index
    %c0_66 = arith.constant 0 : index
    %132 = vector.load %arg5[%c0_65, %c0_66] : memref<1x200xf32, #tpu.memory_space<vmem>>, vector<1x200xf32>
    %133 = vector.broadcast %132 : vector<1x200xf32> to vector<64x200xf32>
    %134 = arith.addf %131, %133 : vector<64x200xf32>
    %135 = vector.extract_strided_slice %89 {offsets = [0, 0, 0], sizes = [8, 8, 240], strides = [1, 1, 1]} : vector<12x8x240xf32> to vector<8x8x240xf32>
    %136 = vector.shape_cast %135 : vector<8x8x240xf32> to vector<64x240xf32>
    %137 = arith.truncf %136 : vector<64x240xf32> to vector<64x240xbf16>
    %c5_67 = arith.constant 5 : index
    %c0_68 = arith.constant 0 : index
    %c0_69 = arith.constant 0 : index
    %138 = vector.load %arg4[%c5_67, %c0_68, %c0_69] : memref<10x240x200xbf16, #tpu.memory_space<vmem>>, vector<1x240x200xbf16>
    %139 = vector.shape_cast %138 : vector<1x240x200xbf16> to vector<240x200xbf16>
    %cst_70 = arith.constant dense<0.000000e+00> : vector<64x200xf32>
    %140 = tpu.matmul %137, %139, %cst_70 {dimension_numbers = #tpu.dot_dimension_numbers<[1], [0], [0], [1], [0, 0, 1, 1], [], []>} : vector<64x240xbf16>, vector<240x200xbf16>, vector<64x200xf32> -> vector<64x200xf32>
    %141 = arith.addf %134, %140 : vector<64x200xf32>
    %142 = vector.extract_strided_slice %89 {offsets = [1, 0, 0], sizes = [8, 8, 240], strides = [1, 1, 1]} : vector<12x8x240xf32> to vector<8x8x240xf32>
    %143 = vector.shape_cast %142 : vector<8x8x240xf32> to vector<64x240xf32>
    %144 = arith.truncf %143 : vector<64x240xf32> to vector<64x240xbf16>
    %c6_71 = arith.constant 6 : index
    %c0_72 = arith.constant 0 : index
    %c0_73 = arith.constant 0 : index
    %145 = vector.load %arg4[%c6_71, %c0_72, %c0_73] : memref<10x240x200xbf16, #tpu.memory_space<vmem>>, vector<1x240x200xbf16>
    %146 = vector.shape_cast %145 : vector<1x240x200xbf16> to vector<240x200xbf16>
    %cst_74 = arith.constant dense<0.000000e+00> : vector<64x200xf32>
    %147 = tpu.matmul %144, %146, %cst_74 {dimension_numbers = #tpu.dot_dimension_numbers<[1], [0], [0], [1], [0, 0, 1, 1], [], []>} : vector<64x240xbf16>, vector<240x200xbf16>, vector<64x200xf32> -> vector<64x200xf32>
    %148 = arith.addf %141, %147 : vector<64x200xf32>
    %149 = vector.extract_strided_slice %89 {offsets = [2, 0, 0], sizes = [8, 8, 240], strides = [1, 1, 1]} : vector<12x8x240xf32> to vector<8x8x240xf32>
    %150 = vector.shape_cast %149 : vector<8x8x240xf32> to vector<64x240xf32>
    %151 = arith.truncf %150 : vector<64x240xf32> to vector<64x240xbf16>
    %c7_75 = arith.constant 7 : index
    %c0_76 = arith.constant 0 : index
    %c0_77 = arith.constant 0 : index
    %152 = vector.load %arg4[%c7_75, %c0_76, %c0_77] : memref<10x240x200xbf16, #tpu.memory_space<vmem>>, vector<1x240x200xbf16>
    %153 = vector.shape_cast %152 : vector<1x240x200xbf16> to vector<240x200xbf16>
    %cst_78 = arith.constant dense<0.000000e+00> : vector<64x200xf32>
    %154 = tpu.matmul %151, %153, %cst_78 {dimension_numbers = #tpu.dot_dimension_numbers<[1], [0], [0], [1], [0, 0, 1, 1], [], []>} : vector<64x240xbf16>, vector<240x200xbf16>, vector<64x200xf32> -> vector<64x200xf32>
    %155 = arith.addf %148, %154 : vector<64x200xf32>
    %156 = vector.extract_strided_slice %89 {offsets = [3, 0, 0], sizes = [8, 8, 240], strides = [1, 1, 1]} : vector<12x8x240xf32> to vector<8x8x240xf32>
    %157 = vector.shape_cast %156 : vector<8x8x240xf32> to vector<64x240xf32>
    %158 = arith.truncf %157 : vector<64x240xf32> to vector<64x240xbf16>
    %c8_79 = arith.constant 8 : index
    %c0_80 = arith.constant 0 : index
    %c0_81 = arith.constant 0 : index
    %159 = vector.load %arg4[%c8_79, %c0_80, %c0_81] : memref<10x240x200xbf16, #tpu.memory_space<vmem>>, vector<1x240x200xbf16>
    %160 = vector.shape_cast %159 : vector<1x240x200xbf16> to vector<240x200xbf16>
    %cst_82 = arith.constant dense<0.000000e+00> : vector<64x200xf32>
    %161 = tpu.matmul %158, %160, %cst_82 {dimension_numbers = #tpu.dot_dimension_numbers<[1], [0], [0], [1], [0, 0, 1, 1], [], []>} : vector<64x240xbf16>, vector<240x200xbf16>, vector<64x200xf32> -> vector<64x200xf32>
    %162 = arith.addf %155, %161 : vector<64x200xf32>
    %163 = vector.extract_strided_slice %89 {offsets = [4, 0, 0], sizes = [8, 8, 240], strides = [1, 1, 1]} : vector<12x8x240xf32> to vector<8x8x240xf32>
    %164 = vector.shape_cast %163 : vector<8x8x240xf32> to vector<64x240xf32>
    %165 = arith.truncf %164 : vector<64x240xf32> to vector<64x240xbf16>
    %c9_83 = arith.constant 9 : index
    %c0_84 = arith.constant 0 : index
    %c0_85 = arith.constant 0 : index
    %166 = vector.load %arg4[%c9_83, %c0_84, %c0_85] : memref<10x240x200xbf16, #tpu.memory_space<vmem>>, vector<1x240x200xbf16>
    %167 = vector.shape_cast %166 : vector<1x240x200xbf16> to vector<240x200xbf16>
    %cst_86 = arith.constant dense<0.000000e+00> : vector<64x200xf32>
    %168 = tpu.matmul %165, %167, %cst_86 {dimension_numbers = #tpu.dot_dimension_numbers<[1], [0], [0], [1], [0, 0, 1, 1], [], []>} : vector<64x240xbf16>, vector<240x200xbf16>, vector<64x200xf32> -> vector<64x200xf32>
    %169 = arith.addf %162, %168 : vector<64x200xf32>
    %cst_87 = arith.constant 0.000000e+00 : f32
    %170 = vector.broadcast %cst_87 : f32 to vector<64x200xf32>
    %171 = arith.maximumf %169, %170 : vector<64x200xf32>
    %172 = arith.maximumf %130, %171 : vector<64x200xf32>
    %173 = vector.shape_cast %172 : vector<64x200xf32> to vector<4x2x8x200xf32>
    %174 = vector.extract_strided_slice %173 {offsets = [0, 0, 0, 0], sizes = [4, 1, 8, 200], strides = [1, 1, 1, 1]} : vector<4x2x8x200xf32> to vector<4x1x8x200xf32>
    %175 = vector.shape_cast %174 : vector<4x1x8x200xf32> to vector<4x8x200xf32>
    %176 = vector.extract_strided_slice %173 {offsets = [0, 1, 0, 0], sizes = [4, 1, 8, 200], strides = [1, 1, 1, 1]} : vector<4x2x8x200xf32> to vector<4x1x8x200xf32>
    %177 = vector.shape_cast %176 : vector<4x1x8x200xf32> to vector<4x8x200xf32>
    %178 = arith.maximumf %175, %177 : vector<4x8x200xf32>
    %cst_88 = arith.constant 0.000000e+00 : f32
    %179 = vector.broadcast %cst_88 : f32 to vector<8x128xf32>
    %c0_89 = arith.constant 0 : index
    %c0_90 = arith.constant 0 : index
    %180 = vector.load %arg7[%c0_89, %c0_90] : memref<1x128xf32, #tpu.memory_space<vmem>>, vector<1x128xf32>
    %181 = vector.broadcast %180 : vector<1x128xf32> to vector<8x128xf32>
    %182 = arith.addf %179, %181 : vector<8x128xf32>
    %183 = vector.extract_strided_slice %178 {offsets = [0, 0, 0], sizes = [1, 8, 200], strides = [1, 1, 1]} : vector<4x8x200xf32> to vector<1x8x200xf32>
    %184 = vector.shape_cast %183 : vector<1x8x200xf32> to vector<8x200xf32>
    %185 = arith.truncf %184 : vector<8x200xf32> to vector<8x200xbf16>
    %c0_91 = arith.constant 0 : index
    %c0_92 = arith.constant 0 : index
    %c0_93 = arith.constant 0 : index
    %186 = vector.load %arg6[%c0_91, %c0_92, %c0_93] : memref<4x200x128xbf16, #tpu.memory_space<vmem>>, vector<1x200x128xbf16>
    %187 = vector.shape_cast %186 : vector<1x200x128xbf16> to vector<200x128xbf16>
    %cst_94 = arith.constant dense<0.000000e+00> : vector<8x128xf32>
    %188 = tpu.matmul %185, %187, %cst_94 {dimension_numbers = #tpu.dot_dimension_numbers<[1], [0], [0], [1], [0, 0, 1, 1], [], []>} : vector<8x200xbf16>, vector<200x128xbf16>, vector<8x128xf32> -> vector<8x128xf32>
    %189 = arith.addf %182, %188 : vector<8x128xf32>
    %190 = vector.extract_strided_slice %178 {offsets = [1, 0, 0], sizes = [1, 8, 200], strides = [1, 1, 1]} : vector<4x8x200xf32> to vector<1x8x200xf32>
    %191 = vector.shape_cast %190 : vector<1x8x200xf32> to vector<8x200xf32>
    %192 = arith.truncf %191 : vector<8x200xf32> to vector<8x200xbf16>
    %c1_95 = arith.constant 1 : index
    %c0_96 = arith.constant 0 : index
    %c0_97 = arith.constant 0 : index
    %193 = vector.load %arg6[%c1_95, %c0_96, %c0_97] : memref<4x200x128xbf16, #tpu.memory_space<vmem>>, vector<1x200x128xbf16>
    %194 = vector.shape_cast %193 : vector<1x200x128xbf16> to vector<200x128xbf16>
    %cst_98 = arith.constant dense<0.000000e+00> : vector<8x128xf32>
    %195 = tpu.matmul %192, %194, %cst_98 {dimension_numbers = #tpu.dot_dimension_numbers<[1], [0], [0], [1], [0, 0, 1, 1], [], []>} : vector<8x200xbf16>, vector<200x128xbf16>, vector<8x128xf32> -> vector<8x128xf32>
    %196 = arith.addf %189, %195 : vector<8x128xf32>
    %197 = vector.extract_strided_slice %178 {offsets = [2, 0, 0], sizes = [1, 8, 200], strides = [1, 1, 1]} : vector<4x8x200xf32> to vector<1x8x200xf32>
    %198 = vector.shape_cast %197 : vector<1x8x200xf32> to vector<8x200xf32>
    %199 = arith.truncf %198 : vector<8x200xf32> to vector<8x200xbf16>
    %c2_99 = arith.constant 2 : index
    %c0_100 = arith.constant 0 : index
    %c0_101 = arith.constant 0 : index
    %200 = vector.load %arg6[%c2_99, %c0_100, %c0_101] : memref<4x200x128xbf16, #tpu.memory_space<vmem>>, vector<1x200x128xbf16>
    %201 = vector.shape_cast %200 : vector<1x200x128xbf16> to vector<200x128xbf16>
    %cst_102 = arith.constant dense<0.000000e+00> : vector<8x128xf32>
    %202 = tpu.matmul %199, %201, %cst_102 {dimension_numbers = #tpu.dot_dimension_numbers<[1], [0], [0], [1], [0, 0, 1, 1], [], []>} : vector<8x200xbf16>, vector<200x128xbf16>, vector<8x128xf32> -> vector<8x128xf32>
    %203 = arith.addf %196, %202 : vector<8x128xf32>
    %204 = vector.extract_strided_slice %178 {offsets = [3, 0, 0], sizes = [1, 8, 200], strides = [1, 1, 1]} : vector<4x8x200xf32> to vector<1x8x200xf32>
    %205 = vector.shape_cast %204 : vector<1x8x200xf32> to vector<8x200xf32>
    %206 = arith.truncf %205 : vector<8x200xf32> to vector<8x200xbf16>
    %c3_103 = arith.constant 3 : index
    %c0_104 = arith.constant 0 : index
    %c0_105 = arith.constant 0 : index
    %207 = vector.load %arg6[%c3_103, %c0_104, %c0_105] : memref<4x200x128xbf16, #tpu.memory_space<vmem>>, vector<1x200x128xbf16>
    %208 = vector.shape_cast %207 : vector<1x200x128xbf16> to vector<200x128xbf16>
    %cst_106 = arith.constant dense<0.000000e+00> : vector<8x128xf32>
    %209 = tpu.matmul %206, %208, %cst_106 {dimension_numbers = #tpu.dot_dimension_numbers<[1], [0], [0], [1], [0, 0, 1, 1], [], []>} : vector<8x200xbf16>, vector<200x128xbf16>, vector<8x128xf32> -> vector<8x128xf32>
    %210 = arith.addf %203, %209 : vector<8x128xf32>
    %c0_107 = arith.constant 0 : index
    %c0_108 = arith.constant 0 : index
    %211 = vector.load %arg8[%c0_107, %c0_108] : memref<8x128xf32, #tpu.memory_space<vmem>>, vector<8x128xf32>
    tpu.vector_store %arg8[%c0_107, %c0_108], %210 {strides = array<i32>} : memref<8x128xf32, #tpu.memory_space<vmem>>, vector<8x128xf32>,
    return
  }
  func.func @transform_0(%arg0: i32) -> (i32, i32, i32) {
    %c0_i32 = arith.constant 0 : i32
    %c0_i32_0 = arith.constant 0 : i32
    %c0_i32_1 = arith.constant 0 : i32
    return %c0_i32, %arg0, %c0_i32_0 : i32, i32, i32
  }
  func.func @transform_1(%arg0: i32) -> (i32, i32, i32) {
    %c0_i32 = arith.constant 0 : i32
    %c0_i32_0 = arith.constant 0 : i32
    %c0_i32_1 = arith.constant 0 : i32
    %c0_i32_2 = arith.constant 0 : i32
    return %c0_i32, %c0_i32_0, %c0_i32_1 : i32, i32, i32
  }
  func.func @transform_2(%arg0: i32) -> (i32, i32) {
    %c0_i32 = arith.constant 0 : i32
    %c0_i32_0 = arith.constant 0 : i32
    %c0_i32_1 = arith.constant 0 : i32
    return %c0_i32, %c0_i32_0 : i32, i32
  }
  func.func @transform_3(%arg0: i32) -> (i32, i32, i32) {
    %c0_i32 = arith.constant 0 : i32
    %c0_i32_0 = arith.constant 0 : i32
    %c0_i32_1 = arith.constant 0 : i32
    %c0_i32_2 = arith.constant 0 : i32
    return %c0_i32, %c0_i32_0, %c0_i32_1 : i32, i32, i32
  }
  func.func @transform_4(%arg0: i32) -> (i32, i32) {
    %c0_i32 = arith.constant 0 : i32
    %c0_i32_0 = arith.constant 0 : i32
    %c0_i32_1 = arith.constant 0 : i32
    return %c0_i32, %c0_i32_0 : i32, i32
  }
  func.func @transform_5(%arg0: i32) -> (i32, i32, i32) {
    %c0_i32 = arith.constant 0 : i32
    %c0_i32_0 = arith.constant 0 : i32
    %c0_i32_1 = arith.constant 0 : i32
    %c0_i32_2 = arith.constant 0 : i32
    return %c0_i32, %c0_i32_0, %c0_i32_1 : i32, i32, i32
  }
  func.func @transform_6(%arg0: i32) -> (i32, i32) {
    %c0_i32 = arith.constant 0 : i32
    %c0_i32_0 = arith.constant 0 : i32
    %c0_i32_1 = arith.constant 0 : i32
    return %c0_i32, %c0_i32_0 : i32, i32
  }
  func.func @transform_7(%arg0: i32) -> (i32, i32) {
    %c0_i32 = arith.constant 0 : i32
    %c0_i32_0 = arith.constant 0 : i32
    return %arg0, %c0_i32 : i32, i32
  }
}

</mosaic_0001>

<llo_original>
// kernel: _lambda_.1
$region0: #{_lambda_.1}
  #allocation0 [shape = 'u32[]', space=smem, size = 0x4, offset = 0x4, fixed_abs, tag = 'smem constant byte address 0x4 - core index']
  #allocation1 [shape = 'u32[72,128]{1,0:T(1,128)}', space=vmem, size = 0x9000, scoped, tag = 'internal scratch']
  %s0 = inlined_call_operand.vmem [shape: f32[28,8,28], index: 0, kind: input, shape index: {}]
  %s1 = inlined_call_operand.vmem [shape: bf16[10,28,240], index: 1, kind: input, shape index: {}]
  %s2 = inlined_call_operand.vmem [shape: f32[1,240], index: 2, kind: input, shape index: {}]
  %s3 = inlined_call_operand.vmem [shape: bf16[10,240,200], index: 3, kind: input, shape index: {}]
  %s4 = inlined_call_operand.vmem [shape: f32[1,200], index: 4, kind: input, shape index: {}]
  %s5 = inlined_call_operand.vmem [shape: bf16[4,200,128], index: 5, kind: input, shape index: {}]
  %s6 = inlined_call_operand.vmem [shape: f32[1,128], index: 6, kind: input, shape index: {}]
  %s7 = inlined_call_operand.vmem [shape: f32[8,128], index: 7, kind: output, shape index: {}]
  %s8 = sld [smem:[#allocation0]]
  $region38: #{_lambda_.1} parent=0
    _
  %s10 = ssub.s32 1, %s8
  %s11 = scalar_select 0, %s10, %s8
  // Predicated region
  $region2: #{_lambda_.1} parent=0 // pred_check
    _
  $region3: #{_lambda_.1} parent=0 // pred_check_branch
    %13 = sbr.rel (0) target = $region5
  $region4: #{_lambda_.1} parent=0 // pred_region
    _
  $region5: #{_lambda_.1} parent=0 // pred_fallthru
    _
  // Predicated region
  $region6: #{_lambda_.1} parent=0 // pred_check
    _
  $region7: #{_lambda_.1} parent=0 // pred_check_branch
    %15 = sbr.rel (0) target = $region9
  $region8: #{_lambda_.1} parent=0 // pred_region
    _
  $region9: #{_lambda_.1} parent=0 // pred_fallthru
    _
  // Predicated region
  $region10: #{_lambda_.1} parent=0 // pred_check
    _
  $region11: #{_lambda_.1} parent=0 // pred_check_branch
    %17 = sbr.rel (0) target = $region13
  $region12: #{_lambda_.1} parent=0 // pred_region
    _
  $region13: #{_lambda_.1} parent=0 // pred_fallthru
    _
  // Predicated region
  $region14: #{_lambda_.1} parent=0 // pred_check
    _
  $region15: #{_lambda_.1} parent=0 // pred_check_branch
    %19 = sbr.rel (0) target = $region17
  $region16: #{_lambda_.1} parent=0 // pred_region
    _
  $region17: #{_lambda_.1} parent=0 // pred_fallthru
    _
  // Predicated region
  $region18: #{_lambda_.1} parent=0 // pred_check
    _
  $region19: #{_lambda_.1} parent=0 // pred_check_branch
    %21 = sbr.rel (0) target = $region21
  $region20: #{_lambda_.1} parent=0 // pred_region
    _
  $region21: #{_lambda_.1} parent=0 // pred_fallthru
    _
  // Predicated region
  $region22: #{_lambda_.1} parent=0 // pred_check
    _
  $region23: #{_lambda_.1} parent=0 // pred_check_branch
    %23 = sbr.rel (0) target = $region25
  $region24: #{_lambda_.1} parent=0 // pred_region
    _
  $region25: #{_lambda_.1} parent=0 // pred_fallthru
    _
  // Predicated region
  $region26: #{_lambda_.1} parent=0 // pred_check
    _
  $region27: #{_lambda_.1} parent=0 // pred_check_branch
    %25 = sbr.rel (0) target = $region29
  $region28: #{_lambda_.1} parent=0 // pred_region
    _
  $region29: #{_lambda_.1} parent=0 // pred_fallthru
    _
  %v27 = vld [vmem:[%s0] sm:$0xff]
  %v28 = vld [vmem:[%s0 + $0x8] sm:$0xff]
  %v29 = vld [vmem:[%s0 + $0x10] sm:$0xff]
  %v30 = vld [vmem:[%s0 + $0x18] sm:$0xff]
  %v31 = vld [vmem:[%s0 + $0x20] sm:$0xff]
  %v32 = vld [vmem:[%s0 + $0x28] sm:$0xff]
  %v33 = vld [vmem:[%s0 + $0x30] sm:$0xff]
  %v34 = vld [vmem:[%s0 + $0x38] sm:$0xff]
  %v35 = vld [vmem:[%s0 + $0x40] sm:$0xff]
  %v36 = vld [vmem:[%s0 + $0x48] sm:$0xff]
  %v37 = vld [vmem:[%s0 + $0x50] sm:$0xff]
  %v38 = vld [vmem:[%s0 + $0x58] sm:$0xff]
  %v39 = vld [vmem:[%s0 + $0x60] sm:$0xff]
  %v40 = vld [vmem:[%s0 + $0x68] sm:$0xff]
  %v41 = vld [vmem:[%s0 + $0x70] sm:$0xff]
  %v42 = vld [vmem:[%s0 + $0x78] sm:$0xff]
  %v43 = vld [vmem:[%s0 + $0x80] sm:$0xff]
  %v44 = vld [vmem:[%s0 + $0x88] sm:$0xff]
  %v45 = vld [vmem:[%s0 + $0x90] sm:$0xff]
  %v46 = vld [vmem:[%s0 + $0x98] sm:$0xff]
  %v47 = vld [vmem:[%s0 + $0xa0] sm:$0xff]
  %v48 = vld [vmem:[%s0 + $0xa8] sm:$0xff]
  %v49 = vld [vmem:[%s0 + $0xb0] sm:$0xff]
  %v50 = vld [vmem:[%s0 + $0xb8] sm:$0xff]
  %v51 = vld [vmem:[%s0 + $0xc0] sm:$0xff]
  %v52 = vld [vmem:[%s0 + $0xc8] sm:$0xff]
  %v53 = vld [vmem:[%s0 + $0xd0] sm:$0xff]
  %v54 = vld [vmem:[%s0 + $0xd8] sm:$0xff]
  %v55 = vld [vmem:[%s2] sm:$0x3]
  %v57 = vperm.slane %v55, 0
  %v58 = vperm.slane %v55, 1
  %v61 = vadd.f32 %v57, 0.0
  %v62 = vadd.f32 %v58, 0.0
  %v63 = vpack.c.bf16 %v28, %v27
  %v64 = vpack.c.bf16 %v30, %v29
  %v65 = vpack.c.bf16 %v32, %v31
  %v66 = vpack.c.bf16 %v34, %v33
  %v67 = vpack.c.bf16 %v36, %v35
  %v68 = vpack.c.bf16 %v38, %v37
  %v69 = vpack.c.bf16 %v40, %v39
  %v70 = vpack.c.bf16 %v42, %v41
  %v71 = vpack.c.bf16 %v44, %v43
  %v72 = vpack.c.bf16 %v46, %v45
  %v73 = vpack.c.bf16 %v48, %v47
  %v74 = vpack.c.bf16 %v50, %v49
  %v75 = vld [vmem:[%s1] sm:$0xff]
  %v76 = vld [vmem:[%s1 + $0x8] sm:$0xff]
  %v77 = vld [vmem:[%s1 + $0x10] sm:$0xff]
  %v78 = vld [vmem:[%s1 + $0x18] sm:$0x33]
  %v83 = vunpack.c.l.b16 %v75
  %v84 = vunpack.c.h.b16 %v75
  %v85 = vunpack.c.l.b16 %v76
  %v86 = vunpack.c.h.b16 %v76
  %v87 = vunpack.c.l.b16 %v77
  %v88 = vunpack.c.h.b16 %v77
  %v89 = vunpack.c.l.b16 %v78
  %v90 = vunpack.c.h.b16 %v78
  %v91 = vpack.c.b16 %v85, %v83
  %v92 = vpack.c.b16 %v86, %v84
  %v93 = vpack.c.b16 %v89, %v87
  %v94 = vpack.c.b16 %v90, %v88
  %vm97 = vcmask 228352
  %v99 = vsel %vm97, %v63, 0
  %v102 = vsel %vm97, %v64, 0
  %v105 = vsel %vm97, %v65, 0
  %v108 = vsel %vm97, %v66, 0
  %v111 = vsel %vm97, %v67, 0
  %v114 = vsel %vm97, %v68, 0
  %v117 = vsel %vm97, %v69, 0
  %v120 = vsel %vm97, %v70, 0
  %v123 = vsel %vm97, %v71, 0
  %v126 = vsel %vm97, %v72, 0
  %v129 = vsel %vm97, %v73, 0
  %v132 = vsel %vm97, %v74, 0
  %vm134 = vcmask 1045504
  %v136 = vsel %vm134, %v93, 0
  %v139 = vsel %vm134, %v94, 0
  %141 = vmatpush.bf16.msra.mxu0 0
  %142 = vmatpush.bf16.msra.mxu0 0
  %143 = vmatpush.bf16.msra.mxu0 0
  %144 = vmatpush.bf16.msra.mxu0 0
  %145 = vmatpush.bf16.msra.mxu0 0
  %146 = vmatpush.bf16.msra.mxu0 0
  %147 = vmatpush.bf16.msra.mxu0 %v136
  %148 = vmatpush.bf16.msra.mxu0 %v91
  %149 = vmatmul.bf16.gmra.mxu0 %v99
  %v150 = vpop.f32.mrf.mxu0
  %v151 = vadd.f32 0.0, %v150
  %v152 = vpop.f32.mrf.mxu0
  %v153 = vadd.f32 0.0, %v152
  %154 = vmatmul.bf16.gmra.mxu0 %v102
  %v155 = vpop.f32.mrf.mxu0
  %v156 = vadd.f32 0.0, %v155
  %v157 = vpop.f32.mrf.mxu0
  %v158 = vadd.f32 0.0, %v157
  %159 = vmatmul.bf16.gmra.mxu0 %v105
  %v160 = vpop.f32.mrf.mxu0
  %v161 = vadd.f32 0.0, %v160
  %v162 = vpop.f32.mrf.mxu0
  %v163 = vadd.f32 0.0, %v162
  %164 = vmatmul.bf16.gmra.mxu0 %v108
  %v165 = vpop.f32.mrf.mxu0
  %v166 = vadd.f32 0.0, %v165
  %v167 = vpop.f32.mrf.mxu0
  %v168 = vadd.f32 0.0, %v167
  %169 = vmatmul.bf16.gmra.mxu0 %v111
  %v170 = vpop.f32.mrf.mxu0
  %v171 = vadd.f32 0.0, %v170
  %v172 = vpop.f32.mrf.mxu0
  %v173 = vadd.f32 0.0, %v172
  %174 = vmatmul.bf16.gmra.mxu0 %v114
  %v175 = vpop.f32.mrf.mxu0
  %v176 = vadd.f32 0.0, %v175
  %v177 = vpop.f32.mrf.mxu0
  %v178 = vadd.f32 0.0, %v177
  %179 = vmatmul.bf16.gmra.mxu0 %v117
  %v180 = vpop.f32.mrf.mxu0
  %v181 = vadd.f32 0.0, %v180
  %v182 = vpop.f32.mrf.mxu0
  %v183 = vadd.f32 0.0, %v182
  %184 = vmatmul.bf16.gmra.mxu0 %v120
  %v185 = vpop.f32.mrf.mxu0
  %v186 = vadd.f32 0.0, %v185
  %v187 = vpop.f32.mrf.mxu0
  %v188 = vadd.f32 0.0, %v187
  %189 = vmatmul.bf16.gmra.mxu0 %v123
  %v190 = vpop.f32.mrf.mxu0
  %v191 = vadd.f32 0.0, %v190
  %v192 = vpop.f32.mrf.mxu0
  %v193 = vadd.f32 0.0, %v192
  %194 = vmatmul.bf16.gmra.mxu0 %v126
  %v195 = vpop.f32.mrf.mxu0
  %v196 = vadd.f32 0.0, %v195
  %v197 = vpop.f32.mrf.mxu0
  %v198 = vadd.f32 0.0, %v197
  %199 = vmatmul.bf16.gmra.mxu0 %v129
  %v200 = vpop.f32.mrf.mxu0
  %v201 = vadd.f32 0.0, %v200
  %v202 = vpop.f32.mrf.mxu0
  %v203 = vadd.f32 0.0, %v202
  %204 = vmatmul.bf16.gmra.mxu0 %v132
  %v205 = vpop.f32.mrf.mxu0
  %v206 = vadd.f32 0.0, %v205
  %v207 = vpop.f32.mrf.mxu0
  %v208 = vadd.f32 0.0, %v207
  %209 = vdwg.mxu0
  %210 = vmatpush.bf16.msra.mxu0 0
  %211 = vmatpush.bf16.msra.mxu0 0
  %212 = vmatpush.bf16.msra.mxu0 0
  %213 = vmatpush.bf16.msra.mxu0 0
  %214 = vmatpush.bf16.msra.mxu0 0
  %215 = vmatpush.bf16.msra.mxu0 0
  %216 = vmatpush.bf16.msra.mxu0 %v139
  %217 = vmatpush.bf16.msra.mxu0 %v92
  %218 = vmatmul.bf16.gmra.mxu0 %v99
  %v219 = vpop.f32.mrf.mxu0
  %v220 = vadd.f32 0.0, %v219
  %v221 = vpop.f32.mrf.mxu0
  %v222 = vadd.f32 0.0, %v221
  %223 = vmatmul.bf16.gmra.mxu0 %v102
  %v224 = vpop.f32.mrf.mxu0
  %v225 = vadd.f32 0.0, %v224
  %v226 = vpop.f32.mrf.mxu0
  %v227 = vadd.f32 0.0, %v226
  %228 = vmatmul.bf16.gmra.mxu0 %v105
  %v229 = vpop.f32.mrf.mxu0
  %v230 = vadd.f32 0.0, %v229
  %v231 = vpop.f32.mrf.mxu0
  %v232 = vadd.f32 0.0, %v231
  %233 = vmatmul.bf16.gmra.mxu0 %v108
  %v234 = vpop.f32.mrf.mxu0
  %v235 = vadd.f32 0.0, %v234
  %v236 = vpop.f32.mrf.mxu0
  %v237 = vadd.f32 0.0, %v236
  %238 = vmatmul.bf16.gmra.mxu0 %v111
  %v239 = vpop.f32.mrf.mxu0
  %v240 = vadd.f32 0.0, %v239
  %v241 = vpop.f32.mrf.mxu0
  %v242 = vadd.f32 0.0, %v241
  %243 = vmatmul.bf16.gmra.mxu0 %v114
  %v244 = vpop.f32.mrf.mxu0
  %v245 = vadd.f32 0.0, %v244
  %v246 = vpop.f32.mrf.mxu0
  %v247 = vadd.f32 0.0, %v246
  %248 = vmatmul.bf16.gmra.mxu0 %v117
  %v249 = vpop.f32.mrf.mxu0
  %v250 = vadd.f32 0.0, %v249
  %v251 = vpop.f32.mrf.mxu0
  %v252 = vadd.f32 0.0, %v251
  %253 = vmatmul.bf16.gmra.mxu0 %v120
  %v254 = vpop.f32.mrf.mxu0
  %v255 = vadd.f32 0.0, %v254
  %v256 = vpop.f32.mrf.mxu0
  %v257 = vadd.f32 0.0, %v256
  %258 = vmatmul.bf16.gmra.mxu0 %v123
  %v259 = vpop.f32.mrf.mxu0
  %v260 = vadd.f32 0.0, %v259
  %v261 = vpop.f32.mrf.mxu0
  %v262 = vadd.f32 0.0, %v261
  %263 = vmatmul.bf16.gmra.mxu0 %v126
  %v264 = vpop.f32.mrf.mxu0
  %v265 = vadd.f32 0.0, %v264
  %v266 = vpop.f32.mrf.mxu0
  %v267 = vadd.f32 0.0, %v266
  %268 = vmatmul.bf16.gmra.mxu0 %v129
  %v269 = vpop.f32.mrf.mxu0
  %v270 = vadd.f32 0.0, %v269
  %v271 = vpop.f32.mrf.mxu0
  %v272 = vadd.f32 0.0, %v271
  %273 = vmatmul.bf16.gmra.mxu0 %v132
  %v274 = vpop.f32.mrf.mxu0
  %v275 = vadd.f32 0.0, %v274
  %v276 = vpop.f32.mrf.mxu0
  %v277 = vadd.f32 0.0, %v276
  %278 = vdwg.mxu0
  %v279 = vadd.f32 %v61, %v151
  %v280 = vadd.f32 %v62, %v220
  %v281 = vadd.f32 %v61, %v153
  %v282 = vadd.f32 %v62, %v222
  %v283 = vadd.f32 %v61, %v156
  %v284 = vadd.f32 %v62, %v225
  %v285 = vadd.f32 %v61, %v158
  %v286 = vadd.f32 %v62, %v227
  %v287 = vadd.f32 %v61, %v161
  %v288 = vadd.f32 %v62, %v230
  %v289 = vadd.f32 %v61, %v163
  %v290 = vadd.f32 %v62, %v232
  %v291 = vadd.f32 %v61, %v166
  %v292 = vadd.f32 %v62, %v235
  %v293 = vadd.f32 %v61, %v168
  %v294 = vadd.f32 %v62, %v237
  %v295 = vadd.f32 %v61, %v171
  %v296 = vadd.f32 %v62, %v240
  %v297 = vadd.f32 %v61, %v173
  %v298 = vadd.f32 %v62, %v242
  %v299 = vadd.f32 %v61, %v176
  %v300 = vadd.f32 %v62, %v245
  %v301 = vadd.f32 %v61, %v178
  %v302 = vadd.f32 %v62, %v247
  %v303 = vadd.f32 %v61, %v181
  %v304 = vadd.f32 %v62, %v250
  %v305 = vadd.f32 %v61, %v183
  %v306 = vadd.f32 %v62, %v252
  %v307 = vadd.f32 %v61, %v186
  %v308 = vadd.f32 %v62, %v255
  %v309 = vadd.f32 %v61, %v188
  %v310 = vadd.f32 %v62, %v257
  %v311 = vadd.f32 %v61, %v191
  %v312 = vadd.f32 %v62, %v260
  %v313 = vadd.f32 %v61, %v193
  %v314 = vadd.f32 %v62, %v262
  %v315 = vadd.f32 %v61, %v196
  %v316 = vadd.f32 %v62, %v265
  %v317 = vadd.f32 %v61, %v198
  %v318 = vadd.f32 %v62, %v267
  %v319 = vadd.f32 %v61, %v201
  %v320 = vadd.f32 %v62, %v270
  %v321 = vadd.f32 %v61, %v203
  %v322 = vadd.f32 %v62, %v272
  %v323 = vadd.f32 %v61, %v206
  %v324 = vadd.f32 %v62, %v275
  %v325 = vadd.f32 %v61, %v208
  %v326 = vadd.f32 %v62, %v277
  %v327 = vpack.c.bf16 %v29, %v28
  %v328 = vpack.c.bf16 %v31, %v30
  %v329 = vpack.c.bf16 %v33, %v32
  %v330 = vpack.c.bf16 %v35, %v34
  %v331 = vpack.c.bf16 %v37, %v36
  %v332 = vpack.c.bf16 %v39, %v38
  %v333 = vpack.c.bf16 %v41, %v40
  %v334 = vpack.c.bf16 %v43, %v42
  %v335 = vpack.c.bf16 %v45, %v44
  %v336 = vpack.c.bf16 %v47, %v46
  %v337 = vpack.c.bf16 %v49, %v48
  %v338 = vpack.c.bf16 %v51, %v50
  %s339 = scalar_lea.vmem %s1, 32
  %v340 = vld [vmem:[%s339] sm:$0xff]
  %v341 = vld [vmem:[%s339 + $0x8] sm:$0xff]
  %v342 = vld [vmem:[%s339 + $0x10] sm:$0xff]
  %v343 = vld [vmem:[%s339 + $0x18] sm:$0x33]
  %v348 = vunpack.c.l.b16 %v340
  %v349 = vunpack.c.h.b16 %v340
  %v350 = vunpack.c.l.b16 %v341
  %v351 = vunpack.c.h.b16 %v341
  %v352 = vunpack.c.l.b16 %v342
  %v353 = vunpack.c.h.b16 %v342
  %v354 = vunpack.c.l.b16 %v343
  %v355 = vunpack.c.h.b16 %v343
  %v356 = vpack.c.b16 %v350, %v348
  %v357 = vpack.c.b16 %v351, %v349
  %v358 = vpack.c.b16 %v354, %v352
  %v359 = vpack.c.b16 %v355, %v353
  %v363 = vsel %vm97, %v327, 0
  %v366 = vsel %vm97, %v328, 0
  %v369 = vsel %vm97, %v329, 0
  %v372 = vsel %vm97, %v330, 0
  %v375 = vsel %vm97, %v331, 0
  %v378 = vsel %vm97, %v332, 0
  %v381 = vsel %vm97, %v333, 0
  %v384 = vsel %vm97, %v334, 0
  %v387 = vsel %vm97, %v335, 0
  %v390 = vsel %vm97, %v336, 0
  %v393 = vsel %vm97, %v337, 0
  %v396 = vsel %vm97, %v338, 0
  %v399 = vsel %vm134, %v358, 0
  %v402 = vsel %vm134, %v359, 0
  %404 = vmatpush.bf16.msra.mxu0 0
  %405 = vmatpush.bf16.msra.mxu0 0
  %406 = vmatpush.bf16.msra.mxu0 0
  %407 = vmatpush.bf16.msra.mxu0 0
  %408 = vmatpush.bf16.msra.mxu0 0
  %409 = vmatpush.bf16.msra.mxu0 0
  %410 = vmatpush.bf16.msra.mxu0 %v399
  %411 = vmatpush.bf16.msra.mxu0 %v356
  %412 = vmatmul.bf16.gmra.mxu0 %v363
  %v413 = vpop.f32.mrf.mxu0
  %v414 = vadd.f32 0.0, %v413
  %v415 = vpop.f32.mrf.mxu0
  %v416 = vadd.f32 0.0, %v415
  %417 = vmatmul.bf16.gmra.mxu0 %v366
  %v418 = vpop.f32.mrf.mxu0
  %v419 = vadd.f32 0.0, %v418
  %v420 = vpop.f32.mrf.mxu0
  %v421 = vadd.f32 0.0, %v420
  %422 = vmatmul.bf16.gmra.mxu0 %v369
  %v423 = vpop.f32.mrf.mxu0
  %v424 = vadd.f32 0.0, %v423
  %v425 = vpop.f32.mrf.mxu0
  %v426 = vadd.f32 0.0, %v425
  %427 = vmatmul.bf16.gmra.mxu0 %v372
  %v428 = vpop.f32.mrf.mxu0
  %v429 = vadd.f32 0.0, %v428
  %v430 = vpop.f32.mrf.mxu0
  %v431 = vadd.f32 0.0, %v430
  %432 = vmatmul.bf16.gmra.mxu0 %v375
  %v433 = vpop.f32.mrf.mxu0
  %v434 = vadd.f32 0.0, %v433
  %v435 = vpop.f32.mrf.mxu0
  %v436 = vadd.f32 0.0, %v435
  %437 = vmatmul.bf16.gmra.mxu0 %v378
  %v438 = vpop.f32.mrf.mxu0
  %v439 = vadd.f32 0.0, %v438
  %v440 = vpop.f32.mrf.mxu0
  %v441 = vadd.f32 0.0, %v440
  %442 = vmatmul.bf16.gmra.mxu0 %v381
  %v443 = vpop.f32.mrf.mxu0
  %v444 = vadd.f32 0.0, %v443
  %v445 = vpop.f32.mrf.mxu0
  %v446 = vadd.f32 0.0, %v445
  %447 = vmatmul.bf16.gmra.mxu0 %v384
  %v448 = vpop.f32.mrf.mxu0
  %v449 = vadd.f32 0.0, %v448
  %v450 = vpop.f32.mrf.mxu0
  %v451 = vadd.f32 0.0, %v450
  %452 = vmatmul.bf16.gmra.mxu0 %v387
  %v453 = vpop.f32.mrf.mxu0
  %v454 = vadd.f32 0.0, %v453
  %v455 = vpop.f32.mrf.mxu0
  %v456 = vadd.f32 0.0, %v455
  %457 = vmatmul.bf16.gmra.mxu0 %v390
  %v458 = vpop.f32.mrf.mxu0
  %v459 = vadd.f32 0.0, %v458
  %v460 = vpop.f32.mrf.mxu0
  %v461 = vadd.f32 0.0, %v460
  %462 = vmatmul.bf16.gmra.mxu0 %v393
  %v463 = vpop.f32.mrf.mxu0
  %v464 = vadd.f32 0.0, %v463
  %v465 = vpop.f32.mrf.mxu0
  %v466 = vadd.f32 0.0, %v465
  %467 = vmatmul.bf16.gmra.mxu0 %v396
  %v468 = vpop.f32.mrf.mxu0
  %v469 = vadd.f32 0.0, %v468
  %v470 = vpop.f32.mrf.mxu0
  %v471 = vadd.f32 0.0, %v470
  %472 = vdwg.mxu0
  %473 = vmatpush.bf16.msra.mxu0 0
  %474 = vmatpush.bf16.msra.mxu0 0
  %475 = vmatpush.bf16.msra.mxu0 0
  %476 = vmatpush.bf16.msra.mxu0 0
  %477 = vmatpush.bf16.msra.mxu0 0
  %478 = vmatpush.bf16.msra.mxu0 0
  %479 = vmatpush.bf16.msra.mxu0 %v402
  %480 = vmatpush.bf16.msra.mxu0 %v357
  %481 = vmatmul.bf16.gmra.mxu0 %v363
  %v482 = vpop.f32.mrf.mxu0
  %v483 = vadd.f32 0.0, %v482
  %v484 = vpop.f32.mrf.mxu0
  %v485 = vadd.f32 0.0, %v484
  %486 = vmatmul.bf16.gmra.mxu0 %v366
  %v487 = vpop.f32.mrf.mxu0
  %v488 = vadd.f32 0.0, %v487
  %v489 = vpop.f32.mrf.mxu0
  %v490 = vadd.f32 0.0, %v489
  %491 = vmatmul.bf16.gmra.mxu0 %v369
  %v492 = vpop.f32.mrf.mxu0
  %v493 = vadd.f32 0.0, %v492
  %v494 = vpop.f32.mrf.mxu0
  %v495 = vadd.f32 0.0, %v494
  %496 = vmatmul.bf16.gmra.mxu0 %v372
  %v497 = vpop.f32.mrf.mxu0
  %v498 = vadd.f32 0.0, %v497
  %v499 = vpop.f32.mrf.mxu0
  %v500 = vadd.f32 0.0, %v499
  %501 = vmatmul.bf16.gmra.mxu0 %v375
  %v502 = vpop.f32.mrf.mxu0
  %v503 = vadd.f32 0.0, %v502
  %v504 = vpop.f32.mrf.mxu0
  %v505 = vadd.f32 0.0, %v504
  %506 = vmatmul.bf16.gmra.mxu0 %v378
  %v507 = vpop.f32.mrf.mxu0
  %v508 = vadd.f32 0.0, %v507
  %v509 = vpop.f32.mrf.mxu0
  %v510 = vadd.f32 0.0, %v509
  %511 = vmatmul.bf16.gmra.mxu0 %v381
  %v512 = vpop.f32.mrf.mxu0
  %v513 = vadd.f32 0.0, %v512
  %v514 = vpop.f32.mrf.mxu0
  %v515 = vadd.f32 0.0, %v514
  %516 = vmatmul.bf16.gmra.mxu0 %v384
  %v517 = vpop.f32.mrf.mxu0
  %v518 = vadd.f32 0.0, %v517
  %v519 = vpop.f32.mrf.mxu0
  %v520 = vadd.f32 0.0, %v519
  %521 = vmatmul.bf16.gmra.mxu0 %v387
  %v522 = vpop.f32.mrf.mxu0
  %v523 = vadd.f32 0.0, %v522
  %v524 = vpop.f32.mrf.mxu0
  %v525 = vadd.f32 0.0, %v524
  %526 = vmatmul.bf16.gmra.mxu0 %v390
  %v527 = vpop.f32.mrf.mxu0
  %v528 = vadd.f32 0.0, %v527
  %v529 = vpop.f32.mrf.mxu0
  %v530 = vadd.f32 0.0, %v529
  %531 = vmatmul.bf16.gmra.mxu0 %v393
  %v532 = vpop.f32.mrf.mxu0
  %v533 = vadd.f32 0.0, %v532
  %v534 = vpop.f32.mrf.mxu0
  %v535 = vadd.f32 0.0, %v534
  %536 = vmatmul.bf16.gmra.mxu0 %v396
  %v537 = vpop.f32.mrf.mxu0
  %v538 = vadd.f32 0.0, %v537
  %v539 = vpop.f32.mrf.mxu0
  %v540 = vadd.f32 0.0, %v539
  %541 = vdwg.mxu0
  %v542 = vadd.f32 %v279, %v414
  %v543 = vadd.f32 %v280, %v483
  %v544 = vadd.f32 %v281, %v416
  %v545 = vadd.f32 %v282, %v485
  %v546 = vadd.f32 %v283, %v419
  %v547 = vadd.f32 %v284, %v488
  %v548 = vadd.f32 %v285, %v421
  %v549 = vadd.f32 %v286, %v490
  %v550 = vadd.f32 %v287, %v424
  %v551 = vadd.f32 %v288, %v493
  %v552 = vadd.f32 %v289, %v426
  %v553 = vadd.f32 %v290, %v495
  %v554 = vadd.f32 %v291, %v429
  %v555 = vadd.f32 %v292, %v498
  %v556 = vadd.f32 %v293, %v431
  %v557 = vadd.f32 %v294, %v500
  %v558 = vadd.f32 %v295, %v434
  %v559 = vadd.f32 %v296, %v503
  %v560 = vadd.f32 %v297, %v436
  %v561 = vadd.f32 %v298, %v505
  %v562 = vadd.f32 %v299, %v439
  %v563 = vadd.f32 %v300, %v508
  %v564 = vadd.f32 %v301, %v441
  %v565 = vadd.f32 %v302, %v510
  %v566 = vadd.f32 %v303, %v444
  %v567 = vadd.f32 %v304, %v513
  %v568 = vadd.f32 %v305, %v446
  %v569 = vadd.f32 %v306, %v515
  %v570 = vadd.f32 %v307, %v449
  %v571 = vadd.f32 %v308, %v518
  %v572 = vadd.f32 %v309, %v451
  %v573 = vadd.f32 %v310, %v520
  %v574 = vadd.f32 %v311, %v454
  %v575 = vadd.f32 %v312, %v523
  %v576 = vadd.f32 %v313, %v456
  %v577 = vadd.f32 %v314, %v525
  %v578 = vadd.f32 %v315, %v459
  %v579 = vadd.f32 %v316, %v528
  %v580 = vadd.f32 %v317, %v461
  %v581 = vadd.f32 %v318, %v530
  %v582 = vadd.f32 %v319, %v464
  %v583 = vadd.f32 %v320, %v533
  %v584 = vadd.f32 %v321, %v466
  %v585 = vadd.f32 %v322, %v535
  %v586 = vadd.f32 %v323, %v469
  %v587 = vadd.f32 %v324, %v538
  %v588 = vadd.f32 %v325, %v471
  %v589 = vadd.f32 %v326, %v540
  %v590 = vpack.c.bf16 %v52, %v51
  %s591 = scalar_lea.vmem %s1, 64
  %v592 = vld [vmem:[%s591] sm:$0xff]
  %v593 = vld [vmem:[%s591 + $0x8] sm:$0xff]
  %v594 = vld [vmem:[%s591 + $0x10] sm:$0xff]
  %v595 = vld [vmem:[%s591 + $0x18] sm:$0x33]
  %v600 = vunpack.c.l.b16 %v592
  %v601 = vunpack.c.h.b16 %v592
  %v602 = vunpack.c.l.b16 %v593
  %v603 = vunpack.c.h.b16 %v593
  %v604 = vunpack.c.l.b16 %v594
  %v605 = vunpack.c.h.b16 %v594
  %v606 = vunpack.c.l.b16 %v595
  %v607 = vunpack.c.h.b16 %v595
  %v608 = vpack.c.b16 %v602, %v600
  %v609 = vpack.c.b16 %v603, %v601
  %v610 = vpack.c.b16 %v606, %v604
  %v611 = vpack.c.b16 %v607, %v605
  %v615 = vsel %vm97, %v590, 0
  %v618 = vsel %vm134, %v610, 0
  %v621 = vsel %vm134, %v611, 0
  %623 = vmatpush.bf16.msra.mxu0 0
  %624 = vmatpush.bf16.msra.mxu0 0
  %625 = vmatpush.bf16.msra.mxu0 0
  %626 = vmatpush.bf16.msra.mxu0 0
  %627 = vmatpush.bf16.msra.mxu0 0
  %628 = vmatpush.bf16.msra.mxu0 0
  %629 = vmatpush.bf16.msra.mxu0 %v618
  %630 = vmatpush.bf16.msra.mxu0 %v608
  %631 = vmatmul.bf16.gmra.mxu0 %v102
  %v632 = vpop.f32.mrf.mxu0
  %v633 = vadd.f32 0.0, %v632
  %v634 = vpop.f32.mrf.mxu0
  %v635 = vadd.f32 0.0, %v634
  %636 = vmatmul.bf16.gmra.mxu0 %v105
  %v637 = vpop.f32.mrf.mxu0
  %v638 = vadd.f32 0.0, %v637
  %v639 = vpop.f32.mrf.mxu0
  %v640 = vadd.f32 0.0, %v639
  %641 = vmatmul.bf16.gmra.mxu0 %v108
  %v642 = vpop.f32.mrf.mxu0
  %v643 = vadd.f32 0.0, %v642
  %v644 = vpop.f32.mrf.mxu0
  %v645 = vadd.f32 0.0, %v644
  %646 = vmatmul.bf16.gmra.mxu0 %v111
  %v647 = vpop.f32.mrf.mxu0
  %v648 = vadd.f32 0.0, %v647
  %v649 = vpop.f32.mrf.mxu0
  %v650 = vadd.f32 0.0, %v649
  %651 = vmatmul.bf16.gmra.mxu0 %v114
  %v652 = vpop.f32.mrf.mxu0
  %v653 = vadd.f32 0.0, %v652
  %v654 = vpop.f32.mrf.mxu0
  %v655 = vadd.f32 0.0, %v654
  %656 = vmatmul.bf16.gmra.mxu0 %v117
  %v657 = vpop.f32.mrf.mxu0
  %v658 = vadd.f32 0.0, %v657
  %v659 = vpop.f32.mrf.mxu0
  %v660 = vadd.f32 0.0, %v659
  %661 = vmatmul.bf16.gmra.mxu0 %v120
  %v662 = vpop.f32.mrf.mxu0
  %v663 = vadd.f32 0.0, %v662
  %v664 = vpop.f32.mrf.mxu0
  %v665 = vadd.f32 0.0, %v664
  %666 = vmatmul.bf16.gmra.mxu0 %v123
  %v667 = vpop.f32.mrf.mxu0
  %v668 = vadd.f32 0.0, %v667
  %v669 = vpop.f32.mrf.mxu0
  %v670 = vadd.f32 0.0, %v669
  %671 = vmatmul.bf16.gmra.mxu0 %v126
  %v672 = vpop.f32.mrf.mxu0
  %v673 = vadd.f32 0.0, %v672
  %v674 = vpop.f32.mrf.mxu0
  %v675 = vadd.f32 0.0, %v674
  %676 = vmatmul.bf16.gmra.mxu0 %v129
  %v677 = vpop.f32.mrf.mxu0
  %v678 = vadd.f32 0.0, %v677
  %v679 = vpop.f32.mrf.mxu0
  %v680 = vadd.f32 0.0, %v679
  %681 = vmatmul.bf16.gmra.mxu0 %v132
  %v682 = vpop.f32.mrf.mxu0
  %v683 = vadd.f32 0.0, %v682
  %v684 = vpop.f32.mrf.mxu0
  %v685 = vadd.f32 0.0, %v684
  %686 = vmatmul.bf16.gmra.mxu0 %v615
  %v687 = vpop.f32.mrf.mxu0
  %v688 = vadd.f32 0.0, %v687
  %v689 = vpop.f32.mrf.mxu0
  %v690 = vadd.f32 0.0, %v689
  %691 = vdwg.mxu0
  %692 = vmatpush.bf16.msra.mxu0 0
  %693 = vmatpush.bf16.msra.mxu0 0
  %694 = vmatpush.bf16.msra.mxu0 0
  %695 = vmatpush.bf16.msra.mxu0 0
  %696 = vmatpush.bf16.msra.mxu0 0
  %697 = vmatpush.bf16.msra.mxu0 0
  %698 = vmatpush.bf16.msra.mxu0 %v621
  %699 = vmatpush.bf16.msra.mxu0 %v609
  %700 = vmatmul.bf16.gmra.mxu0 %v102
  %v701 = vpop.f32.mrf.mxu0
  %v702 = vadd.f32 0.0, %v701
  %v703 = vpop.f32.mrf.mxu0
  %v704 = vadd.f32 0.0, %v703
  %705 = vmatmul.bf16.gmra.mxu0 %v105
  %v706 = vpop.f32.mrf.mxu0
  %v707 = vadd.f32 0.0, %v706
  %v708 = vpop.f32.mrf.mxu0
  %v709 = vadd.f32 0.0, %v708
  %710 = vmatmul.bf16.gmra.mxu0 %v108
  %v711 = vpop.f32.mrf.mxu0
  %v712 = vadd.f32 0.0, %v711
  %v713 = vpop.f32.mrf.mxu0
  %v714 = vadd.f32 0.0, %v713
  %715 = vmatmul.bf16.gmra.mxu0 %v111
  %v716 = vpop.f32.mrf.mxu0
  %v717 = vadd.f32 0.0, %v716
  %v718 = vpop.f32.mrf.mxu0
  %v719 = vadd.f32 0.0, %v718
  %720 = vmatmul.bf16.gmra.mxu0 %v114
  %v721 = vpop.f32.mrf.mxu0
  %v722 = vadd.f32 0.0, %v721
  %v723 = vpop.f32.mrf.mxu0
  %v724 = vadd.f32 0.0, %v723
  %725 = vmatmul.bf16.gmra.mxu0 %v117
  %v726 = vpop.f32.mrf.mxu0
  %v727 = vadd.f32 0.0, %v726
  %v728 = vpop.f32.mrf.mxu0
  %v729 = vadd.f32 0.0, %v728
  %730 = vmatmul.bf16.gmra.mxu0 %v120
  %v731 = vpop.f32.mrf.mxu0
  %v732 = vadd.f32 0.0, %v731
  %v733 = vpop.f32.mrf.mxu0
  %v734 = vadd.f32 0.0, %v733
  %735 = vmatmul.bf16.gmra.mxu0 %v123
  %v736 = vpop.f32.mrf.mxu0
  %v737 = vadd.f32 0.0, %v736
  %v738 = vpop.f32.mrf.mxu0
  %v739 = vadd.f32 0.0, %v738
  %740 = vmatmul.bf16.gmra.mxu0 %v126
  %v741 = vpop.f32.mrf.mxu0
  %v742 = vadd.f32 0.0, %v741
  %v743 = vpop.f32.mrf.mxu0
  %v744 = vadd.f32 0.0, %v743
  %745 = vmatmul.bf16.gmra.mxu0 %v129
  %v746 = vpop.f32.mrf.mxu0
  %v747 = vadd.f32 0.0, %v746
  %v748 = vpop.f32.mrf.mxu0
  %v749 = vadd.f32 0.0, %v748
  %750 = vmatmul.bf16.gmra.mxu0 %v132
  %v751 = vpop.f32.mrf.mxu0
  %v752 = vadd.f32 0.0, %v751
  %v753 = vpop.f32.mrf.mxu0
  %v754 = vadd.f32 0.0, %v753
  %755 = vmatmul.bf16.gmra.mxu0 %v615
  %v756 = vpop.f32.mrf.mxu0
  %v757 = vadd.f32 0.0, %v756
  %v758 = vpop.f32.mrf.mxu0
  %v759 = vadd.f32 0.0, %v758
  %760 = vdwg.mxu0
  %v761 = vadd.f32 %v542, %v633
  %v762 = vadd.f32 %v543, %v702
  %v763 = vadd.f32 %v544, %v635
  %v764 = vadd.f32 %v545, %v704
  %v765 = vadd.f32 %v546, %v638
  %v766 = vadd.f32 %v547, %v707
  %v767 = vadd.f32 %v548, %v640
  %v768 = vadd.f32 %v549, %v709
  %v769 = vadd.f32 %v550, %v643
  %v770 = vadd.f32 %v551, %v712
  %v771 = vadd.f32 %v552, %v645
  %v772 = vadd.f32 %v553, %v714
  %v773 = vadd.f32 %v554, %v648
  %v774 = vadd.f32 %v555, %v717
  %v775 = vadd.f32 %v556, %v650
  %v776 = vadd.f32 %v557, %v719
  %v777 = vadd.f32 %v558, %v653
  %v778 = vadd.f32 %v559, %v722
  %v779 = vadd.f32 %v560, %v655
  %v780 = vadd.f32 %v561, %v724
  %v781 = vadd.f32 %v562, %v658
  %v782 = vadd.f32 %v563, %v727
  %v783 = vadd.f32 %v564, %v660
  %v784 = vadd.f32 %v565, %v729
  %v785 = vadd.f32 %v566, %v663
  %v786 = vadd.f32 %v567, %v732
  %v787 = vadd.f32 %v568, %v665
  %v788 = vadd.f32 %v569, %v734
  %v789 = vadd.f32 %v570, %v668
  %v790 = vadd.f32 %v571, %v737
  %v791 = vadd.f32 %v572, %v670
  %v792 = vadd.f32 %v573, %v739
  %v793 = vadd.f32 %v574, %v673
  %v794 = vadd.f32 %v575, %v742
  %v795 = vadd.f32 %v576, %v675
  %v796 = vadd.f32 %v577, %v744
  %v797 = vadd.f32 %v578, %v678
  %v798 = vadd.f32 %v579, %v747
  %v799 = vadd.f32 %v580, %v680
  %v800 = vadd.f32 %v581, %v749
  %v801 = vadd.f32 %v582, %v683
  %v802 = vadd.f32 %v583, %v752
  %v803 = vadd.f32 %v584, %v685
  %v804 = vadd.f32 %v585, %v754
  %v805 = vadd.f32 %v586, %v688
  %v806 = vadd.f32 %v587, %v757
  %v807 = vadd.f32 %v588, %v690
  %v808 = vadd.f32 %v589, %v759
  %v809 = vpack.c.bf16 %v53, %v52
  %s810 = scalar_lea.vmem %s1, 96
  %v811 = vld [vmem:[%s810] sm:$0xff]
  %v812 = vld [vmem:[%s810 + $0x8] sm:$0xff]
  %v813 = vld [vmem:[%s810 + $0x10] sm:$0xff]
  %v814 = vld [vmem:[%s810 + $0x18] sm:$0x33]
  %v819 = vunpack.c.l.b16 %v811
  %v820 = vunpack.c.h.b16 %v811
  %v821 = vunpack.c.l.b16 %v812
  %v822 = vunpack.c.h.b16 %v812
  %v823 = vunpack.c.l.b16 %v813
  %v824 = vunpack.c.h.b16 %v813
  %v825 = vunpack.c.l.b16 %v814
  %v826 = vunpack.c.h.b16 %v814
  %v827 = vpack.c.b16 %v821, %v819
  %v828 = vpack.c.b16 %v822, %v820
  %v829 = vpack.c.b16 %v825, %v823
  %v830 = vpack.c.b16 %v826, %v824
  %v834 = vsel %vm97, %v809, 0
  %v837 = vsel %vm134, %v829, 0
  %v840 = vsel %vm134, %v830, 0
  %842 = vmatpush.bf16.msra.mxu0 0
  %843 = vmatpush.bf16.msra.mxu0 0
  %844 = vmatpush.bf16.msra.mxu0 0
  %845 = vmatpush.bf16.msra.mxu0 0
  %846 = vmatpush.bf16.msra.mxu0 0
  %847 = vmatpush.bf16.msra.mxu0 0
  %848 = vmatpush.bf16.msra.mxu0 %v837
  %849 = vmatpush.bf16.msra.mxu0 %v827
  %850 = vmatmul.bf16.gmra.mxu0 %v366
  %v851 = vpop.f32.mrf.mxu0
  %v852 = vadd.f32 0.0, %v851
  %v853 = vpop.f32.mrf.mxu0
  %v854 = vadd.f32 0.0, %v853
  %855 = vmatmul.bf16.gmra.mxu0 %v369
  %v856 = vpop.f32.mrf.mxu0
  %v857 = vadd.f32 0.0, %v856
  %v858 = vpop.f32.mrf.mxu0
  %v859 = vadd.f32 0.0, %v858
  %860 = vmatmul.bf16.gmra.mxu0 %v372
  %v861 = vpop.f32.mrf.mxu0
  %v862 = vadd.f32 0.0, %v861
  %v863 = vpop.f32.mrf.mxu0
  %v864 = vadd.f32 0.0, %v863
  %865 = vmatmul.bf16.gmra.mxu0 %v375
  %v866 = vpop.f32.mrf.mxu0
  %v867 = vadd.f32 0.0, %v866
  %v868 = vpop.f32.mrf.mxu0
  %v869 = vadd.f32 0.0, %v868
  %870 = vmatmul.bf16.gmra.mxu0 %v378
  %v871 = vpop.f32.mrf.mxu0
  %v872 = vadd.f32 0.0, %v871
  %v873 = vpop.f32.mrf.mxu0
  %v874 = vadd.f32 0.0, %v873
  %875 = vmatmul.bf16.gmra.mxu0 %v381
  %v876 = vpop.f32.mrf.mxu0
  %v877 = vadd.f32 0.0, %v876
  %v878 = vpop.f32.mrf.mxu0
  %v879 = vadd.f32 0.0, %v878
  %880 = vmatmul.bf16.gmra.mxu0 %v384
  %v881 = vpop.f32.mrf.mxu0
  %v882 = vadd.f32 0.0, %v881
  %v883 = vpop.f32.mrf.mxu0
  %v884 = vadd.f32 0.0, %v883
  %885 = vmatmul.bf16.gmra.mxu0 %v387
  %v886 = vpop.f32.mrf.mxu0
  %v887 = vadd.f32 0.0, %v886
  %v888 = vpop.f32.mrf.mxu0
  %v889 = vadd.f32 0.0, %v888
  %890 = vmatmul.bf16.gmra.mxu0 %v390
  %v891 = vpop.f32.mrf.mxu0
  %v892 = vadd.f32 0.0, %v891
  %v893 = vpop.f32.mrf.mxu0
  %v894 = vadd.f32 0.0, %v893
  %895 = vmatmul.bf16.gmra.mxu0 %v393
  %v896 = vpop.f32.mrf.mxu0
  %v897 = vadd.f32 0.0, %v896
  %v898 = vpop.f32.mrf.mxu0
  %v899 = vadd.f32 0.0, %v898
  %900 = vmatmul.bf16.gmra.mxu0 %v396
  %v901 = vpop.f32.mrf.mxu0
  %v902 = vadd.f32 0.0, %v901
  %v903 = vpop.f32.mrf.mxu0
  %v904 = vadd.f32 0.0, %v903
  %905 = vmatmul.bf16.gmra.mxu0 %v834
  %v906 = vpop.f32.mrf.mxu0
  %v907 = vadd.f32 0.0, %v906
  %v908 = vpop.f32.mrf.mxu0
  %v909 = vadd.f32 0.0, %v908
  %910 = vdwg.mxu0
  %911 = vmatpush.bf16.msra.mxu0 0
  %912 = vmatpush.bf16.msra.mxu0 0
  %913 = vmatpush.bf16.msra.mxu0 0
  %914 = vmatpush.bf16.msra.mxu0 0
  %915 = vmatpush.bf16.msra.mxu0 0
  %916 = vmatpush.bf16.msra.mxu0 0
  %917 = vmatpush.bf16.msra.mxu0 %v840
  %918 = vmatpush.bf16.msra.mxu0 %v828
  %919 = vmatmul.bf16.gmra.mxu0 %v366
  %v920 = vpop.f32.mrf.mxu0
  %v921 = vadd.f32 0.0, %v920
  %v922 = vpop.f32.mrf.mxu0
  %v923 = vadd.f32 0.0, %v922
  %924 = vmatmul.bf16.gmra.mxu0 %v369
  %v925 = vpop.f32.mrf.mxu0
  %v926 = vadd.f32 0.0, %v925
  %v927 = vpop.f32.mrf.mxu0
  %v928 = vadd.f32 0.0, %v927
  %929 = vmatmul.bf16.gmra.mxu0 %v372
  %v930 = vpop.f32.mrf.mxu0
  %v931 = vadd.f32 0.0, %v930
  %v932 = vpop.f32.mrf.mxu0
  %v933 = vadd.f32 0.0, %v932
  %934 = vmatmul.bf16.gmra.mxu0 %v375
  %v935 = vpop.f32.mrf.mxu0
  %v936 = vadd.f32 0.0, %v935
  %v937 = vpop.f32.mrf.mxu0
  %v938 = vadd.f32 0.0, %v937
  %939 = vmatmul.bf16.gmra.mxu0 %v378
  %v940 = vpop.f32.mrf.mxu0
  %v941 = vadd.f32 0.0, %v940
  %v942 = vpop.f32.mrf.mxu0
  %v943 = vadd.f32 0.0, %v942
  %944 = vmatmul.bf16.gmra.mxu0 %v381
  %v945 = vpop.f32.mrf.mxu0
  %v946 = vadd.f32 0.0, %v945
  %v947 = vpop.f32.mrf.mxu0
  %v948 = vadd.f32 0.0, %v947
  %949 = vmatmul.bf16.gmra.mxu0 %v384
  %v950 = vpop.f32.mrf.mxu0
  %v951 = vadd.f32 0.0, %v950
  %v952 = vpop.f32.mrf.mxu0
  %v953 = vadd.f32 0.0, %v952
  %954 = vmatmul.bf16.gmra.mxu0 %v387
  %v955 = vpop.f32.mrf.mxu0
  %v956 = vadd.f32 0.0, %v955
  %v957 = vpop.f32.mrf.mxu0
  %v958 = vadd.f32 0.0, %v957
  %959 = vmatmul.bf16.gmra.mxu0 %v390
  %v960 = vpop.f32.mrf.mxu0
  %v961 = vadd.f32 0.0, %v960
  %v962 = vpop.f32.mrf.mxu0
  %v963 = vadd.f32 0.0, %v962
  %964 = vmatmul.bf16.gmra.mxu0 %v393
  %v965 = vpop.f32.mrf.mxu0
  %v966 = vadd.f32 0.0, %v965
  %v967 = vpop.f32.mrf.mxu0
  %v968 = vadd.f32 0.0, %v967
  %969 = vmatmul.bf16.gmra.mxu0 %v396
  %v970 = vpop.f32.mrf.mxu0
  %v971 = vadd.f32 0.0, %v970
  %v972 = vpop.f32.mrf.mxu0
  %v973 = vadd.f32 0.0, %v972
  %974 = vmatmul.bf16.gmra.mxu0 %v834
  %v975 = vpop.f32.mrf.mxu0
  %v976 = vadd.f32 0.0, %v975
  %v977 = vpop.f32.mrf.mxu0
  %v978 = vadd.f32 0.0, %v977
  %979 = vdwg.mxu0
  %v980 = vadd.f32 %v761, %v852
  %v981 = vadd.f32 %v762, %v921
  %v982 = vadd.f32 %v763, %v854
  %v983 = vadd.f32 %v764, %v923
  %v984 = vadd.f32 %v765, %v857
  %v985 = vadd.f32 %v766, %v926
  %v986 = vadd.f32 %v767, %v859
  %v987 = vadd.f32 %v768, %v928
  %v988 = vadd.f32 %v769, %v862
  %v989 = vadd.f32 %v770, %v931
  %v990 = vadd.f32 %v771, %v864
  %v991 = vadd.f32 %v772, %v933
  %v992 = vadd.f32 %v773, %v867
  %v993 = vadd.f32 %v774, %v936
  %v994 = vadd.f32 %v775, %v869
  %v995 = vadd.f32 %v776, %v938
  %v996 = vadd.f32 %v777, %v872
  %v997 = vadd.f32 %v778, %v941
  %v998 = vadd.f32 %v779, %v874
  %v999 = vadd.f32 %v780, %v943
  %v1000 = vadd.f32 %v781, %v877
  %v1001 = vadd.f32 %v782, %v946
  %v1002 = vadd.f32 %v783, %v879
  %v1003 = vadd.f32 %v784, %v948
  %v1004 = vadd.f32 %v785, %v882
  %v1005 = vadd.f32 %v786, %v951
  %v1006 = vadd.f32 %v787, %v884
  %v1007 = vadd.f32 %v788, %v953
  %v1008 = vadd.f32 %v789, %v887
  %v1009 = vadd.f32 %v790, %v956
  %v1010 = vadd.f32 %v791, %v889
  %v1011 = vadd.f32 %v792, %v958
  %v1012 = vadd.f32 %v793, %v892
  %v1013 = vadd.f32 %v794, %v961
  %v1014 = vadd.f32 %v795, %v894
  %v1015 = vadd.f32 %v796, %v963
  %v1016 = vadd.f32 %v797, %v897
  %v1017 = vadd.f32 %v798, %v966
  %v1018 = vadd.f32 %v799, %v899
  %v1019 = vadd.f32 %v800, %v968
  %v1020 = vadd.f32 %v801, %v902
  %v1021 = vadd.f32 %v802, %v971
  %v1022 = vadd.f32 %v803, %v904
  %v1023 = vadd.f32 %v804, %v973
  %v1024 = vadd.f32 %v805, %v907
  %v1025 = vadd.f32 %v806, %v976
  %v1026 = vadd.f32 %v807, %v909
  %v1027 = vadd.f32 %v808, %v978
  %v1028 = vpack.c.bf16 %v54, %v53
  %s1029 = scalar_lea.vmem %s1, 128
  %v1030 = vld [vmem:[%s1029] sm:$0xff]
  %v1031 = vld [vmem:[%s1029 + $0x8] sm:$0xff]
  %v1032 = vld [vmem:[%s1029 + $0x10] sm:$0xff]
  %v1033 = vld [vmem:[%s1029 + $0x18] sm:$0x33]
  %v1038 = vunpack.c.l.b16 %v1030
  %v1039 = vunpack.c.h.b16 %v1030
  %v1040 = vunpack.c.l.b16 %v1031
  %v1041 = vunpack.c.h.b16 %v1031
  %v1042 = vunpack.c.l.b16 %v1032
  %v1043 = vunpack.c.h.b16 %v1032
  %v1044 = vunpack.c.l.b16 %v1033
  %v1045 = vunpack.c.h.b16 %v1033
  %v1046 = vpack.c.b16 %v1040, %v1038
  %v1047 = vpack.c.b16 %v1041, %v1039
  %v1048 = vpack.c.b16 %v1044, %v1042
  %v1049 = vpack.c.b16 %v1045, %v1043
  %v1053 = vsel %vm97, %v1028, 0
  %v1056 = vsel %vm134, %v1048, 0
  %v1059 = vsel %vm134, %v1049, 0
  %1061 = vmatpush.bf16.msra.mxu0 0
  %1062 = vmatpush.bf16.msra.mxu0 0
  %1063 = vmatpush.bf16.msra.mxu0 0
  %1064 = vmatpush.bf16.msra.mxu0 0
  %1065 = vmatpush.bf16.msra.mxu0 0
  %1066 = vmatpush.bf16.msra.mxu0 0
  %1067 = vmatpush.bf16.msra.mxu0 %v1056
  %1068 = vmatpush.bf16.msra.mxu0 %v1046
  %1069 = vmatmul.bf16.gmra.mxu0 %v105
  %v1070 = vpop.f32.mrf.mxu0
  %v1071 = vadd.f32 0.0, %v1070
  %v1072 = vpop.f32.mrf.mxu0
  %v1073 = vadd.f32 0.0, %v1072
  %1074 = vmatmul.bf16.gmra.mxu0 %v108
  %v1075 = vpop.f32.mrf.mxu0
  %v1076 = vadd.f32 0.0, %v1075
  %v1077 = vpop.f32.mrf.mxu0
  %v1078 = vadd.f32 0.0, %v1077
  %1079 = vmatmul.bf16.gmra.mxu0 %v111
  %v1080 = vpop.f32.mrf.mxu0
  %v1081 = vadd.f32 0.0, %v1080
  %v1082 = vpop.f32.mrf.mxu0
  %v1083 = vadd.f32 0.0, %v1082
  %1084 = vmatmul.bf16.gmra.mxu0 %v114
  %v1085 = vpop.f32.mrf.mxu0
  %v1086 = vadd.f32 0.0, %v1085
  %v1087 = vpop.f32.mrf.mxu0
  %v1088 = vadd.f32 0.0, %v1087
  %1089 = vmatmul.bf16.gmra.mxu0 %v117
  %v1090 = vpop.f32.mrf.mxu0
  %v1091 = vadd.f32 0.0, %v1090
  %v1092 = vpop.f32.mrf.mxu0
  %v1093 = vadd.f32 0.0, %v1092
  %1094 = vmatmul.bf16.gmra.mxu0 %v120
  %v1095 = vpop.f32.mrf.mxu0
  %v1096 = vadd.f32 0.0, %v1095
  %v1097 = vpop.f32.mrf.mxu0
  %v1098 = vadd.f32 0.0, %v1097
  %1099 = vmatmul.bf16.gmra.mxu0 %v123
  %v1100 = vpop.f32.mrf.mxu0
  %v1101 = vadd.f32 0.0, %v1100
  %v1102 = vpop.f32.mrf.mxu0
  %v1103 = vadd.f32 0.0, %v1102
  %1104 = vmatmul.bf16.gmra.mxu0 %v126
  %v1105 = vpop.f32.mrf.mxu0
  %v1106 = vadd.f32 0.0, %v1105
  %v1107 = vpop.f32.mrf.mxu0
  %v1108 = vadd.f32 0.0, %v1107
  %1109 = vmatmul.bf16.gmra.mxu0 %v129
  %v1110 = vpop.f32.mrf.mxu0
  %v1111 = vadd.f32 0.0, %v1110
  %v1112 = vpop.f32.mrf.mxu0
  %v1113 = vadd.f32 0.0, %v1112
  %1114 = vmatmul.bf16.gmra.mxu0 %v132
  %v1115 = vpop.f32.mrf.mxu0
  %v1116 = vadd.f32 0.0, %v1115
  %v1117 = vpop.f32.mrf.mxu0
  %v1118 = vadd.f32 0.0, %v1117
  %1119 = vmatmul.bf16.gmra.mxu0 %v615
  %v1120 = vpop.f32.mrf.mxu0
  %v1121 = vadd.f32 0.0, %v1120
  %v1122 = vpop.f32.mrf.mxu0
  %v1123 = vadd.f32 0.0, %v1122
  %1124 = vmatmul.bf16.gmra.mxu0 %v1053
  %v1125 = vpop.f32.mrf.mxu0
  %v1126 = vadd.f32 0.0, %v1125
  %v1127 = vpop.f32.mrf.mxu0
  %v1128 = vadd.f32 0.0, %v1127
  %1129 = vdwg.mxu0
  %1130 = vmatpush.bf16.msra.mxu0 0
  %1131 = vmatpush.bf16.msra.mxu0 0
  %1132 = vmatpush.bf16.msra.mxu0 0
  %1133 = vmatpush.bf16.msra.mxu0 0
  %1134 = vmatpush.bf16.msra.mxu0 0
  %1135 = vmatpush.bf16.msra.mxu0 0
  %1136 = vmatpush.bf16.msra.mxu0 %v1059
  %1137 = vmatpush.bf16.msra.mxu0 %v1047
  %1138 = vmatmul.bf16.gmra.mxu0 %v105
  %v1139 = vpop.f32.mrf.mxu0
  %v1140 = vadd.f32 0.0, %v1139
  %v1141 = vpop.f32.mrf.mxu0
  %v1142 = vadd.f32 0.0, %v1141
  %1143 = vmatmul.bf16.gmra.mxu0 %v108
  %v1144 = vpop.f32.mrf.mxu0
  %v1145 = vadd.f32 0.0, %v1144
  %v1146 = vpop.f32.mrf.mxu0
  %v1147 = vadd.f32 0.0, %v1146
  %1148 = vmatmul.bf16.gmra.mxu0 %v111
  %v1149 = vpop.f32.mrf.mxu0
  %v1150 = vadd.f32 0.0, %v1149
  %v1151 = vpop.f32.mrf.mxu0
  %v1152 = vadd.f32 0.0, %v1151
  %1153 = vmatmul.bf16.gmra.mxu0 %v114
  %v1154 = vpop.f32.mrf.mxu0
  %v1155 = vadd.f32 0.0, %v1154
  %v1156 = vpop.f32.mrf.mxu0
  %v1157 = vadd.f32 0.0, %v1156
  %1158 = vmatmul.bf16.gmra.mxu0 %v117
  %v1159 = vpop.f32.mrf.mxu0
  %v1160 = vadd.f32 0.0, %v1159
  %v1161 = vpop.f32.mrf.mxu0
  %v1162 = vadd.f32 0.0, %v1161
  %1163 = vmatmul.bf16.gmra.mxu0 %v120
  %v1164 = vpop.f32.mrf.mxu0
  %v1165 = vadd.f32 0.0, %v1164
  %v1166 = vpop.f32.mrf.mxu0
  %v1167 = vadd.f32 0.0, %v1166
  %1168 = vmatmul.bf16.gmra.mxu0 %v123
  %v1169 = vpop.f32.mrf.mxu0
  %v1170 = vadd.f32 0.0, %v1169
  %v1171 = vpop.f32.mrf.mxu0
  %v1172 = vadd.f32 0.0, %v1171
  %1173 = vmatmul.bf16.gmra.mxu0 %v126
  %v1174 = vpop.f32.mrf.mxu0
  %v1175 = vadd.f32 0.0, %v1174
  %v1176 = vpop.f32.mrf.mxu0
  %v1177 = vadd.f32 0.0, %v1176
  %1178 = vmatmul.bf16.gmra.mxu0 %v129
  %v1179 = vpop.f32.mrf.mxu0
  %v1180 = vadd.f32 0.0, %v1179
  %v1181 = vpop.f32.mrf.mxu0
  %v1182 = vadd.f32 0.0, %v1181
  %1183 = vmatmul.bf16.gmra.mxu0 %v132
  %v1184 = vpop.f32.mrf.mxu0
  %v1185 = vadd.f32 0.0, %v1184
  %v1186 = vpop.f32.mrf.mxu0
  %v1187 = vadd.f32 0.0, %v1186
  %1188 = vmatmul.bf16.gmra.mxu0 %v615
  %v1189 = vpop.f32.mrf.mxu0
  %v1190 = vadd.f32 0.0, %v1189
  %v1191 = vpop.f32.mrf.mxu0
  %v1192 = vadd.f32 0.0, %v1191
  %1193 = vmatmul.bf16.gmra.mxu0 %v1053
  %v1194 = vpop.f32.mrf.mxu0
  %v1195 = vadd.f32 0.0, %v1194
  %v1196 = vpop.f32.mrf.mxu0
  %v1197 = vadd.f32 0.0, %v1196
  %1198 = vdwg.mxu0
  %v1199 = vadd.f32 %v980, %v1071
  %v1200 = vadd.f32 %v981, %v1140
  %v1201 = vadd.f32 %v982, %v1073
  %v1202 = vadd.f32 %v983, %v1142
  %v1203 = vadd.f32 %v984, %v1076
  %v1204 = vadd.f32 %v985, %v1145
  %v1205 = vadd.f32 %v986, %v1078
  %v1206 = vadd.f32 %v987, %v1147
  %v1207 = vadd.f32 %v988, %v1081
  %v1208 = vadd.f32 %v989, %v1150
  %v1209 = vadd.f32 %v990, %v1083
  %v1210 = vadd.f32 %v991, %v1152
  %v1211 = vadd.f32 %v992, %v1086
  %v1212 = vadd.f32 %v993, %v1155
  %v1213 = vadd.f32 %v994, %v1088
  %v1214 = vadd.f32 %v995, %v1157
  %v1215 = vadd.f32 %v996, %v1091
  %v1216 = vadd.f32 %v997, %v1160
  %v1217 = vadd.f32 %v998, %v1093
  %v1218 = vadd.f32 %v999, %v1162
  %v1219 = vadd.f32 %v1000, %v1096
  %v1220 = vadd.f32 %v1001, %v1165
  %v1221 = vadd.f32 %v1002, %v1098
  %v1222 = vadd.f32 %v1003, %v1167
  %v1223 = vadd.f32 %v1004, %v1101
  %v1224 = vadd.f32 %v1005, %v1170
  %v1225 = vadd.f32 %v1006, %v1103
  %v1226 = vadd.f32 %v1007, %v1172
  %v1227 = vadd.f32 %v1008, %v1106
  %v1228 = vadd.f32 %v1009, %v1175
  %v1229 = vadd.f32 %v1010, %v1108
  %v1230 = vadd.f32 %v1011, %v1177
  %v1231 = vadd.f32 %v1012, %v1111
  %v1232 = vadd.f32 %v1013, %v1180
  %v1233 = vadd.f32 %v1014, %v1113
  %v1234 = vadd.f32 %v1015, %v1182
  %v1235 = vadd.f32 %v1016, %v1116
  %v1236 = vadd.f32 %v1017, %v1185
  %v1237 = vadd.f32 %v1018, %v1118
  %v1238 = vadd.f32 %v1019, %v1187
  %v1239 = vadd.f32 %v1020, %v1121
  %v1240 = vadd.f32 %v1021, %v1190
  %v1241 = vadd.f32 %v1022, %v1123
  %v1242 = vadd.f32 %v1023, %v1192
  %v1243 = vadd.f32 %v1024, %v1126
  %v1244 = vadd.f32 %v1025, %v1195
  %v1245 = vadd.f32 %v1026, %v1128
  %v1246 = vadd.f32 %v1027, %v1197
  %v1247 = vmax.f32 %v1199, 0.0
  %v1248 = vmax.f32 %v1200, 0.0
  %v1249 = vmax.f32 %v1201, 0.0
  %v1250 = vmax.f32 %v1202, 0.0
  %v1251 = vmax.f32 %v1203, 0.0
  %v1252 = vmax.f32 %v1204, 0.0
  %v1253 = vmax.f32 %v1205, 0.0
  %v1254 = vmax.f32 %v1206, 0.0
  %v1255 = vmax.f32 %v1207, 0.0
  %v1256 = vmax.f32 %v1208, 0.0
  %v1257 = vmax.f32 %v1209, 0.0
  %v1258 = vmax.f32 %v1210, 0.0
  %v1259 = vmax.f32 %v1211, 0.0
  %v1260 = vmax.f32 %v1212, 0.0
  %v1261 = vmax.f32 %v1213, 0.0
  %v1262 = vmax.f32 %v1214, 0.0
  %v1263 = vmax.f32 %v1215, 0.0
  %v1264 = vmax.f32 %v1216, 0.0
  %v1265 = vmax.f32 %v1217, 0.0
  %v1266 = vmax.f32 %v1218, 0.0
  %v1267 = vmax.f32 %v1219, 0.0
  %v1268 = vmax.f32 %v1220, 0.0
  %v1269 = vmax.f32 %v1221, 0.0
  %v1270 = vmax.f32 %v1222, 0.0
  %v1271 = vmax.f32 %v1223, 0.0
  %v1272 = vmax.f32 %v1224, 0.0
  %v1273 = vmax.f32 %v1225, 0.0
  %v1274 = vmax.f32 %v1226, 0.0
  %v1275 = vmax.f32 %v1227, 0.0
  %v1276 = vmax.f32 %v1228, 0.0
  %v1277 = vmax.f32 %v1229, 0.0
  %v1278 = vmax.f32 %v1230, 0.0
  %v1279 = vmax.f32 %v1231, 0.0
  %v1280 = vmax.f32 %v1232, 0.0
  %v1281 = vmax.f32 %v1233, 0.0
  %v1282 = vmax.f32 %v1234, 0.0
  %v1283 = vmax.f32 %v1235, 0.0
  %v1284 = vmax.f32 %v1236, 0.0
  %v1285 = vmax.f32 %v1237, 0.0
  %v1286 = vmax.f32 %v1238, 0.0
  %v1287 = vmax.f32 %v1239, 0.0
  %v1288 = vmax.f32 %v1240, 0.0
  %v1289 = vmax.f32 %v1241, 0.0
  %v1290 = vmax.f32 %v1242, 0.0
  %v1291 = vmax.f32 %v1243, 0.0
  %v1292 = vmax.f32 %v1244, 0.0
  %v1293 = vmax.f32 %v1245, 0.0
  %v1294 = vmax.f32 %v1246, 0.0
  %s1295 = scalar_lea.vmem %s1, 160
  %v1296 = vld [vmem:[%s1295] sm:$0xff]
  %v1297 = vld [vmem:[%s1295 + $0x8] sm:$0xff]
  %v1298 = vld [vmem:[%s1295 + $0x10] sm:$0xff]
  %v1299 = vld [vmem:[%s1295 + $0x18] sm:$0x33]
  %v1304 = vunpack.c.l.b16 %v1296
  %v1305 = vunpack.c.h.b16 %v1296
  %v1306 = vunpack.c.l.b16 %v1297
  %v1307 = vunpack.c.h.b16 %v1297
  %v1308 = vunpack.c.l.b16 %v1298
  %v1309 = vunpack.c.h.b16 %v1298
  %v1310 = vunpack.c.l.b16 %v1299
  %v1311 = vunpack.c.h.b16 %v1299
  %v1312 = vpack.c.b16 %v1306, %v1304
  %v1313 = vpack.c.b16 %v1307, %v1305
  %v1314 = vpack.c.b16 %v1310, %v1308
  %v1315 = vpack.c.b16 %v1311, %v1309
  %v1319 = vsel %vm134, %v1314, 0
  %v1322 = vsel %vm134, %v1315, 0
  %1324 = vmatpush.bf16.msra.mxu0 0
  %1325 = vmatpush.bf16.msra.mxu0 0
  %1326 = vmatpush.bf16.msra.mxu0 0
  %1327 = vmatpush.bf16.msra.mxu0 0
  %1328 = vmatpush.bf16.msra.mxu0 0
  %1329 = vmatpush.bf16.msra.mxu0 0
  %1330 = vmatpush.bf16.msra.mxu0 %v1319
  %1331 = vmatpush.bf16.msra.mxu0 %v1312
  %1332 = vmatmul.bf16.gmra.mxu0 %v99
  %v1333 = vpop.f32.mrf.mxu0
  %v1334 = vadd.f32 0.0, %v1333
  %v1335 = vpop.f32.mrf.mxu0
  %v1336 = vadd.f32 0.0, %v1335
  %1337 = vmatmul.bf16.gmra.mxu0 %v102
  %v1338 = vpop.f32.mrf.mxu0
  %v1339 = vadd.f32 0.0, %v1338
  %v1340 = vpop.f32.mrf.mxu0
  %v1341 = vadd.f32 0.0, %v1340
  %1342 = vmatmul.bf16.gmra.mxu0 %v105
  %v1343 = vpop.f32.mrf.mxu0
  %v1344 = vadd.f32 0.0, %v1343
  %v1345 = vpop.f32.mrf.mxu0
  %v1346 = vadd.f32 0.0, %v1345
  %1347 = vmatmul.bf16.gmra.mxu0 %v108
  %v1348 = vpop.f32.mrf.mxu0
  %v1349 = vadd.f32 0.0, %v1348
  %v1350 = vpop.f32.mrf.mxu0
  %v1351 = vadd.f32 0.0, %v1350
  %1352 = vmatmul.bf16.gmra.mxu0 %v111
  %v1353 = vpop.f32.mrf.mxu0
  %v1354 = vadd.f32 0.0, %v1353
  %v1355 = vpop.f32.mrf.mxu0
  %v1356 = vadd.f32 0.0, %v1355
  %1357 = vmatmul.bf16.gmra.mxu0 %v114
  %v1358 = vpop.f32.mrf.mxu0
  %v1359 = vadd.f32 0.0, %v1358
  %v1360 = vpop.f32.mrf.mxu0
  %v1361 = vadd.f32 0.0, %v1360
  %1362 = vmatmul.bf16.gmra.mxu0 %v117
  %v1363 = vpop.f32.mrf.mxu0
  %v1364 = vadd.f32 0.0, %v1363
  %v1365 = vpop.f32.mrf.mxu0
  %v1366 = vadd.f32 0.0, %v1365
  %1367 = vmatmul.bf16.gmra.mxu0 %v120
  %v1368 = vpop.f32.mrf.mxu0
  %v1369 = vadd.f32 0.0, %v1368
  %v1370 = vpop.f32.mrf.mxu0
  %v1371 = vadd.f32 0.0, %v1370
  %1372 = vmatmul.bf16.gmra.mxu0 %v123
  %v1373 = vpop.f32.mrf.mxu0
  %v1374 = vadd.f32 0.0, %v1373
  %v1375 = vpop.f32.mrf.mxu0
  %v1376 = vadd.f32 0.0, %v1375
  %1377 = vmatmul.bf16.gmra.mxu0 %v126
  %v1378 = vpop.f32.mrf.mxu0
  %v1379 = vadd.f32 0.0, %v1378
  %v1380 = vpop.f32.mrf.mxu0
  %v1381 = vadd.f32 0.0, %v1380
  %1382 = vmatmul.bf16.gmra.mxu0 %v129
  %v1383 = vpop.f32.mrf.mxu0
  %v1384 = vadd.f32 0.0, %v1383
  %v1385 = vpop.f32.mrf.mxu0
  %v1386 = vadd.f32 0.0, %v1385
  %1387 = vmatmul.bf16.gmra.mxu0 %v132
  %v1388 = vpop.f32.mrf.mxu0
  %v1389 = vadd.f32 0.0, %v1388
  %v1390 = vpop.f32.mrf.mxu0
  %v1391 = vadd.f32 0.0, %v1390
  %1392 = vdwg.mxu0
  %1393 = vmatpush.bf16.msra.mxu0 0
  %1394 = vmatpush.bf16.msra.mxu0 0
  %1395 = vmatpush.bf16.msra.mxu0 0
  %1396 = vmatpush.bf16.msra.mxu0 0
  %1397 = vmatpush.bf16.msra.mxu0 0
  %1398 = vmatpush.bf16.msra.mxu0 0
  %1399 = vmatpush.bf16.msra.mxu0 %v1322
  %1400 = vmatpush.bf16.msra.mxu0 %v1313
  %1401 = vmatmul.bf16.gmra.mxu0 %v99
  %v1402 = vpop.f32.mrf.mxu0
  %v1403 = vadd.f32 0.0, %v1402
  %v1404 = vpop.f32.mrf.mxu0
  %v1405 = vadd.f32 0.0, %v1404
  %1406 = vmatmul.bf16.gmra.mxu0 %v102
  %v1407 = vpop.f32.mrf.mxu0
  %v1408 = vadd.f32 0.0, %v1407
  %v1409 = vpop.f32.mrf.mxu0
  %v1410 = vadd.f32 0.0, %v1409
  %1411 = vmatmul.bf16.gmra.mxu0 %v105
  %v1412 = vpop.f32.mrf.mxu0
  %v1413 = vadd.f32 0.0, %v1412
  %v1414 = vpop.f32.mrf.mxu0
  %v1415 = vadd.f32 0.0, %v1414
  %1416 = vmatmul.bf16.gmra.mxu0 %v108
  %v1417 = vpop.f32.mrf.mxu0
  %v1418 = vadd.f32 0.0, %v1417
  %v1419 = vpop.f32.mrf.mxu0
  %v1420 = vadd.f32 0.0, %v1419
  %1421 = vmatmul.bf16.gmra.mxu0 %v111
  %v1422 = vpop.f32.mrf.mxu0
  %v1423 = vadd.f32 0.0, %v1422
  %v1424 = vpop.f32.mrf.mxu0
  %v1425 = vadd.f32 0.0, %v1424
  %1426 = vmatmul.bf16.gmra.mxu0 %v114
  %v1427 = vpop.f32.mrf.mxu0
  %v1428 = vadd.f32 0.0, %v1427
  %v1429 = vpop.f32.mrf.mxu0
  %v1430 = vadd.f32 0.0, %v1429
  %1431 = vmatmul.bf16.gmra.mxu0 %v117
  %v1432 = vpop.f32.mrf.mxu0
  %v1433 = vadd.f32 0.0, %v1432
  %v1434 = vpop.f32.mrf.mxu0
  %v1435 = vadd.f32 0.0, %v1434
  %1436 = vmatmul.bf16.gmra.mxu0 %v120
  %v1437 = vpop.f32.mrf.mxu0
  %v1438 = vadd.f32 0.0, %v1437
  %v1439 = vpop.f32.mrf.mxu0
  %v1440 = vadd.f32 0.0, %v1439
  %1441 = vmatmul.bf16.gmra.mxu0 %v123
  %v1442 = vpop.f32.mrf.mxu0
  %v1443 = vadd.f32 0.0, %v1442
  %v1444 = vpop.f32.mrf.mxu0
  %v1445 = vadd.f32 0.0, %v1444
  %1446 = vmatmul.bf16.gmra.mxu0 %v126
  %v1447 = vpop.f32.mrf.mxu0
  %v1448 = vadd.f32 0.0, %v1447
  %v1449 = vpop.f32.mrf.mxu0
  %v1450 = vadd.f32 0.0, %v1449
  %1451 = vmatmul.bf16.gmra.mxu0 %v129
  %v1452 = vpop.f32.mrf.mxu0
  %v1453 = vadd.f32 0.0, %v1452
  %v1454 = vpop.f32.mrf.mxu0
  %v1455 = vadd.f32 0.0, %v1454
  %1456 = vmatmul.bf16.gmra.mxu0 %v132
  %v1457 = vpop.f32.mrf.mxu0
  %v1458 = vadd.f32 0.0, %v1457
  %v1459 = vpop.f32.mrf.mxu0
  %v1460 = vadd.f32 0.0, %v1459
  %1461 = vdwg.mxu0
  %v1462 = vadd.f32 %v61, %v1334
  %v1463 = vadd.f32 %v62, %v1403
  %v1464 = vadd.f32 %v61, %v1336
  %v1465 = vadd.f32 %v62, %v1405
  %v1466 = vadd.f32 %v61, %v1339
  %v1467 = vadd.f32 %v62, %v1408
  %v1468 = vadd.f32 %v61, %v1341
  %v1469 = vadd.f32 %v62, %v1410
  %v1470 = vadd.f32 %v61, %v1344
  %v1471 = vadd.f32 %v62, %v1413
  %v1472 = vadd.f32 %v61, %v1346
  %v1473 = vadd.f32 %v62, %v1415
  %v1474 = vadd.f32 %v61, %v1349
  %v1475 = vadd.f32 %v62, %v1418
  %v1476 = vadd.f32 %v61, %v1351
  %v1477 = vadd.f32 %v62, %v1420
  %v1478 = vadd.f32 %v61, %v1354
  %v1479 = vadd.f32 %v62, %v1423
  %v1480 = vadd.f32 %v61, %v1356
  %v1481 = vadd.f32 %v62, %v1425
  %v1482 = vadd.f32 %v61, %v1359
  %v1483 = vadd.f32 %v62, %v1428
  %v1484 = vadd.f32 %v61, %v1361
  %v1485 = vadd.f32 %v62, %v1430
  %v1486 = vadd.f32 %v61, %v1364
  %v1487 = vadd.f32 %v62, %v1433
  %v1488 = vadd.f32 %v61, %v1366
  %v1489 = vadd.f32 %v62, %v1435
  %v1490 = vadd.f32 %v61, %v1369
  %v1491 = vadd.f32 %v62, %v1438
  %v1492 = vadd.f32 %v61, %v1371
  %v1493 = vadd.f32 %v62, %v1440
  %v1494 = vadd.f32 %v61, %v1374
  %v1495 = vadd.f32 %v62, %v1443
  %v1496 = vadd.f32 %v61, %v1376
  %v1497 = vadd.f32 %v62, %v1445
  %v1498 = vadd.f32 %v61, %v1379
  %v1499 = vadd.f32 %v62, %v1448
  %v1500 = vadd.f32 %v61, %v1381
  %v1501 = vadd.f32 %v62, %v1450
  %v1502 = vadd.f32 %v61, %v1384
  %v1503 = vadd.f32 %v62, %v1453
  %v1504 = vadd.f32 %v61, %v1386
  %v1505 = vadd.f32 %v62, %v1455
  %v1506 = vadd.f32 %v61, %v1389
  %v1507 = vadd.f32 %v62, %v1458
  %v1508 = vadd.f32 %v61, %v1391
  %v1509 = vadd.f32 %v62, %v1460
  %s1510 = scalar_lea.vmem %s1, 192
  %v1511 = vld [vmem:[%s1510] sm:$0xff]
  %v1512 = vld [vmem:[%s1510 + $0x8] sm:$0xff]
  %v1513 = vld [vmem:[%s1510 + $0x10] sm:$0xff]
  %v1514 = vld [vmem:[%s1510 + $0x18] sm:$0x33]
  %v1519 = vunpack.c.l.b16 %v1511
  %v1520 = vunpack.c.h.b16 %v1511
  %v1521 = vunpack.c.l.b16 %v1512
  %v1522 = vunpack.c.h.b16 %v1512
  %v1523 = vunpack.c.l.b16 %v1513
  %v1524 = vunpack.c.h.b16 %v1513
  %v1525 = vunpack.c.l.b16 %v1514
  %v1526 = vunpack.c.h.b16 %v1514
  %v1527 = vpack.c.b16 %v1521, %v1519
  %v1528 = vpack.c.b16 %v1522, %v1520
  %v1529 = vpack.c.b16 %v1525, %v1523
  %v1530 = vpack.c.b16 %v1526, %v1524
  %v1534 = vsel %vm134, %v1529, 0
  %v1537 = vsel %vm134, %v1530, 0
  %1539 = vmatpush.bf16.msra.mxu0 0
  %1540 = vmatpush.bf16.msra.mxu0 0
  %1541 = vmatpush.bf16.msra.mxu0 0
  %1542 = vmatpush.bf16.msra.mxu0 0
  %1543 = vmatpush.bf16.msra.mxu0 0
  %1544 = vmatpush.bf16.msra.mxu0 0
  %1545 = vmatpush.bf16.msra.mxu0 %v1534
  %1546 = vmatpush.bf16.msra.mxu0 %v1527
  %1547 = vmatmul.bf16.gmra.mxu0 %v363
  %v1548 = vpop.f32.mrf.mxu0
  %v1549 = vadd.f32 0.0, %v1548
  %v1550 = vpop.f32.mrf.mxu0
  %v1551 = vadd.f32 0.0, %v1550
  %1552 = vmatmul.bf16.gmra.mxu0 %v366
  %v1553 = vpop.f32.mrf.mxu0
  %v1554 = vadd.f32 0.0, %v1553
  %v1555 = vpop.f32.mrf.mxu0
  %v1556 = vadd.f32 0.0, %v1555
  %1557 = vmatmul.bf16.gmra.mxu0 %v369
  %v1558 = vpop.f32.mrf.mxu0
  %v1559 = vadd.f32 0.0, %v1558
  %v1560 = vpop.f32.mrf.mxu0
  %v1561 = vadd.f32 0.0, %v1560
  %1562 = vmatmul.bf16.gmra.mxu0 %v372
  %v1563 = vpop.f32.mrf.mxu0
  %v1564 = vadd.f32 0.0, %v1563
  %v1565 = vpop.f32.mrf.mxu0
  %v1566 = vadd.f32 0.0, %v1565
  %1567 = vmatmul.bf16.gmra.mxu0 %v375
  %v1568 = vpop.f32.mrf.mxu0
  %v1569 = vadd.f32 0.0, %v1568
  %v1570 = vpop.f32.mrf.mxu0
  %v1571 = vadd.f32 0.0, %v1570
  %1572 = vmatmul.bf16.gmra.mxu0 %v378
  %v1573 = vpop.f32.mrf.mxu0
  %v1574 = vadd.f32 0.0, %v1573
  %v1575 = vpop.f32.mrf.mxu0
  %v1576 = vadd.f32 0.0, %v1575
  %1577 = vmatmul.bf16.gmra.mxu0 %v381
  %v1578 = vpop.f32.mrf.mxu0
  %v1579 = vadd.f32 0.0, %v1578
  %v1580 = vpop.f32.mrf.mxu0
  %v1581 = vadd.f32 0.0, %v1580
  %1582 = vmatmul.bf16.gmra.mxu0 %v384
  %v1583 = vpop.f32.mrf.mxu0
  %v1584 = vadd.f32 0.0, %v1583
  %v1585 = vpop.f32.mrf.mxu0
  %v1586 = vadd.f32 0.0, %v1585
  %1587 = vmatmul.bf16.gmra.mxu0 %v387
  %v1588 = vpop.f32.mrf.mxu0
  %v1589 = vadd.f32 0.0, %v1588
  %v1590 = vpop.f32.mrf.mxu0
  %v1591 = vadd.f32 0.0, %v1590
  %1592 = vmatmul.bf16.gmra.mxu0 %v390
  %v1593 = vpop.f32.mrf.mxu0
  %v1594 = vadd.f32 0.0, %v1593
  %v1595 = vpop.f32.mrf.mxu0
  %v1596 = vadd.f32 0.0, %v1595
  %1597 = vmatmul.bf16.gmra.mxu0 %v393
  %v1598 = vpop.f32.mrf.mxu0
  %v1599 = vadd.f32 0.0, %v1598
  %v1600 = vpop.f32.mrf.mxu0
  %v1601 = vadd.f32 0.0, %v1600
  %1602 = vmatmul.bf16.gmra.mxu0 %v396
  %v1603 = vpop.f32.mrf.mxu0
  %v1604 = vadd.f32 0.0, %v1603
  %v1605 = vpop.f32.mrf.mxu0
  %v1606 = vadd.f32 0.0, %v1605
  %1607 = vdwg.mxu0
  %1608 = vmatpush.bf16.msra.mxu0 0
  %1609 = vmatpush.bf16.msra.mxu0 0
  %1610 = vmatpush.bf16.msra.mxu0 0
  %1611 = vmatpush.bf16.msra.mxu0 0
  %1612 = vmatpush.bf16.msra.mxu0 0
  %1613 = vmatpush.bf16.msra.mxu0 0
  %1614 = vmatpush.bf16.msra.mxu0 %v1537
  %1615 = vmatpush.bf16.msra.mxu0 %v1528
  %1616 = vmatmul.bf16.gmra.mxu0 %v363
  %v1617 = vpop.f32.mrf.mxu0
  %v1618 = vadd.f32 0.0, %v1617
  %v1619 = vpop.f32.mrf.mxu0
  %v1620 = vadd.f32 0.0, %v1619
  %1621 = vmatmul.bf16.gmra.mxu0 %v366
  %v1622 = vpop.f32.mrf.mxu0
  %v1623 = vadd.f32 0.0, %v1622
  %v1624 = vpop.f32.mrf.mxu0
  %v1625 = vadd.f32 0.0, %v1624
  %1626 = vmatmul.bf16.gmra.mxu0 %v369
  %v1627 = vpop.f32.mrf.mxu0
  %v1628 = vadd.f32 0.0, %v1627
  %v1629 = vpop.f32.mrf.mxu0
  %v1630 = vadd.f32 0.0, %v1629
  %1631 = vmatmul.bf16.gmra.mxu0 %v372
  %v1632 = vpop.f32.mrf.mxu0
  %v1633 = vadd.f32 0.0, %v1632
  %v1634 = vpop.f32.mrf.mxu0
  %v1635 = vadd.f32 0.0, %v1634
  %1636 = vmatmul.bf16.gmra.mxu0 %v375
  %v1637 = vpop.f32.mrf.mxu0
  %v1638 = vadd.f32 0.0, %v1637
  %v1639 = vpop.f32.mrf.mxu0
  %v1640 = vadd.f32 0.0, %v1639
  %1641 = vmatmul.bf16.gmra.mxu0 %v378
  %v1642 = vpop.f32.mrf.mxu0
  %v1643 = vadd.f32 0.0, %v1642
  %v1644 = vpop.f32.mrf.mxu0
  %v1645 = vadd.f32 0.0, %v1644
  %1646 = vmatmul.bf16.gmra.mxu0 %v381
  %v1647 = vpop.f32.mrf.mxu0
  %v1648 = vadd.f32 0.0, %v1647
  %v1649 = vpop.f32.mrf.mxu0
  %v1650 = vadd.f32 0.0, %v1649
  %1651 = vmatmul.bf16.gmra.mxu0 %v384
  %v1652 = vpop.f32.mrf.mxu0
  %v1653 = vadd.f32 0.0, %v1652
  %v1654 = vpop.f32.mrf.mxu0
  %v1655 = vadd.f32 0.0, %v1654
  %1656 = vmatmul.bf16.gmra.mxu0 %v387
  %v1657 = vpop.f32.mrf.mxu0
  %v1658 = vadd.f32 0.0, %v1657
  %v1659 = vpop.f32.mrf.mxu0
  %v1660 = vadd.f32 0.0, %v1659
  %1661 = vmatmul.bf16.gmra.mxu0 %v390
  %v1662 = vpop.f32.mrf.mxu0
  %v1663 = vadd.f32 0.0, %v1662
  %v1664 = vpop.f32.mrf.mxu0
  %v1665 = vadd.f32 0.0, %v1664
  %1666 = vmatmul.bf16.gmra.mxu0 %v393
  %v1667 = vpop.f32.mrf.mxu0
  %v1668 = vadd.f32 0.0, %v1667
  %v1669 = vpop.f32.mrf.mxu0
  %v1670 = vadd.f32 0.0, %v1669
  %1671 = vmatmul.bf16.gmra.mxu0 %v396
  %v1672 = vpop.f32.mrf.mxu0
  %v1673 = vadd.f32 0.0, %v1672
  %v1674 = vpop.f32.mrf.mxu0
  %v1675 = vadd.f32 0.0, %v1674
  %1676 = vdwg.mxu0
  %v1677 = vadd.f32 %v1462, %v1549
  %v1678 = vadd.f32 %v1463, %v1618
  %v1679 = vadd.f32 %v1464, %v1551
  %v1680 = vadd.f32 %v1465, %v1620
  %v1681 = vadd.f32 %v1466, %v1554
  %v1682 = vadd.f32 %v1467, %v1623
  %v1683 = vadd.f32 %v1468, %v1556
  %v1684 = vadd.f32 %v1469, %v1625
  %v1685 = vadd.f32 %v1470, %v1559
  %v1686 = vadd.f32 %v1471, %v1628
  %v1687 = vadd.f32 %v1472, %v1561
  %v1688 = vadd.f32 %v1473, %v1630
  %v1689 = vadd.f32 %v1474, %v1564
  %v1690 = vadd.f32 %v1475, %v1633
  %v1691 = vadd.f32 %v1476, %v1566
  %v1692 = vadd.f32 %v1477, %v1635
  %v1693 = vadd.f32 %v1478, %v1569
  %v1694 = vadd.f32 %v1479, %v1638
  %v1695 = vadd.f32 %v1480, %v1571
  %v1696 = vadd.f32 %v1481, %v1640
  %v1697 = vadd.f32 %v1482, %v1574
  %v1698 = vadd.f32 %v1483, %v1643
  %v1699 = vadd.f32 %v1484, %v1576
  %v1700 = vadd.f32 %v1485, %v1645
  %v1701 = vadd.f32 %v1486, %v1579
  %v1702 = vadd.f32 %v1487, %v1648
  %v1703 = vadd.f32 %v1488, %v1581
  %v1704 = vadd.f32 %v1489, %v1650
  %v1705 = vadd.f32 %v1490, %v1584
  %v1706 = vadd.f32 %v1491, %v1653
  %v1707 = vadd.f32 %v1492, %v1586
  %v1708 = vadd.f32 %v1493, %v1655
  %v1709 = vadd.f32 %v1494, %v1589
  %v1710 = vadd.f32 %v1495, %v1658
  %v1711 = vadd.f32 %v1496, %v1591
  %v1712 = vadd.f32 %v1497, %v1660
  %v1713 = vadd.f32 %v1498, %v1594
  %v1714 = vadd.f32 %v1499, %v1663
  %v1715 = vadd.f32 %v1500, %v1596
  %v1716 = vadd.f32 %v1501, %v1665
  %v1717 = vadd.f32 %v1502, %v1599
  %v1718 = vadd.f32 %v1503, %v1668
  %v1719 = vadd.f32 %v1504, %v1601
  %v1720 = vadd.f32 %v1505, %v1670
  %v1721 = vadd.f32 %v1506, %v1604
  %v1722 = vadd.f32 %v1507, %v1673
  %v1723 = vadd.f32 %v1508, %v1606
  %v1724 = vadd.f32 %v1509, %v1675
  %s1725 = scalar_lea.vmem %s1, 224
  %v1726 = vld [vmem:[%s1725] sm:$0xff]
  %v1727 = vld [vmem:[%s1725 + $0x8] sm:$0xff]
  %v1728 = vld [vmem:[%s1725 + $0x10] sm:$0xff]
  %v1729 = vld [vmem:[%s1725 + $0x18] sm:$0x33]
  %v1734 = vunpack.c.l.b16 %v1726
  %v1735 = vunpack.c.h.b16 %v1726
  %v1736 = vunpack.c.l.b16 %v1727
  %v1737 = vunpack.c.h.b16 %v1727
  %v1738 = vunpack.c.l.b16 %v1728
  %v1739 = vunpack.c.h.b16 %v1728
  %v1740 = vunpack.c.l.b16 %v1729
  %v1741 = vunpack.c.h.b16 %v1729
  %v1742 = vpack.c.b16 %v1736, %v1734
  %v1743 = vpack.c.b16 %v1737, %v1735
  %v1744 = vpack.c.b16 %v1740, %v1738
  %v1745 = vpack.c.b16 %v1741, %v1739
  %v1749 = vsel %vm134, %v1744, 0
  %v1752 = vsel %vm134, %v1745, 0
  %1754 = vmatpush.bf16.msra.mxu0 0
  %1755 = vmatpush.bf16.msra.mxu0 0
  %1756 = vmatpush.bf16.msra.mxu0 0
  %1757 = vmatpush.bf16.msra.mxu0 0
  %1758 = vmatpush.bf16.msra.mxu0 0
  %1759 = vmatpush.bf16.msra.mxu0 0
  %1760 = vmatpush.bf16.msra.mxu0 %v1749
  %1761 = vmatpush.bf16.msra.mxu0 %v1742
  %1762 = vmatmul.bf16.gmra.mxu0 %v102
  %v1763 = vpop.f32.mrf.mxu0
  %v1764 = vadd.f32 0.0, %v1763
  %v1765 = vpop.f32.mrf.mxu0
  %v1766 = vadd.f32 0.0, %v1765
  %1767 = vmatmul.bf16.gmra.mxu0 %v105
  %v1768 = vpop.f32.mrf.mxu0
  %v1769 = vadd.f32 0.0, %v1768
  %v1770 = vpop.f32.mrf.mxu0
  %v1771 = vadd.f32 0.0, %v1770
  %1772 = vmatmul.bf16.gmra.mxu0 %v108
  %v1773 = vpop.f32.mrf.mxu0
  %v1774 = vadd.f32 0.0, %v1773
  %v1775 = vpop.f32.mrf.mxu0
  %v1776 = vadd.f32 0.0, %v1775
  %1777 = vmatmul.bf16.gmra.mxu0 %v111
  %v1778 = vpop.f32.mrf.mxu0
  %v1779 = vadd.f32 0.0, %v1778
  %v1780 = vpop.f32.mrf.mxu0
  %v1781 = vadd.f32 0.0, %v1780
  %1782 = vmatmul.bf16.gmra.mxu0 %v114
  %v1783 = vpop.f32.mrf.mxu0
  %v1784 = vadd.f32 0.0, %v1783
  %v1785 = vpop.f32.mrf.mxu0
  %v1786 = vadd.f32 0.0, %v1785
  %1787 = vmatmul.bf16.gmra.mxu0 %v117
  %v1788 = vpop.f32.mrf.mxu0
  %v1789 = vadd.f32 0.0, %v1788
  %v1790 = vpop.f32.mrf.mxu0
  %v1791 = vadd.f32 0.0, %v1790
  %1792 = vmatmul.bf16.gmra.mxu0 %v120
  %v1793 = vpop.f32.mrf.mxu0
  %v1794 = vadd.f32 0.0, %v1793
  %v1795 = vpop.f32.mrf.mxu0
  %v1796 = vadd.f32 0.0, %v1795
  %1797 = vmatmul.bf16.gmra.mxu0 %v123
  %v1798 = vpop.f32.mrf.mxu0
  %v1799 = vadd.f32 0.0, %v1798
  %v1800 = vpop.f32.mrf.mxu0
  %v1801 = vadd.f32 0.0, %v1800
  %1802 = vmatmul.bf16.gmra.mxu0 %v126
  %v1803 = vpop.f32.mrf.mxu0
  %v1804 = vadd.f32 0.0, %v1803
  %v1805 = vpop.f32.mrf.mxu0
  %v1806 = vadd.f32 0.0, %v1805
  %1807 = vmatmul.bf16.gmra.mxu0 %v129
  %v1808 = vpop.f32.mrf.mxu0
  %v1809 = vadd.f32 0.0, %v1808
  %v1810 = vpop.f32.mrf.mxu0
  %v1811 = vadd.f32 0.0, %v1810
  %1812 = vmatmul.bf16.gmra.mxu0 %v132
  %v1813 = vpop.f32.mrf.mxu0
  %v1814 = vadd.f32 0.0, %v1813
  %v1815 = vpop.f32.mrf.mxu0
  %v1816 = vadd.f32 0.0, %v1815
  %1817 = vmatmul.bf16.gmra.mxu0 %v615
  %v1818 = vpop.f32.mrf.mxu0
  %v1819 = vadd.f32 0.0, %v1818
  %v1820 = vpop.f32.mrf.mxu0
  %v1821 = vadd.f32 0.0, %v1820
  %1822 = vdwg.mxu0
  %1823 = vmatpush.bf16.msra.mxu0 0
  %1824 = vmatpush.bf16.msra.mxu0 0
  %1825 = vmatpush.bf16.msra.mxu0 0
  %1826 = vmatpush.bf16.msra.mxu0 0
  %1827 = vmatpush.bf16.msra.mxu0 0
  %1828 = vmatpush.bf16.msra.mxu0 0
  %1829 = vmatpush.bf16.msra.mxu0 %v1752
  %1830 = vmatpush.bf16.msra.mxu0 %v1743
  %1831 = vmatmul.bf16.gmra.mxu0 %v102
  %v1832 = vpop.f32.mrf.mxu0
  %v1833 = vadd.f32 0.0, %v1832
  %v1834 = vpop.f32.mrf.mxu0
  %v1835 = vadd.f32 0.0, %v1834
  %1836 = vmatmul.bf16.gmra.mxu0 %v105
  %v1837 = vpop.f32.mrf.mxu0
  %v1838 = vadd.f32 0.0, %v1837
  %v1839 = vpop.f32.mrf.mxu0
  %v1840 = vadd.f32 0.0, %v1839
  %1841 = vmatmul.bf16.gmra.mxu0 %v108
  %v1842 = vpop.f32.mrf.mxu0
  %v1843 = vadd.f32 0.0, %v1842
  %v1844 = vpop.f32.mrf.mxu0
  %v1845 = vadd.f32 0.0, %v1844
  %1846 = vmatmul.bf16.gmra.mxu0 %v111
  %v1847 = vpop.f32.mrf.mxu0
  %v1848 = vadd.f32 0.0, %v1847
  %v1849 = vpop.f32.mrf.mxu0
  %v1850 = vadd.f32 0.0, %v1849
  %1851 = vmatmul.bf16.gmra.mxu0 %v114
  %v1852 = vpop.f32.mrf.mxu0
  %v1853 = vadd.f32 0.0, %v1852
  %v1854 = vpop.f32.mrf.mxu0
  %v1855 = vadd.f32 0.0, %v1854
  %1856 = vmatmul.bf16.gmra.mxu0 %v117
  %v1857 = vpop.f32.mrf.mxu0
  %v1858 = vadd.f32 0.0, %v1857
  %v1859 = vpop.f32.mrf.mxu0
  %v1860 = vadd.f32 0.0, %v1859
  %1861 = vmatmul.bf16.gmra.mxu0 %v120
  %v1862 = vpop.f32.mrf.mxu0
  %v1863 = vadd.f32 0.0, %v1862
  %v1864 = vpop.f32.mrf.mxu0
  %v1865 = vadd.f32 0.0, %v1864
  %1866 = vmatmul.bf16.gmra.mxu0 %v123
  %v1867 = vpop.f32.mrf.mxu0
  %v1868 = vadd.f32 0.0, %v1867
  %v1869 = vpop.f32.mrf.mxu0
  %v1870 = vadd.f32 0.0, %v1869
  %1871 = vmatmul.bf16.gmra.mxu0 %v126
  %v1872 = vpop.f32.mrf.mxu0
  %v1873 = vadd.f32 0.0, %v1872
  %v1874 = vpop.f32.mrf.mxu0
  %v1875 = vadd.f32 0.0, %v1874
  %1876 = vmatmul.bf16.gmra.mxu0 %v129
  %v1877 = vpop.f32.mrf.mxu0
  %v1878 = vadd.f32 0.0, %v1877
  %v1879 = vpop.f32.mrf.mxu0
  %v1880 = vadd.f32 0.0, %v1879
  %1881 = vmatmul.bf16.gmra.mxu0 %v132
  %v1882 = vpop.f32.mrf.mxu0
  %v1883 = vadd.f32 0.0, %v1882
  %v1884 = vpop.f32.mrf.mxu0
  %v1885 = vadd.f32 0.0, %v1884
  %1886 = vmatmul.bf16.gmra.mxu0 %v615
  %v1887 = vpop.f32.mrf.mxu0
  %v1888 = vadd.f32 0.0, %v1887
  %v1889 = vpop.f32.mrf.mxu0
  %v1890 = vadd.f32 0.0, %v1889
  %1891 = vdwg.mxu0
  %v1892 = vadd.f32 %v1677, %v1764
  %v1893 = vadd.f32 %v1678, %v1833
  %v1894 = vadd.f32 %v1679, %v1766
  %v1895 = vadd.f32 %v1680, %v1835
  %v1896 = vadd.f32 %v1681, %v1769
  %v1897 = vadd.f32 %v1682, %v1838
  %v1898 = vadd.f32 %v1683, %v1771
  %v1899 = vadd.f32 %v1684, %v1840
  %v1900 = vadd.f32 %v1685, %v1774
  %v1901 = vadd.f32 %v1686, %v1843
  %v1902 = vadd.f32 %v1687, %v1776
  %v1903 = vadd.f32 %v1688, %v1845
  %v1904 = vadd.f32 %v1689, %v1779
  %v1905 = vadd.f32 %v1690, %v1848
  %v1906 = vadd.f32 %v1691, %v1781
  %v1907 = vadd.f32 %v1692, %v1850
  %v1908 = vadd.f32 %v1693, %v1784
  %v1909 = vadd.f32 %v1694, %v1853
  %v1910 = vadd.f32 %v1695, %v1786
  %v1911 = vadd.f32 %v1696, %v1855
  %v1912 = vadd.f32 %v1697, %v1789
  %v1913 = vadd.f32 %v1698, %v1858
  %v1914 = vadd.f32 %v1699, %v1791
  %v1915 = vadd.f32 %v1700, %v1860
  %v1916 = vadd.f32 %v1701, %v1794
  %v1917 = vadd.f32 %v1702, %v1863
  %v1918 = vadd.f32 %v1703, %v1796
  %v1919 = vadd.f32 %v1704, %v1865
  %v1920 = vadd.f32 %v1705, %v1799
  %v1921 = vadd.f32 %v1706, %v1868
  %v1922 = vadd.f32 %v1707, %v1801
  %v1923 = vadd.f32 %v1708, %v1870
  %v1924 = vadd.f32 %v1709, %v1804
  %v1925 = vadd.f32 %v1710, %v1873
  %v1926 = vadd.f32 %v1711, %v1806
  %v1927 = vadd.f32 %v1712, %v1875
  %v1928 = vadd.f32 %v1713, %v1809
  %v1929 = vadd.f32 %v1714, %v1878
  %v1930 = vadd.f32 %v1715, %v1811
  %v1931 = vadd.f32 %v1716, %v1880
  %v1932 = vadd.f32 %v1717, %v1814
  %v1933 = vadd.f32 %v1718, %v1883
  %v1934 = vadd.f32 %v1719, %v1816
  %v1935 = vadd.f32 %v1720, %v1885
  %v1936 = vadd.f32 %v1721, %v1819
  %v1937 = vadd.f32 %v1722, %v1888
  %v1938 = vadd.f32 %v1723, %v1821
  %v1939 = vadd.f32 %v1724, %v1890
  %s1940 = scalar_lea.vmem %s1, 256
  %v1941 = vld [vmem:[%s1940] sm:$0xff]
  %v1942 = vld [vmem:[%s1940 + $0x8] sm:$0xff]
  %v1943 = vld [vmem:[%s1940 + $0x10] sm:$0xff]
  %v1944 = vld [vmem:[%s1940 + $0x18] sm:$0x33]
  %v1949 = vunpack.c.l.b16 %v1941
  %v1950 = vunpack.c.h.b16 %v1941
  %v1951 = vunpack.c.l.b16 %v1942
  %v1952 = vunpack.c.h.b16 %v1942
  %v1953 = vunpack.c.l.b16 %v1943
  %v1954 = vunpack.c.h.b16 %v1943
  %v1955 = vunpack.c.l.b16 %v1944
  %v1956 = vunpack.c.h.b16 %v1944
  %v1957 = vpack.c.b16 %v1951, %v1949
  %v1958 = vpack.c.b16 %v1952, %v1950
  %v1959 = vpack.c.b16 %v1955, %v1953
  %v1960 = vpack.c.b16 %v1956, %v1954
  %v1964 = vsel %vm134, %v1959, 0
  %v1967 = vsel %vm134, %v1960, 0
  %1969 = vmatpush.bf16.msra.mxu0 0
  %1970 = vmatpush.bf16.msra.mxu0 0
  %1971 = vmatpush.bf16.msra.mxu0 0
  %1972 = vmatpush.bf16.msra.mxu0 0
  %1973 = vmatpush.bf16.msra.mxu0 0
  %1974 = vmatpush.bf16.msra.mxu0 0
  %1975 = vmatpush.bf16.msra.mxu0 %v1964
  %1976 = vmatpush.bf16.msra.mxu0 %v1957
  %1977 = vmatmul.bf16.gmra.mxu0 %v366
  %v1978 = vpop.f32.mrf.mxu0
  %v1979 = vadd.f32 0.0, %v1978
  %v1980 = vpop.f32.mrf.mxu0
  %v1981 = vadd.f32 0.0, %v1980
  %1982 = vmatmul.bf16.gmra.mxu0 %v369
  %v1983 = vpop.f32.mrf.mxu0
  %v1984 = vadd.f32 0.0, %v1983
  %v1985 = vpop.f32.mrf.mxu0
  %v1986 = vadd.f32 0.0, %v1985
  %1987 = vmatmul.bf16.gmra.mxu0 %v372
  %v1988 = vpop.f32.mrf.mxu0
  %v1989 = vadd.f32 0.0, %v1988
  %v1990 = vpop.f32.mrf.mxu0
  %v1991 = vadd.f32 0.0, %v1990
  %1992 = vmatmul.bf16.gmra.mxu0 %v375
  %v1993 = vpop.f32.mrf.mxu0
  %v1994 = vadd.f32 0.0, %v1993
  %v1995 = vpop.f32.mrf.mxu0
  %v1996 = vadd.f32 0.0, %v1995
  %1997 = vmatmul.bf16.gmra.mxu0 %v378
  %v1998 = vpop.f32.mrf.mxu0
  %v1999 = vadd.f32 0.0, %v1998
  %v2000 = vpop.f32.mrf.mxu0
  %v2001 = vadd.f32 0.0, %v2000
  %2002 = vmatmul.bf16.gmra.mxu0 %v381
  %v2003 = vpop.f32.mrf.mxu0
  %v2004 = vadd.f32 0.0, %v2003
  %v2005 = vpop.f32.mrf.mxu0
  %v2006 = vadd.f32 0.0, %v2005
  %2007 = vmatmul.bf16.gmra.mxu0 %v384
  %v2008 = vpop.f32.mrf.mxu0
  %v2009 = vadd.f32 0.0, %v2008
  %v2010 = vpop.f32.mrf.mxu0
  %v2011 = vadd.f32 0.0, %v2010
  %2012 = vmatmul.bf16.gmra.mxu0 %v387
  %v2013 = vpop.f32.mrf.mxu0
  %v2014 = vadd.f32 0.0, %v2013
  %v2015 = vpop.f32.mrf.mxu0
  %v2016 = vadd.f32 0.0, %v2015
  %2017 = vmatmul.bf16.gmra.mxu0 %v390
  %v2018 = vpop.f32.mrf.mxu0
  %v2019 = vadd.f32 0.0, %v2018
  %v2020 = vpop.f32.mrf.mxu0
  %v2021 = vadd.f32 0.0, %v2020
  %2022 = vmatmul.bf16.gmra.mxu0 %v393
  %v2023 = vpop.f32.mrf.mxu0
  %v2024 = vadd.f32 0.0, %v2023
  %v2025 = vpop.f32.mrf.mxu0
  %v2026 = vadd.f32 0.0, %v2025
  %2027 = vmatmul.bf16.gmra.mxu0 %v396
  %v2028 = vpop.f32.mrf.mxu0
  %v2029 = vadd.f32 0.0, %v2028
  %v2030 = vpop.f32.mrf.mxu0
  %v2031 = vadd.f32 0.0, %v2030
  %2032 = vmatmul.bf16.gmra.mxu0 %v834
  %v2033 = vpop.f32.mrf.mxu0
  %v2034 = vadd.f32 0.0, %v2033
  %v2035 = vpop.f32.mrf.mxu0
  %v2036 = vadd.f32 0.0, %v2035
  %2037 = vdwg.mxu0
  %2038 = vmatpush.bf16.msra.mxu0 0
  %2039 = vmatpush.bf16.msra.mxu0 0
  %2040 = vmatpush.bf16.msra.mxu0 0
  %2041 = vmatpush.bf16.msra.mxu0 0
  %2042 = vmatpush.bf16.msra.mxu0 0
  %2043 = vmatpush.bf16.msra.mxu0 0
  %2044 = vmatpush.bf16.msra.mxu0 %v1967
  %2045 = vmatpush.bf16.msra.mxu0 %v1958
  %2046 = vmatmul.bf16.gmra.mxu0 %v366
  %v2047 = vpop.f32.mrf.mxu0
  %v2048 = vadd.f32 0.0, %v2047
  %v2049 = vpop.f32.mrf.mxu0
  %v2050 = vadd.f32 0.0, %v2049
  %2051 = vmatmul.bf16.gmra.mxu0 %v369
  %v2052 = vpop.f32.mrf.mxu0
  %v2053 = vadd.f32 0.0, %v2052
  %v2054 = vpop.f32.mrf.mxu0
  %v2055 = vadd.f32 0.0, %v2054
  %2056 = vmatmul.bf16.gmra.mxu0 %v372
  %v2057 = vpop.f32.mrf.mxu0
  %v2058 = vadd.f32 0.0, %v2057
  %v2059 = vpop.f32.mrf.mxu0
  %v2060 = vadd.f32 0.0, %v2059
  %2061 = vmatmul.bf16.gmra.mxu0 %v375
  %v2062 = vpop.f32.mrf.mxu0
  %v2063 = vadd.f32 0.0, %v2062
  %v2064 = vpop.f32.mrf.mxu0
  %v2065 = vadd.f32 0.0, %v2064
  %2066 = vmatmul.bf16.gmra.mxu0 %v378
  %v2067 = vpop.f32.mrf.mxu0
  %v2068 = vadd.f32 0.0, %v2067
  %v2069 = vpop.f32.mrf.mxu0
  %v2070 = vadd.f32 0.0, %v2069
  %2071 = vmatmul.bf16.gmra.mxu0 %v381
  %v2072 = vpop.f32.mrf.mxu0
  %v2073 = vadd.f32 0.0, %v2072
  %v2074 = vpop.f32.mrf.mxu0
  %v2075 = vadd.f32 0.0, %v2074
  %2076 = vmatmul.bf16.gmra.mxu0 %v384
  %v2077 = vpop.f32.mrf.mxu0
  %v2078 = vadd.f32 0.0, %v2077
  %v2079 = vpop.f32.mrf.mxu0
  %v2080 = vadd.f32 0.0, %v2079
  %2081 = vmatmul.bf16.gmra.mxu0 %v387
  %v2082 = vpop.f32.mrf.mxu0
  %v2083 = vadd.f32 0.0, %v2082
  %v2084 = vpop.f32.mrf.mxu0
  %v2085 = vadd.f32 0.0, %v2084
  %2086 = vmatmul.bf16.gmra.mxu0 %v390
  %v2087 = vpop.f32.mrf.mxu0
  %v2088 = vadd.f32 0.0, %v2087
  %v2089 = vpop.f32.mrf.mxu0
  %v2090 = vadd.f32 0.0, %v2089
  %2091 = vmatmul.bf16.gmra.mxu0 %v393
  %v2092 = vpop.f32.mrf.mxu0
  %v2093 = vadd.f32 0.0, %v2092
  %v2094 = vpop.f32.mrf.mxu0
  %v2095 = vadd.f32 0.0, %v2094
  %2096 = vmatmul.bf16.gmra.mxu0 %v396
  %v2097 = vpop.f32.mrf.mxu0
  %v2098 = vadd.f32 0.0, %v2097
  %v2099 = vpop.f32.mrf.mxu0
  %v2100 = vadd.f32 0.0, %v2099
  %2101 = vmatmul.bf16.gmra.mxu0 %v834
  %v2102 = vpop.f32.mrf.mxu0
  %v2103 = vadd.f32 0.0, %v2102
  %v2104 = vpop.f32.mrf.mxu0
  %v2105 = vadd.f32 0.0, %v2104
  %2106 = vdwg.mxu0
  %v2107 = vadd.f32 %v1892, %v1979
  %v2108 = vadd.f32 %v1893, %v2048
  %v2109 = vadd.f32 %v1894, %v1981
  %v2110 = vadd.f32 %v1895, %v2050
  %v2111 = vadd.f32 %v1896, %v1984
  %v2112 = vadd.f32 %v1897, %v2053
  %v2113 = vadd.f32 %v1898, %v1986
  %v2114 = vadd.f32 %v1899, %v2055
  %v2115 = vadd.f32 %v1900, %v1989
  %v2116 = vadd.f32 %v1901, %v2058
  %v2117 = vadd.f32 %v1902, %v1991
  %v2118 = vadd.f32 %v1903, %v2060
  %v2119 = vadd.f32 %v1904, %v1994
  %v2120 = vadd.f32 %v1905, %v2063
  %v2121 = vadd.f32 %v1906, %v1996
  %v2122 = vadd.f32 %v1907, %v2065
  %v2123 = vadd.f32 %v1908, %v1999
  %v2124 = vadd.f32 %v1909, %v2068
  %v2125 = vadd.f32 %v1910, %v2001
  %v2126 = vadd.f32 %v1911, %v2070
  %v2127 = vadd.f32 %v1912, %v2004
  %v2128 = vadd.f32 %v1913, %v2073
  %v2129 = vadd.f32 %v1914, %v2006
  %v2130 = vadd.f32 %v1915, %v2075
  %v2131 = vadd.f32 %v1916, %v2009
  %v2132 = vadd.f32 %v1917, %v2078
  %v2133 = vadd.f32 %v1918, %v2011
  %v2134 = vadd.f32 %v1919, %v2080
  %v2135 = vadd.f32 %v1920, %v2014
  %v2136 = vadd.f32 %v1921, %v2083
  %v2137 = vadd.f32 %v1922, %v2016
  %v2138 = vadd.f32 %v1923, %v2085
  %v2139 = vadd.f32 %v1924, %v2019
  %v2140 = vadd.f32 %v1925, %v2088
  %v2141 = vadd.f32 %v1926, %v2021
  %v2142 = vadd.f32 %v1927, %v2090
  %v2143 = vadd.f32 %v1928, %v2024
  %v2144 = vadd.f32 %v1929, %v2093
  %v2145 = vadd.f32 %v1930, %v2026
  %v2146 = vadd.f32 %v1931, %v2095
  %v2147 = vadd.f32 %v1932, %v2029
  %v2148 = vadd.f32 %v1933, %v2098
  %v2149 = vadd.f32 %v1934, %v2031
  %v2150 = vadd.f32 %v1935, %v2100
  %v2151 = vadd.f32 %v1936, %v2034
  %v2152 = vadd.f32 %v1937, %v2103
  %v2153 = vadd.f32 %v1938, %v2036
  %v2154 = vadd.f32 %v1939, %v2105
  %s2155 = scalar_lea.vmem %s1, 288
  %v2156 = vld [vmem:[%s2155] sm:$0xff]
  %v2157 = vld [vmem:[%s2155 + $0x8] sm:$0xff]
  %v2158 = vld [vmem:[%s2155 + $0x10] sm:$0xff]
  %v2159 = vld [vmem:[%s2155 + $0x18] sm:$0x33]
  %v2164 = vunpack.c.l.b16 %v2156
  %v2165 = vunpack.c.h.b16 %v2156
  %v2166 = vunpack.c.l.b16 %v2157
  %v2167 = vunpack.c.h.b16 %v2157
  %v2168 = vunpack.c.l.b16 %v2158
  %v2169 = vunpack.c.h.b16 %v2158
  %v2170 = vunpack.c.l.b16 %v2159
  %v2171 = vunpack.c.h.b16 %v2159
  %v2172 = vpack.c.b16 %v2166, %v2164
  %v2173 = vpack.c.b16 %v2167, %v2165
  %v2174 = vpack.c.b16 %v2170, %v2168
  %v2175 = vpack.c.b16 %v2171, %v2169
  %v2179 = vsel %vm134, %v2174, 0
  %v2182 = vsel %vm134, %v2175, 0
  %2184 = vmatpush.bf16.msra.mxu0 0
  %2185 = vmatpush.bf16.msra.mxu0 0
  %2186 = vmatpush.bf16.msra.mxu0 0
  %2187 = vmatpush.bf16.msra.mxu0 0
  %2188 = vmatpush.bf16.msra.mxu0 0
  %2189 = vmatpush.bf16.msra.mxu0 0
  %2190 = vmatpush.bf16.msra.mxu0 %v2179
  %2191 = vmatpush.bf16.msra.mxu0 %v2172
  %2192 = vmatmul.bf16.gmra.mxu0 %v105
  %v2193 = vpop.f32.mrf.mxu0
  %v2194 = vadd.f32 0.0, %v2193
  %v2195 = vpop.f32.mrf.mxu0
  %v2196 = vadd.f32 0.0, %v2195
  %2197 = vmatmul.bf16.gmra.mxu0 %v108
  %v2198 = vpop.f32.mrf.mxu0
  %v2199 = vadd.f32 0.0, %v2198
  %v2200 = vpop.f32.mrf.mxu0
  %v2201 = vadd.f32 0.0, %v2200
  %2202 = vmatmul.bf16.gmra.mxu0 %v111
  %v2203 = vpop.f32.mrf.mxu0
  %v2204 = vadd.f32 0.0, %v2203
  %v2205 = vpop.f32.mrf.mxu0
  %v2206 = vadd.f32 0.0, %v2205
  %2207 = vmatmul.bf16.gmra.mxu0 %v114
  %v2208 = vpop.f32.mrf.mxu0
  %v2209 = vadd.f32 0.0, %v2208
  %v2210 = vpop.f32.mrf.mxu0
  %v2211 = vadd.f32 0.0, %v2210
  %2212 = vmatmul.bf16.gmra.mxu0 %v117
  %v2213 = vpop.f32.mrf.mxu0
  %v2214 = vadd.f32 0.0, %v2213
  %v2215 = vpop.f32.mrf.mxu0
  %v2216 = vadd.f32 0.0, %v2215
  %2217 = vmatmul.bf16.gmra.mxu0 %v120
  %v2218 = vpop.f32.mrf.mxu0
  %v2219 = vadd.f32 0.0, %v2218
  %v2220 = vpop.f32.mrf.mxu0
  %v2221 = vadd.f32 0.0, %v2220
  %2222 = vmatmul.bf16.gmra.mxu0 %v123
  %v2223 = vpop.f32.mrf.mxu0
  %v2224 = vadd.f32 0.0, %v2223
  %v2225 = vpop.f32.mrf.mxu0
  %v2226 = vadd.f32 0.0, %v2225
  %2227 = vmatmul.bf16.gmra.mxu0 %v126
  %v2228 = vpop.f32.mrf.mxu0
  %v2229 = vadd.f32 0.0, %v2228
  %v2230 = vpop.f32.mrf.mxu0
  %v2231 = vadd.f32 0.0, %v2230
  %2232 = vmatmul.bf16.gmra.mxu0 %v129
  %v2233 = vpop.f32.mrf.mxu0
  %v2234 = vadd.f32 0.0, %v2233
  %v2235 = vpop.f32.mrf.mxu0
  %v2236 = vadd.f32 0.0, %v2235
  %2237 = vmatmul.bf16.gmra.mxu0 %v132
  %v2238 = vpop.f32.mrf.mxu0
  %v2239 = vadd.f32 0.0, %v2238
  %v2240 = vpop.f32.mrf.mxu0
  %v2241 = vadd.f32 0.0, %v2240
  %2242 = vmatmul.bf16.gmra.mxu0 %v615
  %v2243 = vpop.f32.mrf.mxu0
  %v2244 = vadd.f32 0.0, %v2243
  %v2245 = vpop.f32.mrf.mxu0
  %v2246 = vadd.f32 0.0, %v2245
  %2247 = vmatmul.bf16.gmra.mxu0 %v1053
  %v2248 = vpop.f32.mrf.mxu0
  %v2249 = vadd.f32 0.0, %v2248
  %v2250 = vpop.f32.mrf.mxu0
  %v2251 = vadd.f32 0.0, %v2250
  %2252 = vdwg.mxu0
  %2253 = vmatpush.bf16.msra.mxu0 0
  %2254 = vmatpush.bf16.msra.mxu0 0
  %2255 = vmatpush.bf16.msra.mxu0 0
  %2256 = vmatpush.bf16.msra.mxu0 0
  %2257 = vmatpush.bf16.msra.mxu0 0
  %2258 = vmatpush.bf16.msra.mxu0 0
  %2259 = vmatpush.bf16.msra.mxu0 %v2182
  %2260 = vmatpush.bf16.msra.mxu0 %v2173
  %2261 = vmatmul.bf16.gmra.mxu0 %v105
  %v2262 = vpop.f32.mrf.mxu0
  %v2263 = vadd.f32 0.0, %v2262
  %v2264 = vpop.f32.mrf.mxu0
  %v2265 = vadd.f32 0.0, %v2264
  %2266 = vmatmul.bf16.gmra.mxu0 %v108
  %v2267 = vpop.f32.mrf.mxu0
  %v2268 = vadd.f32 0.0, %v2267
  %v2269 = vpop.f32.mrf.mxu0
  %v2270 = vadd.f32 0.0, %v2269
  %2271 = vmatmul.bf16.gmra.mxu0 %v111
  %v2272 = vpop.f32.mrf.mxu0
  %v2273 = vadd.f32 0.0, %v2272
  %v2274 = vpop.f32.mrf.mxu0
  %v2275 = vadd.f32 0.0, %v2274
  %2276 = vmatmul.bf16.gmra.mxu0 %v114
  %v2277 = vpop.f32.mrf.mxu0
  %v2278 = vadd.f32 0.0, %v2277
  %v2279 = vpop.f32.mrf.mxu0
  %v2280 = vadd.f32 0.0, %v2279
  %2281 = vmatmul.bf16.gmra.mxu0 %v117
  %v2282 = vpop.f32.mrf.mxu0
  %v2283 = vadd.f32 0.0, %v2282
  %v2284 = vpop.f32.mrf.mxu0
  %v2285 = vadd.f32 0.0, %v2284
  %2286 = vmatmul.bf16.gmra.mxu0 %v120
  %v2287 = vpop.f32.mrf.mxu0
  %v2288 = vadd.f32 0.0, %v2287
  %v2289 = vpop.f32.mrf.mxu0
  %v2290 = vadd.f32 0.0, %v2289
  %2291 = vmatmul.bf16.gmra.mxu0 %v123
  %v2292 = vpop.f32.mrf.mxu0
  %v2293 = vadd.f32 0.0, %v2292
  %v2294 = vpop.f32.mrf.mxu0
  %v2295 = vadd.f32 0.0, %v2294
  %2296 = vmatmul.bf16.gmra.mxu0 %v126
  %v2297 = vpop.f32.mrf.mxu0
  %v2298 = vadd.f32 0.0, %v2297
  %v2299 = vpop.f32.mrf.mxu0
  %v2300 = vadd.f32 0.0, %v2299
  %2301 = vmatmul.bf16.gmra.mxu0 %v129
  %v2302 = vpop.f32.mrf.mxu0
  %v2303 = vadd.f32 0.0, %v2302
  %v2304 = vpop.f32.mrf.mxu0
  %v2305 = vadd.f32 0.0, %v2304
  %2306 = vmatmul.bf16.gmra.mxu0 %v132
  %v2307 = vpop.f32.mrf.mxu0
  %v2308 = vadd.f32 0.0, %v2307
  %v2309 = vpop.f32.mrf.mxu0
  %v2310 = vadd.f32 0.0, %v2309
  %2311 = vmatmul.bf16.gmra.mxu0 %v615
  %v2312 = vpop.f32.mrf.mxu0
  %v2313 = vadd.f32 0.0, %v2312
  %v2314 = vpop.f32.mrf.mxu0
  %v2315 = vadd.f32 0.0, %v2314
  %2316 = vmatmul.bf16.gmra.mxu0 %v1053
  %v2317 = vpop.f32.mrf.mxu0
  %v2318 = vadd.f32 0.0, %v2317
  %v2319 = vpop.f32.mrf.mxu0
  %v2320 = vadd.f32 0.0, %v2319
  %2321 = vdwg.mxu0
  %v2322 = vadd.f32 %v2107, %v2194
  %v2323 = vadd.f32 %v2108, %v2263
  %v2324 = vadd.f32 %v2109, %v2196
  %v2325 = vadd.f32 %v2110, %v2265
  %v2326 = vadd.f32 %v2111, %v2199
  %v2327 = vadd.f32 %v2112, %v2268
  %v2328 = vadd.f32 %v2113, %v2201
  %v2329 = vadd.f32 %v2114, %v2270
  %v2330 = vadd.f32 %v2115, %v2204
  %v2331 = vadd.f32 %v2116, %v2273
  %v2332 = vadd.f32 %v2117, %v2206
  %v2333 = vadd.f32 %v2118, %v2275
  %v2334 = vadd.f32 %v2119, %v2209
  %v2335 = vadd.f32 %v2120, %v2278
  %v2336 = vadd.f32 %v2121, %v2211
  %v2337 = vadd.f32 %v2122, %v2280
  %v2338 = vadd.f32 %v2123, %v2214
  %v2339 = vadd.f32 %v2124, %v2283
  %v2340 = vadd.f32 %v2125, %v2216
  %v2341 = vadd.f32 %v2126, %v2285
  %v2342 = vadd.f32 %v2127, %v2219
  %v2343 = vadd.f32 %v2128, %v2288
  %v2344 = vadd.f32 %v2129, %v2221
  %v2345 = vadd.f32 %v2130, %v2290
  %v2346 = vadd.f32 %v2131, %v2224
  %v2347 = vadd.f32 %v2132, %v2293
  %v2348 = vadd.f32 %v2133, %v2226
  %v2349 = vadd.f32 %v2134, %v2295
  %v2350 = vadd.f32 %v2135, %v2229
  %v2351 = vadd.f32 %v2136, %v2298
  %v2352 = vadd.f32 %v2137, %v2231
  %v2353 = vadd.f32 %v2138, %v2300
  %v2354 = vadd.f32 %v2139, %v2234
  %v2355 = vadd.f32 %v2140, %v2303
  %v2356 = vadd.f32 %v2141, %v2236
  %v2357 = vadd.f32 %v2142, %v2305
  %v2358 = vadd.f32 %v2143, %v2239
  %v2359 = vadd.f32 %v2144, %v2308
  %v2360 = vadd.f32 %v2145, %v2241
  %v2361 = vadd.f32 %v2146, %v2310
  %v2362 = vadd.f32 %v2147, %v2244
  %v2363 = vadd.f32 %v2148, %v2313
  %v2364 = vadd.f32 %v2149, %v2246
  %v2365 = vadd.f32 %v2150, %v2315
  %v2366 = vadd.f32 %v2151, %v2249
  %v2367 = vadd.f32 %v2152, %v2318
  %v2368 = vadd.f32 %v2153, %v2251
  %v2369 = vadd.f32 %v2154, %v2320
  %v2370 = vmax.f32 %v2322, 0.0
  %v2371 = vmax.f32 %v2323, 0.0
  %v2372 = vmax.f32 %v2324, 0.0
  %v2373 = vmax.f32 %v2325, 0.0
  %v2374 = vmax.f32 %v2326, 0.0
  %v2375 = vmax.f32 %v2327, 0.0
  %v2376 = vmax.f32 %v2328, 0.0
  %v2377 = vmax.f32 %v2329, 0.0
  %v2378 = vmax.f32 %v2330, 0.0
  %v2379 = vmax.f32 %v2331, 0.0
  %v2380 = vmax.f32 %v2332, 0.0
  %v2381 = vmax.f32 %v2333, 0.0
  %v2382 = vmax.f32 %v2334, 0.0
  %v2383 = vmax.f32 %v2335, 0.0
  %v2384 = vmax.f32 %v2336, 0.0
  %v2385 = vmax.f32 %v2337, 0.0
  %v2386 = vmax.f32 %v2338, 0.0
  %v2387 = vmax.f32 %v2339, 0.0
  %v2388 = vmax.f32 %v2340, 0.0
  %v2389 = vmax.f32 %v2341, 0.0
  %v2390 = vmax.f32 %v2342, 0.0
  %v2391 = vmax.f32 %v2343, 0.0
  %v2392 = vmax.f32 %v2344, 0.0
  %v2393 = vmax.f32 %v2345, 0.0
  %v2394 = vmax.f32 %v2346, 0.0
  %v2395 = vmax.f32 %v2347, 0.0
  %v2396 = vmax.f32 %v2348, 0.0
  %v2397 = vmax.f32 %v2349, 0.0
  %v2398 = vmax.f32 %v2350, 0.0
  %v2399 = vmax.f32 %v2351, 0.0
  %v2400 = vmax.f32 %v2352, 0.0
  %v2401 = vmax.f32 %v2353, 0.0
  %v2402 = vmax.f32 %v2354, 0.0
  %v2403 = vmax.f32 %v2355, 0.0
  %v2404 = vmax.f32 %v2356, 0.0
  %v2405 = vmax.f32 %v2357, 0.0
  %v2406 = vmax.f32 %v2358, 0.0
  %v2407 = vmax.f32 %v2359, 0.0
  %v2408 = vmax.f32 %v2360, 0.0
  %v2409 = vmax.f32 %v2361, 0.0
  %v2410 = vmax.f32 %v2362, 0.0
  %v2411 = vmax.f32 %v2363, 0.0
  %v2412 = vmax.f32 %v2364, 0.0
  %v2413 = vmax.f32 %v2365, 0.0
  %v2414 = vmax.f32 %v2366, 0.0
  %v2415 = vmax.f32 %v2367, 0.0
  %v2416 = vmax.f32 %v2368, 0.0
  %v2417 = vmax.f32 %v2369, 0.0
  %v2418 = vmax.f32 %v1247, %v2370
  %v2419 = vmax.f32 %v1248, %v2371
  %v2420 = vmax.f32 %v1249, %v2372
  %v2421 = vmax.f32 %v1250, %v2373
  %v2422 = vmax.f32 %v1251, %v2374
  %v2423 = vmax.f32 %v1252, %v2375
  %v2424 = vmax.f32 %v1253, %v2376
  %v2425 = vmax.f32 %v1254, %v2377
  %v2426 = vmax.f32 %v1255, %v2378
  %v2427 = vmax.f32 %v1256, %v2379
  %v2428 = vmax.f32 %v1257, %v2380
  %v2429 = vmax.f32 %v1258, %v2381
  %v2430 = vmax.f32 %v1259, %v2382
  %v2431 = vmax.f32 %v1260, %v2383
  %v2432 = vmax.f32 %v1261, %v2384
  %v2433 = vmax.f32 %v1262, %v2385
  %v2434 = vmax.f32 %v1263, %v2386
  %v2435 = vmax.f32 %v1264, %v2387
  %v2436 = vmax.f32 %v1265, %v2388
  %v2437 = vmax.f32 %v1266, %v2389
  %v2438 = vmax.f32 %v1267, %v2390
  %v2439 = vmax.f32 %v1268, %v2391
  %v2440 = vmax.f32 %v1269, %v2392
  %v2441 = vmax.f32 %v1270, %v2393
  %v2442 = vmax.f32 %v1271, %v2394
  %v2443 = vmax.f32 %v1272, %v2395
  %v2444 = vmax.f32 %v1273, %v2396
  %v2445 = vmax.f32 %v1274, %v2397
  %v2446 = vmax.f32 %v1275, %v2398
  %v2447 = vmax.f32 %v1276, %v2399
  %v2448 = vmax.f32 %v1277, %v2400
  %v2449 = vmax.f32 %v1278, %v2401
  %v2450 = vmax.f32 %v1279, %v2402
  %v2451 = vmax.f32 %v1280, %v2403
  %v2452 = vmax.f32 %v1281, %v2404
  %v2453 = vmax.f32 %v1282, %v2405
  %v2454 = vmax.f32 %v1283, %v2406
  %v2455 = vmax.f32 %v1284, %v2407
  %v2456 = vmax.f32 %v1285, %v2408
  %v2457 = vmax.f32 %v1286, %v2409
  %v2458 = vmax.f32 %v1287, %v2410
  %v2459 = vmax.f32 %v1288, %v2411
  %v2460 = vmax.f32 %v1289, %v2412
  %v2461 = vmax.f32 %v1290, %v2413
  %v2462 = vmax.f32 %v1291, %v2414
  %v2463 = vmax.f32 %v1292, %v2415
  %v2464 = vmax.f32 %v1293, %v2416
  %v2465 = vmax.f32 %v1294, %v2417
  %v2466 = vmax.f32 %v2418, %v2420
  %v2467 = vmax.f32 %v2419, %v2421
  %v2468 = vmax.f32 %v2422, %v2424
  %v2469 = vmax.f32 %v2423, %v2425
  %v2470 = vmax.f32 %v2426, %v2428
  %v2471 = vmax.f32 %v2427, %v2429
  %v2472 = vmax.f32 %v2430, %v2432
  %v2473 = vmax.f32 %v2431, %v2433
  %v2474 = vmax.f32 %v2434, %v2436
  %v2475 = vmax.f32 %v2435, %v2437
  %v2476 = vmax.f32 %v2438, %v2440
  %v2477 = vmax.f32 %v2439, %v2441
  %v2478 = vmax.f32 %v2442, %v2444
  %v2479 = vmax.f32 %v2443, %v2445
  %v2480 = vmax.f32 %v2446, %v2448
  %v2481 = vmax.f32 %v2447, %v2449
  %v2482 = vmax.f32 %v2450, %v2452
  %v2483 = vmax.f32 %v2451, %v2453
  %v2484 = vmax.f32 %v2454, %v2456
  %v2485 = vmax.f32 %v2455, %v2457
  %v2486 = vmax.f32 %v2458, %v2460
  %v2487 = vmax.f32 %v2459, %v2461
  %v2488 = vmax.f32 %v2462, %v2464
  %v2489 = vmax.f32 %v2463, %v2465
  %v2490 = vld [vmem:[%s4] sm:$0x3]
  %v2492 = vperm.slane %v2490, 0
  %v2493 = vperm.slane %v2490, 1
  %v2496 = vadd.f32 %v2492, 0.0
  %v2497 = vadd.f32 %v2493, 0.0
  %v2498 = vpack.c.bf16 %v2468, %v2466
  %v2499 = vpack.c.bf16 %v2469, %v2467
  %v2500 = vpack.c.bf16 %v2472, %v2470
  %v2501 = vpack.c.bf16 %v2473, %v2471
  %v2502 = vpack.c.bf16 %v2476, %v2474
  %v2503 = vpack.c.bf16 %v2477, %v2475
  %v2504 = vpack.c.bf16 %v2480, %v2478
  %v2505 = vpack.c.bf16 %v2481, %v2479
  %v2506 = vld [vmem:[%s3] sm:$0xff]
  %v2507 = vld [vmem:[%s3 + $0x8] sm:$0xff]
  %v2508 = vld [vmem:[%s3 + $0x10] sm:$0xff]
  %v2509 = vld [vmem:[%s3 + $0x18] sm:$0xff]
  %v2510 = vld [vmem:[%s3 + $0x20] sm:$0xff]
  %v2511 = vld [vmem:[%s3 + $0x28] sm:$0xff]
  %v2512 = vld [vmem:[%s3 + $0x30] sm:$0xff]
  %v2513 = vld [vmem:[%s3 + $0x38] sm:$0xff]
  %v2514 = vld [vmem:[%s3 + $0x40] sm:$0xff]
  %v2515 = vld [vmem:[%s3 + $0x48] sm:$0xff]
  %v2516 = vld [vmem:[%s3 + $0x50] sm:$0xff]
  %v2517 = vld [vmem:[%s3 + $0x58] sm:$0xff]
  %v2518 = vld [vmem:[%s3 + $0x60] sm:$0xff]
  %v2519 = vld [vmem:[%s3 + $0x68] sm:$0xff]
  %v2520 = vld [vmem:[%s3 + $0x70] sm:$0xff]
  %v2521 = vld [vmem:[%s3 + $0x78] sm:$0xff]
  %v2522 = vld [vmem:[%s3 + $0x80] sm:$0xff]
  %v2523 = vld [vmem:[%s3 + $0x88] sm:$0xff]
  %v2524 = vld [vmem:[%s3 + $0x90] sm:$0xff]
  %v2525 = vld [vmem:[%s3 + $0x98] sm:$0xff]
  %v2526 = vld [vmem:[%s3 + $0xa0] sm:$0xff]
  %v2527 = vld [vmem:[%s3 + $0xa8] sm:$0xff]
  %v2528 = vld [vmem:[%s3 + $0xb0] sm:$0xff]
  %v2529 = vld [vmem:[%s3 + $0xb8] sm:$0xff]
  %v2530 = vld [vmem:[%s3 + $0xc0] sm:$0xff]
  %v2531 = vld [vmem:[%s3 + $0xc8] sm:$0xff]
  %v2532 = vld [vmem:[%s3 + $0xd0] sm:$0xff]
  %v2533 = vld [vmem:[%s3 + $0xd8] sm:$0xff]
  %v2534 = vld [vmem:[%s3 + $0xe0] sm:$0xff]
  %v2535 = vld [vmem:[%s3 + $0xe8] sm:$0xff]
  %v2566 = vunpack.c.l.b16 %v2506
  %v2567 = vunpack.c.h.b16 %v2506
  %v2568 = vunpack.c.l.b16 %v2507
  %v2569 = vunpack.c.h.b16 %v2507
  %v2570 = vunpack.c.l.b16 %v2508
  %v2571 = vunpack.c.h.b16 %v2508
  %v2572 = vunpack.c.l.b16 %v2509
  %v2573 = vunpack.c.h.b16 %v2509
  %v2574 = vunpack.c.l.b16 %v2510
  %v2575 = vunpack.c.h.b16 %v2510
  %v2576 = vunpack.c.l.b16 %v2511
  %v2577 = vunpack.c.h.b16 %v2511
  %v2578 = vunpack.c.l.b16 %v2512
  %v2579 = vunpack.c.h.b16 %v2512
  %v2580 = vunpack.c.l.b16 %v2513
  %v2581 = vunpack.c.h.b16 %v2513
  %v2582 = vunpack.c.l.b16 %v2514
  %v2583 = vunpack.c.h.b16 %v2514
  %v2584 = vunpack.c.l.b16 %v2515
  %v2585 = vunpack.c.h.b16 %v2515
  %v2586 = vunpack.c.l.b16 %v2516
  %v2587 = vunpack.c.h.b16 %v2516
  %v2588 = vunpack.c.l.b16 %v2517
  %v2589 = vunpack.c.h.b16 %v2517
  %v2590 = vunpack.c.l.b16 %v2518
  %v2591 = vunpack.c.h.b16 %v2518
  %v2592 = vunpack.c.l.b16 %v2519
  %v2593 = vunpack.c.h.b16 %v2519
  %v2594 = vunpack.c.l.b16 %v2520
  %v2595 = vunpack.c.h.b16 %v2520
  %v2596 = vunpack.c.l.b16 %v2521
  %v2597 = vunpack.c.h.b16 %v2521
  %v2598 = vunpack.c.l.b16 %v2522
  %v2599 = vunpack.c.h.b16 %v2522
  %v2600 = vunpack.c.l.b16 %v2523
  %v2601 = vunpack.c.h.b16 %v2523
  %v2602 = vunpack.c.l.b16 %v2524
  %v2603 = vunpack.c.h.b16 %v2524
  %v2604 = vunpack.c.l.b16 %v2525
  %v2605 = vunpack.c.h.b16 %v2525
  %v2606 = vunpack.c.l.b16 %v2526
  %v2607 = vunpack.c.h.b16 %v2526
  %v2608 = vunpack.c.l.b16 %v2527
  %v2609 = vunpack.c.h.b16 %v2527
  %v2610 = vunpack.c.l.b16 %v2528
  %v2611 = vunpack.c.h.b16 %v2528
  %v2612 = vunpack.c.l.b16 %v2529
  %v2613 = vunpack.c.h.b16 %v2529
  %v2614 = vunpack.c.l.b16 %v2530
  %v2615 = vunpack.c.h.b16 %v2530
  %v2616 = vunpack.c.l.b16 %v2531
  %v2617 = vunpack.c.h.b16 %v2531
  %v2618 = vunpack.c.l.b16 %v2532
  %v2619 = vunpack.c.h.b16 %v2532
  %v2620 = vunpack.c.l.b16 %v2533
  %v2621 = vunpack.c.h.b16 %v2533
  %v2622 = vunpack.c.l.b16 %v2534
  %v2623 = vunpack.c.h.b16 %v2534
  %v2624 = vunpack.c.l.b16 %v2535
  %v2625 = vunpack.c.h.b16 %v2535
  %v2626 = vpack.c.b16 %v2568, %v2566
  %v2627 = vpack.c.b16 %v2569, %v2567
  %v2628 = vpack.c.b16 %v2572, %v2570
  %v2629 = vpack.c.b16 %v2573, %v2571
  %v2630 = vpack.c.b16 %v2576, %v2574
  %v2631 = vpack.c.b16 %v2577, %v2575
  %v2632 = vpack.c.b16 %v2580, %v2578
  %v2633 = vpack.c.b16 %v2581, %v2579
  %v2634 = vpack.c.b16 %v2584, %v2582
  %v2635 = vpack.c.b16 %v2585, %v2583
  %v2636 = vpack.c.b16 %v2588, %v2586
  %v2637 = vpack.c.b16 %v2589, %v2587
  %v2638 = vpack.c.b16 %v2592, %v2590
  %v2639 = vpack.c.b16 %v2593, %v2591
  %v2640 = vpack.c.b16 %v2596, %v2594
  %v2641 = vpack.c.b16 %v2597, %v2595
  %v2642 = vpack.c.b16 %v2600, %v2598
  %v2643 = vpack.c.b16 %v2601, %v2599
  %v2644 = vpack.c.b16 %v2604, %v2602
  %v2645 = vpack.c.b16 %v2605, %v2603
  %v2646 = vpack.c.b16 %v2608, %v2606
  %v2647 = vpack.c.b16 %v2609, %v2607
  %v2648 = vpack.c.b16 %v2612, %v2610
  %v2649 = vpack.c.b16 %v2613, %v2611
  %v2650 = vpack.c.b16 %v2616, %v2614
  %v2651 = vpack.c.b16 %v2617, %v2615
  %v2652 = vpack.c.b16 %v2620, %v2618
  %v2653 = vpack.c.b16 %v2621, %v2619
  %v2654 = vpack.c.b16 %v2624, %v2622
  %v2655 = vpack.c.b16 %v2625, %v2623
  %vm2686 = vcmask 916480
  %v2688 = vsel %vm2686, %v2499, 0
  %v2691 = vsel %vm2686, %v2501, 0
  %v2694 = vsel %vm2686, %v2503, 0
  %v2697 = vsel %vm2686, %v2505, 0
  %2699 = vmatpush.bf16.msra.mxu0 %v2640
  %2700 = vmatpush.bf16.msra.mxu0 %v2638
  %2701 = vmatpush.bf16.msra.mxu0 %v2636
  %2702 = vmatpush.bf16.msra.mxu0 %v2634
  %2703 = vmatpush.bf16.msra.mxu0 %v2632
  %2704 = vmatpush.bf16.msra.mxu0 %v2630
  %2705 = vmatpush.bf16.msra.mxu0 %v2628
  %2706 = vmatpush.bf16.msra.mxu0 %v2626
  %2707 = vmatmul.bf16.gmra.mxu0 %v2498
  %v2708 = vpop.f32.mrf.mxu0
  %v2709 = vadd.f32 0.0, %v2708
  %v2710 = vpop.f32.mrf.mxu0
  %v2711 = vadd.f32 0.0, %v2710
  %2712 = vmatmul.bf16.gmra.mxu0 %v2500
  %v2713 = vpop.f32.mrf.mxu0
  %v2714 = vadd.f32 0.0, %v2713
  %v2715 = vpop.f32.mrf.mxu0
  %v2716 = vadd.f32 0.0, %v2715
  %2717 = vmatmul.bf16.gmra.mxu0 %v2502
  %v2718 = vpop.f32.mrf.mxu0
  %v2719 = vadd.f32 0.0, %v2718
  %v2720 = vpop.f32.mrf.mxu0
  %v2721 = vadd.f32 0.0, %v2720
  %2722 = vmatmul.bf16.gmra.mxu0 %v2504
  %v2723 = vpop.f32.mrf.mxu0
  %v2724 = vadd.f32 0.0, %v2723
  %v2725 = vpop.f32.mrf.mxu0
  %v2726 = vadd.f32 0.0, %v2725
  %2727 = vdwg.mxu0
  %2728 = vmatpush.bf16.msra.mxu0 0
  %2729 = vmatpush.bf16.msra.mxu0 %v2654
  %2730 = vmatpush.bf16.msra.mxu0 %v2652
  %2731 = vmatpush.bf16.msra.mxu0 %v2650
  %2732 = vmatpush.bf16.msra.mxu0 %v2648
  %2733 = vmatpush.bf16.msra.mxu0 %v2646
  %2734 = vmatpush.bf16.msra.mxu0 %v2644
  %2735 = vmatpush.bf16.msra.mxu0 %v2642
  %2736 = vmatmul.bf16.gmra.mxu0 %v2688
  %v2737 = vpop.f32.mrf.mxu0
  %v2738 = vadd.f32 %v2709, %v2737
  %v2739 = vpop.f32.mrf.mxu0
  %v2740 = vadd.f32 %v2711, %v2739
  %2741 = vmatmul.bf16.gmra.mxu0 %v2691
  %v2742 = vpop.f32.mrf.mxu0
  %v2743 = vadd.f32 %v2714, %v2742
  %v2744 = vpop.f32.mrf.mxu0
  %v2745 = vadd.f32 %v2716, %v2744
  %2746 = vmatmul.bf16.gmra.mxu0 %v2694
  %v2747 = vpop.f32.mrf.mxu0
  %v2748 = vadd.f32 %v2719, %v2747
  %v2749 = vpop.f32.mrf.mxu0
  %v2750 = vadd.f32 %v2721, %v2749
  %2751 = vmatmul.bf16.gmra.mxu0 %v2697
  %v2752 = vpop.f32.mrf.mxu0
  %v2753 = vadd.f32 %v2724, %v2752
  %v2754 = vpop.f32.mrf.mxu0
  %v2755 = vadd.f32 %v2726, %v2754
  %2756 = vdwg.mxu0
  %2757 = vmatpush.bf16.msra.mxu0 %v2641
  %2758 = vmatpush.bf16.msra.mxu0 %v2639
  %2759 = vmatpush.bf16.msra.mxu0 %v2637
  %2760 = vmatpush.bf16.msra.mxu0 %v2635
  %2761 = vmatpush.bf16.msra.mxu0 %v2633
  %2762 = vmatpush.bf16.msra.mxu0 %v2631
  %2763 = vmatpush.bf16.msra.mxu0 %v2629
  %2764 = vmatpush.bf16.msra.mxu0 %v2627
  %2765 = vmatmul.bf16.gmra.mxu0 %v2498
  %v2766 = vpop.f32.mrf.mxu0
  %v2767 = vadd.f32 0.0, %v2766
  %v2768 = vpop.f32.mrf.mxu0
  %v2769 = vadd.f32 0.0, %v2768
  %2770 = vmatmul.bf16.gmra.mxu0 %v2500
  %v2771 = vpop.f32.mrf.mxu0
  %v2772 = vadd.f32 0.0, %v2771
  %v2773 = vpop.f32.mrf.mxu0
  %v2774 = vadd.f32 0.0, %v2773
  %2775 = vmatmul.bf16.gmra.mxu0 %v2502
  %v2776 = vpop.f32.mrf.mxu0
  %v2777 = vadd.f32 0.0, %v2776
  %v2778 = vpop.f32.mrf.mxu0
  %v2779 = vadd.f32 0.0, %v2778
  %2780 = vmatmul.bf16.gmra.mxu0 %v2504
  %v2781 = vpop.f32.mrf.mxu0
  %v2782 = vadd.f32 0.0, %v2781
  %v2783 = vpop.f32.mrf.mxu0
  %v2784 = vadd.f32 0.0, %v2783
  %2785 = vdwg.mxu0
  %2786 = vmatpush.bf16.msra.mxu0 0
  %2787 = vmatpush.bf16.msra.mxu0 %v2655
  %2788 = vmatpush.bf16.msra.mxu0 %v2653
  %2789 = vmatpush.bf16.msra.mxu0 %v2651
  %2790 = vmatpush.bf16.msra.mxu0 %v2649
  %2791 = vmatpush.bf16.msra.mxu0 %v2647
  %2792 = vmatpush.bf16.msra.mxu0 %v2645
  %2793 = vmatpush.bf16.msra.mxu0 %v2643
  %2794 = vmatmul.bf16.gmra.mxu0 %v2688
  %v2795 = vpop.f32.mrf.mxu0
  %v2796 = vadd.f32 %v2767, %v2795
  %v2797 = vpop.f32.mrf.mxu0
  %v2798 = vadd.f32 %v2769, %v2797
  %2799 = vmatmul.bf16.gmra.mxu0 %v2691
  %v2800 = vpop.f32.mrf.mxu0
  %v2801 = vadd.f32 %v2772, %v2800
  %v2802 = vpop.f32.mrf.mxu0
  %v2803 = vadd.f32 %v2774, %v2802
  %2804 = vmatmul.bf16.gmra.mxu0 %v2694
  %v2805 = vpop.f32.mrf.mxu0
  %v2806 = vadd.f32 %v2777, %v2805
  %v2807 = vpop.f32.mrf.mxu0
  %v2808 = vadd.f32 %v2779, %v2807
  %2809 = vmatmul.bf16.gmra.mxu0 %v2697
  %v2810 = vpop.f32.mrf.mxu0
  %v2811 = vadd.f32 %v2782, %v2810
  %v2812 = vpop.f32.mrf.mxu0
  %v2813 = vadd.f32 %v2784, %v2812
  %2814 = vdwg.mxu0
  %v2815 = vadd.f32 %v2496, %v2738
  %v2816 = vadd.f32 %v2497, %v2796
  %v2817 = vadd.f32 %v2496, %v2740
  %v2818 = vadd.f32 %v2497, %v2798
  %v2819 = vadd.f32 %v2496, %v2743
  %v2820 = vadd.f32 %v2497, %v2801
  %v2821 = vadd.f32 %v2496, %v2745
  %v2822 = vadd.f32 %v2497, %v2803
  %v2823 = vadd.f32 %v2496, %v2748
  %v2824 = vadd.f32 %v2497, %v2806
  %v2825 = vadd.f32 %v2496, %v2750
  %v2826 = vadd.f32 %v2497, %v2808
  %v2827 = vadd.f32 %v2496, %v2753
  %v2828 = vadd.f32 %v2497, %v2811
  %v2829 = vadd.f32 %v2496, %v2755
  %v2830 = vadd.f32 %v2497, %v2813
  %v2831 = vpack.c.bf16 %v2470, %v2468
  %v2832 = vpack.c.bf16 %v2471, %v2469
  %v2833 = vpack.c.bf16 %v2474, %v2472
  %v2834 = vpack.c.bf16 %v2475, %v2473
  %v2835 = vpack.c.bf16 %v2478, %v2476
  %v2836 = vpack.c.bf16 %v2479, %v2477
  %v2837 = vpack.c.bf16 %v2482, %v2480
  %v2838 = vpack.c.bf16 %v2483, %v2481
  %s2839 = scalar_lea.vmem %s3, 240
  %v2840 = vld [vmem:[%s2839] sm:$0xff]
  %v2841 = vld [vmem:[%s2839 + $0x8] sm:$0xff]
  %v2842 = vld [vmem:[%s2839 + $0x10] sm:$0xff]
  %v2843 = vld [vmem:[%s2839 + $0x18] sm:$0xff]
  %v2844 = vld [vmem:[%s2839 + $0x20] sm:$0xff]
  %v2845 = vld [vmem:[%s2839 + $0x28] sm:$0xff]
  %v2846 = vld [vmem:[%s2839 + $0x30] sm:$0xff]
  %v2847 = vld [vmem:[%s2839 + $0x38] sm:$0xff]
  %v2848 = vld [vmem:[%s2839 + $0x40] sm:$0xff]
  %v2849 = vld [vmem:[%s2839 + $0x48] sm:$0xff]
  %v2850 = vld [vmem:[%s2839 + $0x50] sm:$0xff]
  %v2851 = vld [vmem:[%s2839 + $0x58] sm:$0xff]
  %v2852 = vld [vmem:[%s2839 + $0x60] sm:$0xff]
  %v2853 = vld [vmem:[%s2839 + $0x68] sm:$0xff]
  %v2854 = vld [vmem:[%s2839 + $0x70] sm:$0xff]
  %v2855 = vld [vmem:[%s2839 + $0x78] sm:$0xff]
  %v2856 = vld [vmem:[%s2839 + $0x80] sm:$0xff]
  %v2857 = vld [vmem:[%s2839 + $0x88] sm:$0xff]
  %v2858 = vld [vmem:[%s2839 + $0x90] sm:$0xff]
  %v2859 = vld [vmem:[%s2839 + $0x98] sm:$0xff]
  %v2860 = vld [vmem:[%s2839 + $0xa0] sm:$0xff]
  %v2861 = vld [vmem:[%s2839 + $0xa8] sm:$0xff]
  %v2862 = vld [vmem:[%s2839 + $0xb0] sm:$0xff]
  %v2863 = vld [vmem:[%s2839 + $0xb8] sm:$0xff]
  %v2864 = vld [vmem:[%s2839 + $0xc0] sm:$0xff]
  %v2865 = vld [vmem:[%s2839 + $0xc8] sm:$0xff]
  %v2866 = vld [vmem:[%s2839 + $0xd0] sm:$0xff]
  %v2867 = vld [vmem:[%s2839 + $0xd8] sm:$0xff]
  %v2868 = vld [vmem:[%s2839 + $0xe0] sm:$0xff]
  %v2869 = vld [vmem:[%s2839 + $0xe8] sm:$0xff]
  %v2900 = vunpack.c.l.b16 %v2840
  %v2901 = vunpack.c.h.b16 %v2840
  %v2902 = vunpack.c.l.b16 %v2841
  %v2903 = vunpack.c.h.b16 %v2841
  %v2904 = vunpack.c.l.b16 %v2842
  %v2905 = vunpack.c.h.b16 %v2842
  %v2906 = vunpack.c.l.b16 %v2843
  %v2907 = vunpack.c.h.b16 %v2843
  %v2908 = vunpack.c.l.b16 %v2844
  %v2909 = vunpack.c.h.b16 %v2844
  %v2910 = vunpack.c.l.b16 %v2845
  %v2911 = vunpack.c.h.b16 %v2845
  %v2912 = vunpack.c.l.b16 %v2846
  %v2913 = vunpack.c.h.b16 %v2846
  %v2914 = vunpack.c.l.b16 %v2847
  %v2915 = vunpack.c.h.b16 %v2847
  %v2916 = vunpack.c.l.b16 %v2848
  %v2917 = vunpack.c.h.b16 %v2848
  %v2918 = vunpack.c.l.b16 %v2849
  %v2919 = vunpack.c.h.b16 %v2849
  %v2920 = vunpack.c.l.b16 %v2850
  %v2921 = vunpack.c.h.b16 %v2850
  %v2922 = vunpack.c.l.b16 %v2851
  %v2923 = vunpack.c.h.b16 %v2851
  %v2924 = vunpack.c.l.b16 %v2852
  %v2925 = vunpack.c.h.b16 %v2852
  %v2926 = vunpack.c.l.b16 %v2853
  %v2927 = vunpack.c.h.b16 %v2853
  %v2928 = vunpack.c.l.b16 %v2854
  %v2929 = vunpack.c.h.b16 %v2854
  %v2930 = vunpack.c.l.b16 %v2855
  %v2931 = vunpack.c.h.b16 %v2855
  %v2932 = vunpack.c.l.b16 %v2856
  %v2933 = vunpack.c.h.b16 %v2856
  %v2934 = vunpack.c.l.b16 %v2857
  %v2935 = vunpack.c.h.b16 %v2857
  %v2936 = vunpack.c.l.b16 %v2858
  %v2937 = vunpack.c.h.b16 %v2858
  %v2938 = vunpack.c.l.b16 %v2859
  %v2939 = vunpack.c.h.b16 %v2859
  %v2940 = vunpack.c.l.b16 %v2860
  %v2941 = vunpack.c.h.b16 %v2860
  %v2942 = vunpack.c.l.b16 %v2861
  %v2943 = vunpack.c.h.b16 %v2861
  %v2944 = vunpack.c.l.b16 %v2862
  %v2945 = vunpack.c.h.b16 %v2862
  %v2946 = vunpack.c.l.b16 %v2863
  %v2947 = vunpack.c.h.b16 %v2863
  %v2948 = vunpack.c.l.b16 %v2864
  %v2949 = vunpack.c.h.b16 %v2864
  %v2950 = vunpack.c.l.b16 %v2865
  %v2951 = vunpack.c.h.b16 %v2865
  %v2952 = vunpack.c.l.b16 %v2866
  %v2953 = vunpack.c.h.b16 %v2866
  %v2954 = vunpack.c.l.b16 %v2867
  %v2955 = vunpack.c.h.b16 %v2867
  %v2956 = vunpack.c.l.b16 %v2868
  %v2957 = vunpack.c.h.b16 %v2868
  %v2958 = vunpack.c.l.b16 %v2869
  %v2959 = vunpack.c.h.b16 %v2869
  %v2960 = vpack.c.b16 %v2902, %v2900
  %v2961 = vpack.c.b16 %v2903, %v2901
  %v2962 = vpack.c.b16 %v2906, %v2904
  %v2963 = vpack.c.b16 %v2907, %v2905
  %v2964 = vpack.c.b16 %v2910, %v2908
  %v2965 = vpack.c.b16 %v2911, %v2909
  %v2966 = vpack.c.b16 %v2914, %v2912
  %v2967 = vpack.c.b16 %v2915, %v2913
  %v2968 = vpack.c.b16 %v2918, %v2916
  %v2969 = vpack.c.b16 %v2919, %v2917
  %v2970 = vpack.c.b16 %v2922, %v2920
  %v2971 = vpack.c.b16 %v2923, %v2921
  %v2972 = vpack.c.b16 %v2926, %v2924
  %v2973 = vpack.c.b16 %v2927, %v2925
  %v2974 = vpack.c.b16 %v2930, %v2928
  %v2975 = vpack.c.b16 %v2931, %v2929
  %v2976 = vpack.c.b16 %v2934, %v2932
  %v2977 = vpack.c.b16 %v2935, %v2933
  %v2978 = vpack.c.b16 %v2938, %v2936
  %v2979 = vpack.c.b16 %v2939, %v2937
  %v2980 = vpack.c.b16 %v2942, %v2940
  %v2981 = vpack.c.b16 %v2943, %v2941
  %v2982 = vpack.c.b16 %v2946, %v2944
  %v2983 = vpack.c.b16 %v2947, %v2945
  %v2984 = vpack.c.b16 %v2950, %v2948
  %v2985 = vpack.c.b16 %v2951, %v2949
  %v2986 = vpack.c.b16 %v2954, %v2952
  %v2987 = vpack.c.b16 %v2955, %v2953
  %v2988 = vpack.c.b16 %v2958, %v2956
  %v2989 = vpack.c.b16 %v2959, %v2957
  %v3021 = vsel %vm2686, %v2832, 0
  %v3024 = vsel %vm2686, %v2834, 0
  %v3027 = vsel %vm2686, %v2836, 0
  %v3030 = vsel %vm2686, %v2838, 0
  %3032 = vmatpush.bf16.msra.mxu0 %v2974
  %3033 = vmatpush.bf16.msra.mxu0 %v2972
  %3034 = vmatpush.bf16.msra.mxu0 %v2970
  %3035 = vmatpush.bf16.msra.mxu0 %v2968
  %3036 = vmatpush.bf16.msra.mxu0 %v2966
  %3037 = vmatpush.bf16.msra.mxu0 %v2964
  %3038 = vmatpush.bf16.msra.mxu0 %v2962
  %3039 = vmatpush.bf16.msra.mxu0 %v2960
  %3040 = vmatmul.bf16.gmra.mxu0 %v2831
  %v3041 = vpop.f32.mrf.mxu0
  %v3042 = vadd.f32 0.0, %v3041
  %v3043 = vpop.f32.mrf.mxu0
  %v3044 = vadd.f32 0.0, %v3043
  %3045 = vmatmul.bf16.gmra.mxu0 %v2833
  %v3046 = vpop.f32.mrf.mxu0
  %v3047 = vadd.f32 0.0, %v3046
  %v3048 = vpop.f32.mrf.mxu0
  %v3049 = vadd.f32 0.0, %v3048
  %3050 = vmatmul.bf16.gmra.mxu0 %v2835
  %v3051 = vpop.f32.mrf.mxu0
  %v3052 = vadd.f32 0.0, %v3051
  %v3053 = vpop.f32.mrf.mxu0
  %v3054 = vadd.f32 0.0, %v3053
  %3055 = vmatmul.bf16.gmra.mxu0 %v2837
  %v3056 = vpop.f32.mrf.mxu0
  %v3057 = vadd.f32 0.0, %v3056
  %v3058 = vpop.f32.mrf.mxu0
  %v3059 = vadd.f32 0.0, %v3058
  %3060 = vdwg.mxu0
  %3061 = vmatpush.bf16.msra.mxu0 0
  %3062 = vmatpush.bf16.msra.mxu0 %v2988
  %3063 = vmatpush.bf16.msra.mxu0 %v2986
  %3064 = vmatpush.bf16.msra.mxu0 %v2984
  %3065 = vmatpush.bf16.msra.mxu0 %v2982
  %3066 = vmatpush.bf16.msra.mxu0 %v2980
  %3067 = vmatpush.bf16.msra.mxu0 %v2978
  %3068 = vmatpush.bf16.msra.mxu0 %v2976
  %3069 = vmatmul.bf16.gmra.mxu0 %v3021
  %v3070 = vpop.f32.mrf.mxu0
  %v3071 = vadd.f32 %v3042, %v3070
  %v3072 = vpop.f32.mrf.mxu0
  %v3073 = vadd.f32 %v3044, %v3072
  %3074 = vmatmul.bf16.gmra.mxu0 %v3024
  %v3075 = vpop.f32.mrf.mxu0
  %v3076 = vadd.f32 %v3047, %v3075
  %v3077 = vpop.f32.mrf.mxu0
  %v3078 = vadd.f32 %v3049, %v3077
  %3079 = vmatmul.bf16.gmra.mxu0 %v3027
  %v3080 = vpop.f32.mrf.mxu0
  %v3081 = vadd.f32 %v3052, %v3080
  %v3082 = vpop.f32.mrf.mxu0
  %v3083 = vadd.f32 %v3054, %v3082
  %3084 = vmatmul.bf16.gmra.mxu0 %v3030
  %v3085 = vpop.f32.mrf.mxu0
  %v3086 = vadd.f32 %v3057, %v3085
  %v3087 = vpop.f32.mrf.mxu0
  %v3088 = vadd.f32 %v3059, %v3087
  %3089 = vdwg.mxu0
  %3090 = vmatpush.bf16.msra.mxu0 %v2975
  %3091 = vmatpush.bf16.msra.mxu0 %v2973
  %3092 = vmatpush.bf16.msra.mxu0 %v2971
  %3093 = vmatpush.bf16.msra.mxu0 %v2969
  %3094 = vmatpush.bf16.msra.mxu0 %v2967
  %3095 = vmatpush.bf16.msra.mxu0 %v2965
  %3096 = vmatpush.bf16.msra.mxu0 %v2963
  %3097 = vmatpush.bf16.msra.mxu0 %v2961
  %3098 = vmatmul.bf16.gmra.mxu0 %v2831
  %v3099 = vpop.f32.mrf.mxu0
  %v3100 = vadd.f32 0.0, %v3099
  %v3101 = vpop.f32.mrf.mxu0
  %v3102 = vadd.f32 0.0, %v3101
  %3103 = vmatmul.bf16.gmra.mxu0 %v2833
  %v3104 = vpop.f32.mrf.mxu0
  %v3105 = vadd.f32 0.0, %v3104
  %v3106 = vpop.f32.mrf.mxu0
  %v3107 = vadd.f32 0.0, %v3106
  %3108 = vmatmul.bf16.gmra.mxu0 %v2835
  %v3109 = vpop.f32.mrf.mxu0
  %v3110 = vadd.f32 0.0, %v3109
  %v3111 = vpop.f32.mrf.mxu0
  %v3112 = vadd.f32 0.0, %v3111
  %3113 = vmatmul.bf16.gmra.mxu0 %v2837
  %v3114 = vpop.f32.mrf.mxu0
  %v3115 = vadd.f32 0.0, %v3114
  %v3116 = vpop.f32.mrf.mxu0
  %v3117 = vadd.f32 0.0, %v3116
  %3118 = vdwg.mxu0
  %3119 = vmatpush.bf16.msra.mxu0 0
  %3120 = vmatpush.bf16.msra.mxu0 %v2989
  %3121 = vmatpush.bf16.msra.mxu0 %v2987
  %3122 = vmatpush.bf16.msra.mxu0 %v2985
  %3123 = vmatpush.bf16.msra.mxu0 %v2983
  %3124 = vmatpush.bf16.msra.mxu0 %v2981
  %3125 = vmatpush.bf16.msra.mxu0 %v2979
  %3126 = vmatpush.bf16.msra.mxu0 %v2977
  %3127 = vmatmul.bf16.gmra.mxu0 %v3021
  %v3128 = vpop.f32.mrf.mxu0
  %v3129 = vadd.f32 %v3100, %v3128
  %v3130 = vpop.f32.mrf.mxu0
  %v3131 = vadd.f32 %v3102, %v3130
  %3132 = vmatmul.bf16.gmra.mxu0 %v3024
  %v3133 = vpop.f32.mrf.mxu0
  %v3134 = vadd.f32 %v3105, %v3133
  %v3135 = vpop.f32.mrf.mxu0
  %v3136 = vadd.f32 %v3107, %v3135
  %3137 = vmatmul.bf16.gmra.mxu0 %v3027
  %v3138 = vpop.f32.mrf.mxu0
  %v3139 = vadd.f32 %v3110, %v3138
  %v3140 = vpop.f32.mrf.mxu0
  %v3141 = vadd.f32 %v3112, %v3140
  %3142 = vmatmul.bf16.gmra.mxu0 %v3030
  %v3143 = vpop.f32.mrf.mxu0
  %v3144 = vadd.f32 %v3115, %v3143
  %v3145 = vpop.f32.mrf.mxu0
  %v3146 = vadd.f32 %v3117, %v3145
  %3147 = vdwg.mxu0
  %v3148 = vadd.f32 %v2815, %v3071
  %v3149 = vadd.f32 %v2816, %v3129
  %v3150 = vadd.f32 %v2817, %v3073
  %v3151 = vadd.f32 %v2818, %v3131
  %v3152 = vadd.f32 %v2819, %v3076
  %v3153 = vadd.f32 %v2820, %v3134
  %v3154 = vadd.f32 %v2821, %v3078
  %v3155 = vadd.f32 %v2822, %v3136
  %v3156 = vadd.f32 %v2823, %v3081
  %v3157 = vadd.f32 %v2824, %v3139
  %v3158 = vadd.f32 %v2825, %v3083
  %v3159 = vadd.f32 %v2826, %v3141
  %v3160 = vadd.f32 %v2827, %v3086
  %v3161 = vadd.f32 %v2828, %v3144
  %v3162 = vadd.f32 %v2829, %v3088
  %v3163 = vadd.f32 %v2830, %v3146
  %v3164 = vpack.c.bf16 %v2484, %v2482
  %v3165 = vpack.c.bf16 %v2485, %v2483
  %s3166 = scalar_lea.vmem %s3, 480
  %v3167 = vld [vmem:[%s3166] sm:$0xff]
  %v3168 = vld [vmem:[%s3166 + $0x8] sm:$0xff]
  %v3169 = vld [vmem:[%s3166 + $0x10] sm:$0xff]
  %v3170 = vld [vmem:[%s3166 + $0x18] sm:$0xff]
  %v3171 = vld [vmem:[%s3166 + $0x20] sm:$0xff]
  %v3172 = vld [vmem:[%s3166 + $0x28] sm:$0xff]
  %v3173 = vld [vmem:[%s3166 + $0x30] sm:$0xff]
  %v3174 = vld [vmem:[%s3166 + $0x38] sm:$0xff]
  %v3175 = vld [vmem:[%s3166 + $0x40] sm:$0xff]
  %v3176 = vld [vmem:[%s3166 + $0x48] sm:$0xff]
  %v3177 = vld [vmem:[%s3166 + $0x50] sm:$0xff]
  %v3178 = vld [vmem:[%s3166 + $0x58] sm:$0xff]
  %v3179 = vld [vmem:[%s3166 + $0x60] sm:$0xff]
  %v3180 = vld [vmem:[%s3166 + $0x68] sm:$0xff]
  %v3181 = vld [vmem:[%s3166 + $0x70] sm:$0xff]
  %v3182 = vld [vmem:[%s3166 + $0x78] sm:$0xff]
  %v3183 = vld [vmem:[%s3166 + $0x80] sm:$0xff]
  %v3184 = vld [vmem:[%s3166 + $0x88] sm:$0xff]
  %v3185 = vld [vmem:[%s3166 + $0x90] sm:$0xff]
  %v3186 = vld [vmem:[%s3166 + $0x98] sm:$0xff]
  %v3187 = vld [vmem:[%s3166 + $0xa0] sm:$0xff]
  %v3188 = vld [vmem:[%s3166 + $0xa8] sm:$0xff]
  %v3189 = vld [vmem:[%s3166 + $0xb0] sm:$0xff]
  %v3190 = vld [vmem:[%s3166 + $0xb8] sm:$0xff]
  %v3191 = vld [vmem:[%s3166 + $0xc0] sm:$0xff]
  %v3192 = vld [vmem:[%s3166 + $0xc8] sm:$0xff]
  %v3193 = vld [vmem:[%s3166 + $0xd0] sm:$0xff]
  %v3194 = vld [vmem:[%s3166 + $0xd8] sm:$0xff]
  %v3195 = vld [vmem:[%s3166 + $0xe0] sm:$0xff]
  %v3196 = vld [vmem:[%s3166 + $0xe8] sm:$0xff]
  %v3227 = vunpack.c.l.b16 %v3167
  %v3228 = vunpack.c.h.b16 %v3167
  %v3229 = vunpack.c.l.b16 %v3168
  %v3230 = vunpack.c.h.b16 %v3168
  %v3231 = vunpack.c.l.b16 %v3169
  %v3232 = vunpack.c.h.b16 %v3169
  %v3233 = vunpack.c.l.b16 %v3170
  %v3234 = vunpack.c.h.b16 %v3170
  %v3235 = vunpack.c.l.b16 %v3171
  %v3236 = vunpack.c.h.b16 %v3171
  %v3237 = vunpack.c.l.b16 %v3172
  %v3238 = vunpack.c.h.b16 %v3172
  %v3239 = vunpack.c.l.b16 %v3173
  %v3240 = vunpack.c.h.b16 %v3173
  %v3241 = vunpack.c.l.b16 %v3174
  %v3242 = vunpack.c.h.b16 %v3174
  %v3243 = vunpack.c.l.b16 %v3175
  %v3244 = vunpack.c.h.b16 %v3175
  %v3245 = vunpack.c.l.b16 %v3176
  %v3246 = vunpack.c.h.b16 %v3176
  %v3247 = vunpack.c.l.b16 %v3177
  %v3248 = vunpack.c.h.b16 %v3177
  %v3249 = vunpack.c.l.b16 %v3178
  %v3250 = vunpack.c.h.b16 %v3178
  %v3251 = vunpack.c.l.b16 %v3179
  %v3252 = vunpack.c.h.b16 %v3179
  %v3253 = vunpack.c.l.b16 %v3180
  %v3254 = vunpack.c.h.b16 %v3180
  %v3255 = vunpack.c.l.b16 %v3181
  %v3256 = vunpack.c.h.b16 %v3181
  %v3257 = vunpack.c.l.b16 %v3182
  %v3258 = vunpack.c.h.b16 %v3182
  %v3259 = vunpack.c.l.b16 %v3183
  %v3260 = vunpack.c.h.b16 %v3183
  %v3261 = vunpack.c.l.b16 %v3184
  %v3262 = vunpack.c.h.b16 %v3184
  %v3263 = vunpack.c.l.b16 %v3185
  %v3264 = vunpack.c.h.b16 %v3185
  %v3265 = vunpack.c.l.b16 %v3186
  %v3266 = vunpack.c.h.b16 %v3186
  %v3267 = vunpack.c.l.b16 %v3187
  %v3268 = vunpack.c.h.b16 %v3187
  %v3269 = vunpack.c.l.b16 %v3188
  %v3270 = vunpack.c.h.b16 %v3188
  %v3271 = vunpack.c.l.b16 %v3189
  %v3272 = vunpack.c.h.b16 %v3189
  %v3273 = vunpack.c.l.b16 %v3190
  %v3274 = vunpack.c.h.b16 %v3190
  %v3275 = vunpack.c.l.b16 %v3191
  %v3276 = vunpack.c.h.b16 %v3191
  %v3277 = vunpack.c.l.b16 %v3192
  %v3278 = vunpack.c.h.b16 %v3192
  %v3279 = vunpack.c.l.b16 %v3193
  %v3280 = vunpack.c.h.b16 %v3193
  %v3281 = vunpack.c.l.b16 %v3194
  %v3282 = vunpack.c.h.b16 %v3194
  %v3283 = vunpack.c.l.b16 %v3195
  %v3284 = vunpack.c.h.b16 %v3195
  %v3285 = vunpack.c.l.b16 %v3196
  %v3286 = vunpack.c.h.b16 %v3196
  %v3287 = vpack.c.b16 %v3229, %v3227
  %v3288 = vpack.c.b16 %v3230, %v3228
  %v3289 = vpack.c.b16 %v3233, %v3231
  %v3290 = vpack.c.b16 %v3234, %v3232
  %v3291 = vpack.c.b16 %v3237, %v3235
  %v3292 = vpack.c.b16 %v3238, %v3236
  %v3293 = vpack.c.b16 %v3241, %v3239
  %v3294 = vpack.c.b16 %v3242, %v3240
  %v3295 = vpack.c.b16 %v3245, %v3243
  %v3296 = vpack.c.b16 %v3246, %v3244
  %v3297 = vpack.c.b16 %v3249, %v3247
  %v3298 = vpack.c.b16 %v3250, %v3248
  %v3299 = vpack.c.b16 %v3253, %v3251
  %v3300 = vpack.c.b16 %v3254, %v3252
  %v3301 = vpack.c.b16 %v3257, %v3255
  %v3302 = vpack.c.b16 %v3258, %v3256
  %v3303 = vpack.c.b16 %v3261, %v3259
  %v3304 = vpack.c.b16 %v3262, %v3260
  %v3305 = vpack.c.b16 %v3265, %v3263
  %v3306 = vpack.c.b16 %v3266, %v3264
  %v3307 = vpack.c.b16 %v3269, %v3267
  %v3308 = vpack.c.b16 %v3270, %v3268
  %v3309 = vpack.c.b16 %v3273, %v3271
  %v3310 = vpack.c.b16 %v3274, %v3272
  %v3311 = vpack.c.b16 %v3277, %v3275
  %v3312 = vpack.c.b16 %v3278, %v3276
  %v3313 = vpack.c.b16 %v3281, %v3279
  %v3314 = vpack.c.b16 %v3282, %v3280
  %v3315 = vpack.c.b16 %v3285, %v3283
  %v3316 = vpack.c.b16 %v3286, %v3284
  %v3348 = vsel %vm2686, %v3165, 0
  %3350 = vmatpush.bf16.msra.mxu0 %v3301
  %3351 = vmatpush.bf16.msra.mxu0 %v3299
  %3352 = vmatpush.bf16.msra.mxu0 %v3297
  %3353 = vmatpush.bf16.msra.mxu0 %v3295
  %3354 = vmatpush.bf16.msra.mxu0 %v3293
  %3355 = vmatpush.bf16.msra.mxu0 %v3291
  %3356 = vmatpush.bf16.msra.mxu0 %v3289
  %3357 = vmatpush.bf16.msra.mxu0 %v3287
  %3358 = vmatmul.bf16.gmra.mxu0 %v2500
  %v3359 = vpop.f32.mrf.mxu0
  %v3360 = vadd.f32 0.0, %v3359
  %v3361 = vpop.f32.mrf.mxu0
  %v3362 = vadd.f32 0.0, %v3361
  %3363 = vmatmul.bf16.gmra.mxu0 %v2502
  %v3364 = vpop.f32.mrf.mxu0
  %v3365 = vadd.f32 0.0, %v3364
  %v3366 = vpop.f32.mrf.mxu0
  %v3367 = vadd.f32 0.0, %v3366
  %3368 = vmatmul.bf16.gmra.mxu0 %v2504
  %v3369 = vpop.f32.mrf.mxu0
  %v3370 = vadd.f32 0.0, %v3369
  %v3371 = vpop.f32.mrf.mxu0
  %v3372 = vadd.f32 0.0, %v3371
  %3373 = vmatmul.bf16.gmra.mxu0 %v3164
  %v3374 = vpop.f32.mrf.mxu0
  %v3375 = vadd.f32 0.0, %v3374
  %v3376 = vpop.f32.mrf.mxu0
  %v3377 = vadd.f32 0.0, %v3376
  %3378 = vdwg.mxu0
  %3379 = vmatpush.bf16.msra.mxu0 0
  %3380 = vmatpush.bf16.msra.mxu0 %v3315
  %3381 = vmatpush.bf16.msra.mxu0 %v3313
  %3382 = vmatpush.bf16.msra.mxu0 %v3311
  %3383 = vmatpush.bf16.msra.mxu0 %v3309
  %3384 = vmatpush.bf16.msra.mxu0 %v3307
  %3385 = vmatpush.bf16.msra.mxu0 %v3305
  %3386 = vmatpush.bf16.msra.mxu0 %v3303
  %3387 = vmatmul.bf16.gmra.mxu0 %v2691
  %v3388 = vpop.f32.mrf.mxu0
  %v3389 = vadd.f32 %v3360, %v3388
  %v3390 = vpop.f32.mrf.mxu0
  %v3391 = vadd.f32 %v3362, %v3390
  %3392 = vmatmul.bf16.gmra.mxu0 %v2694
  %v3393 = vpop.f32.mrf.mxu0
  %v3394 = vadd.f32 %v3365, %v3393
  %v3395 = vpop.f32.mrf.mxu0
  %v3396 = vadd.f32 %v3367, %v3395
  %3397 = vmatmul.bf16.gmra.mxu0 %v2697
  %v3398 = vpop.f32.mrf.mxu0
  %v3399 = vadd.f32 %v3370, %v3398
  %v3400 = vpop.f32.mrf.mxu0
  %v3401 = vadd.f32 %v3372, %v3400
  %3402 = vmatmul.bf16.gmra.mxu0 %v3348
  %v3403 = vpop.f32.mrf.mxu0
  %v3404 = vadd.f32 %v3375, %v3403
  %v3405 = vpop.f32.mrf.mxu0
  %v3406 = vadd.f32 %v3377, %v3405
  %3407 = vdwg.mxu0
  %3408 = vmatpush.bf16.msra.mxu0 %v3302
  %3409 = vmatpush.bf16.msra.mxu0 %v3300
  %3410 = vmatpush.bf16.msra.mxu0 %v3298
  %3411 = vmatpush.bf16.msra.mxu0 %v3296
  %3412 = vmatpush.bf16.msra.mxu0 %v3294
  %3413 = vmatpush.bf16.msra.mxu0 %v3292
  %3414 = vmatpush.bf16.msra.mxu0 %v3290
  %3415 = vmatpush.bf16.msra.mxu0 %v3288
  %3416 = vmatmul.bf16.gmra.mxu0 %v2500
  %v3417 = vpop.f32.mrf.mxu0
  %v3418 = vadd.f32 0.0, %v3417
  %v3419 = vpop.f32.mrf.mxu0
  %v3420 = vadd.f32 0.0, %v3419
  %3421 = vmatmul.bf16.gmra.mxu0 %v2502
  %v3422 = vpop.f32.mrf.mxu0
  %v3423 = vadd.f32 0.0, %v3422
  %v3424 = vpop.f32.mrf.mxu0
  %v3425 = vadd.f32 0.0, %v3424
  %3426 = vmatmul.bf16.gmra.mxu0 %v2504
  %v3427 = vpop.f32.mrf.mxu0
  %v3428 = vadd.f32 0.0, %v3427
  %v3429 = vpop.f32.mrf.mxu0
  %v3430 = vadd.f32 0.0, %v3429
  %3431 = vmatmul.bf16.gmra.mxu0 %v3164
  %v3432 = vpop.f32.mrf.mxu0
  %v3433 = vadd.f32 0.0, %v3432
  %v3434 = vpop.f32.mrf.mxu0
  %v3435 = vadd.f32 0.0, %v3434
  %3436 = vdwg.mxu0
  %3437 = vmatpush.bf16.msra.mxu0 0
  %3438 = vmatpush.bf16.msra.mxu0 %v3316
  %3439 = vmatpush.bf16.msra.mxu0 %v3314
  %3440 = vmatpush.bf16.msra.mxu0 %v3312
  %3441 = vmatpush.bf16.msra.mxu0 %v3310
  %3442 = vmatpush.bf16.msra.mxu0 %v3308
  %3443 = vmatpush.bf16.msra.mxu0 %v3306
  %3444 = vmatpush.bf16.msra.mxu0 %v3304
  %3445 = vmatmul.bf16.gmra.mxu0 %v2691
  %v3446 = vpop.f32.mrf.mxu0
  %v3447 = vadd.f32 %v3418, %v3446
  %v3448 = vpop.f32.mrf.mxu0
  %v3449 = vadd.f32 %v3420, %v3448
  %3450 = vmatmul.bf16.gmra.mxu0 %v2694
  %v3451 = vpop.f32.mrf.mxu0
  %v3452 = vadd.f32 %v3423, %v3451
  %v3453 = vpop.f32.mrf.mxu0
  %v3454 = vadd.f32 %v3425, %v3453
  %3455 = vmatmul.bf16.gmra.mxu0 %v2697
  %v3456 = vpop.f32.mrf.mxu0
  %v3457 = vadd.f32 %v3428, %v3456
  %v3458 = vpop.f32.mrf.mxu0
  %v3459 = vadd.f32 %v3430, %v3458
  %3460 = vmatmul.bf16.gmra.mxu0 %v3348
  %v3461 = vpop.f32.mrf.mxu0
  %v3462 = vadd.f32 %v3433, %v3461
  %v3463 = vpop.f32.mrf.mxu0
  %v3464 = vadd.f32 %v3435, %v3463
  %3465 = vdwg.mxu0
  %v3466 = vadd.f32 %v3148, %v3389
  %v3467 = vadd.f32 %v3149, %v3447
  %v3468 = vadd.f32 %v3150, %v3391
  %v3469 = vadd.f32 %v3151, %v3449
  %v3470 = vadd.f32 %v3152, %v3394
  %v3471 = vadd.f32 %v3153, %v3452
  %v3472 = vadd.f32 %v3154, %v3396
  %v3473 = vadd.f32 %v3155, %v3454
  %v3474 = vadd.f32 %v3156, %v3399
  %v3475 = vadd.f32 %v3157, %v3457
  %v3476 = vadd.f32 %v3158, %v3401
  %v3477 = vadd.f32 %v3159, %v3459
  %v3478 = vadd.f32 %v3160, %v3404
  %v3479 = vadd.f32 %v3161, %v3462
  %v3480 = vadd.f32 %v3162, %v3406
  %v3481 = vadd.f32 %v3163, %v3464
  %v3482 = vpack.c.bf16 %v2486, %v2484
  %v3483 = vpack.c.bf16 %v2487, %v2485
  %s3484 = scalar_lea.vmem %s3, 720
  %v3485 = vld [vmem:[%s3484] sm:$0xff]
  %v3486 = vld [vmem:[%s3484 + $0x8] sm:$0xff]
  %v3487 = vld [vmem:[%s3484 + $0x10] sm:$0xff]
  %v3488 = vld [vmem:[%s3484 + $0x18] sm:$0xff]
  %v3489 = vld [vmem:[%s3484 + $0x20] sm:$0xff]
  %v3490 = vld [vmem:[%s3484 + $0x28] sm:$0xff]
  %v3491 = vld [vmem:[%s3484 + $0x30] sm:$0xff]
  %v3492 = vld [vmem:[%s3484 + $0x38] sm:$0xff]
  %v3493 = vld [vmem:[%s3484 + $0x40] sm:$0xff]
  %v3494 = vld [vmem:[%s3484 + $0x48] sm:$0xff]
  %v3495 = vld [vmem:[%s3484 + $0x50] sm:$0xff]
  %v3496 = vld [vmem:[%s3484 + $0x58] sm:$0xff]
  %v3497 = vld [vmem:[%s3484 + $0x60] sm:$0xff]
  %v3498 = vld [vmem:[%s3484 + $0x68] sm:$0xff]
  %v3499 = vld [vmem:[%s3484 + $0x70] sm:$0xff]
  %v3500 = vld [vmem:[%s3484 + $0x78] sm:$0xff]
  %v3501 = vld [vmem:[%s3484 + $0x80] sm:$0xff]
  %v3502 = vld [vmem:[%s3484 + $0x88] sm:$0xff]
  %v3503 = vld [vmem:[%s3484 + $0x90] sm:$0xff]
  %v3504 = vld [vmem:[%s3484 + $0x98] sm:$0xff]
  %v3505 = vld [vmem:[%s3484 + $0xa0] sm:$0xff]
  %v3506 = vld [vmem:[%s3484 + $0xa8] sm:$0xff]
  %v3507 = vld [vmem:[%s3484 + $0xb0] sm:$0xff]
  %v3508 = vld [vmem:[%s3484 + $0xb8] sm:$0xff]
  %v3509 = vld [vmem:[%s3484 + $0xc0] sm:$0xff]
  %v3510 = vld [vmem:[%s3484 + $0xc8] sm:$0xff]
  %v3511 = vld [vmem:[%s3484 + $0xd0] sm:$0xff]
  %v3512 = vld [vmem:[%s3484 + $0xd8] sm:$0xff]
  %v3513 = vld [vmem:[%s3484 + $0xe0] sm:$0xff]
  %v3514 = vld [vmem:[%s3484 + $0xe8] sm:$0xff]
  %v3545 = vunpack.c.l.b16 %v3485
  %v3546 = vunpack.c.h.b16 %v3485
  %v3547 = vunpack.c.l.b16 %v3486
  %v3548 = vunpack.c.h.b16 %v3486
  %v3549 = vunpack.c.l.b16 %v3487
  %v3550 = vunpack.c.h.b16 %v3487
  %v3551 = vunpack.c.l.b16 %v3488
  %v3552 = vunpack.c.h.b16 %v3488
  %v3553 = vunpack.c.l.b16 %v3489
  %v3554 = vunpack.c.h.b16 %v3489
  %v3555 = vunpack.c.l.b16 %v3490
  %v3556 = vunpack.c.h.b16 %v3490
  %v3557 = vunpack.c.l.b16 %v3491
  %v3558 = vunpack.c.h.b16 %v3491
  %v3559 = vunpack.c.l.b16 %v3492
  %v3560 = vunpack.c.h.b16 %v3492
  %v3561 = vunpack.c.l.b16 %v3493
  %v3562 = vunpack.c.h.b16 %v3493
  %v3563 = vunpack.c.l.b16 %v3494
  %v3564 = vunpack.c.h.b16 %v3494
  %v3565 = vunpack.c.l.b16 %v3495
  %v3566 = vunpack.c.h.b16 %v3495
  %v3567 = vunpack.c.l.b16 %v3496
  %v3568 = vunpack.c.h.b16 %v3496
  %v3569 = vunpack.c.l.b16 %v3497
  %v3570 = vunpack.c.h.b16 %v3497
  %v3571 = vunpack.c.l.b16 %v3498
  %v3572 = vunpack.c.h.b16 %v3498
  %v3573 = vunpack.c.l.b16 %v3499
  %v3574 = vunpack.c.h.b16 %v3499
  %v3575 = vunpack.c.l.b16 %v3500
  %v3576 = vunpack.c.h.b16 %v3500
  %v3577 = vunpack.c.l.b16 %v3501
  %v3578 = vunpack.c.h.b16 %v3501
  %v3579 = vunpack.c.l.b16 %v3502
  %v3580 = vunpack.c.h.b16 %v3502
  %v3581 = vunpack.c.l.b16 %v3503
  %v3582 = vunpack.c.h.b16 %v3503
  %v3583 = vunpack.c.l.b16 %v3504
  %v3584 = vunpack.c.h.b16 %v3504
  %v3585 = vunpack.c.l.b16 %v3505
  %v3586 = vunpack.c.h.b16 %v3505
  %v3587 = vunpack.c.l.b16 %v3506
  %v3588 = vunpack.c.h.b16 %v3506
  %v3589 = vunpack.c.l.b16 %v3507
  %v3590 = vunpack.c.h.b16 %v3507
  %v3591 = vunpack.c.l.b16 %v3508
  %v3592 = vunpack.c.h.b16 %v3508
  %v3593 = vunpack.c.l.b16 %v3509
  %v3594 = vunpack.c.h.b16 %v3509
  %v3595 = vunpack.c.l.b16 %v3510
  %v3596 = vunpack.c.h.b16 %v3510
  %v3597 = vunpack.c.l.b16 %v3511
  %v3598 = vunpack.c.h.b16 %v3511
  %v3599 = vunpack.c.l.b16 %v3512
  %v3600 = vunpack.c.h.b16 %v3512
  %v3601 = vunpack.c.l.b16 %v3513
  %v3602 = vunpack.c.h.b16 %v3513
  %v3603 = vunpack.c.l.b16 %v3514
  %v3604 = vunpack.c.h.b16 %v3514
  %v3605 = vpack.c.b16 %v3547, %v3545
  %v3606 = vpack.c.b16 %v3548, %v3546
  %v3607 = vpack.c.b16 %v3551, %v3549
  %v3608 = vpack.c.b16 %v3552, %v3550
  %v3609 = vpack.c.b16 %v3555, %v3553
  %v3610 = vpack.c.b16 %v3556, %v3554
  %v3611 = vpack.c.b16 %v3559, %v3557
  %v3612 = vpack.c.b16 %v3560, %v3558
  %v3613 = vpack.c.b16 %v3563, %v3561
  %v3614 = vpack.c.b16 %v3564, %v3562
  %v3615 = vpack.c.b16 %v3567, %v3565
  %v3616 = vpack.c.b16 %v3568, %v3566
  %v3617 = vpack.c.b16 %v3571, %v3569
  %v3618 = vpack.c.b16 %v3572, %v3570
  %v3619 = vpack.c.b16 %v3575, %v3573
  %v3620 = vpack.c.b16 %v3576, %v3574
  %v3621 = vpack.c.b16 %v3579, %v3577
  %v3622 = vpack.c.b16 %v3580, %v3578
  %v3623 = vpack.c.b16 %v3583, %v3581
  %v3624 = vpack.c.b16 %v3584, %v3582
  %v3625 = vpack.c.b16 %v3587, %v3585
  %v3626 = vpack.c.b16 %v3588, %v3586
  %v3627 = vpack.c.b16 %v3591, %v3589
  %v3628 = vpack.c.b16 %v3592, %v3590
  %v3629 = vpack.c.b16 %v3595, %v3593
  %v3630 = vpack.c.b16 %v3596, %v3594
  %v3631 = vpack.c.b16 %v3599, %v3597
  %v3632 = vpack.c.b16 %v3600, %v3598
  %v3633 = vpack.c.b16 %v3603, %v3601
  %v3634 = vpack.c.b16 %v3604, %v3602
  %v3666 = vsel %vm2686, %v3483, 0
  %3668 = vmatpush.bf16.msra.mxu0 %v3619
  %3669 = vmatpush.bf16.msra.mxu0 %v3617
  %3670 = vmatpush.bf16.msra.mxu0 %v3615
  %3671 = vmatpush.bf16.msra.mxu0 %v3613
  %3672 = vmatpush.bf16.msra.mxu0 %v3611
  %3673 = vmatpush.bf16.msra.mxu0 %v3609
  %3674 = vmatpush.bf16.msra.mxu0 %v3607
  %3675 = vmatpush.bf16.msra.mxu0 %v3605
  %3676 = vmatmul.bf16.gmra.mxu0 %v2833
  %v3677 = vpop.f32.mrf.mxu0
  %v3678 = vadd.f32 0.0, %v3677
  %v3679 = vpop.f32.mrf.mxu0
  %v3680 = vadd.f32 0.0, %v3679
  %3681 = vmatmul.bf16.gmra.mxu0 %v2835
  %v3682 = vpop.f32.mrf.mxu0
  %v3683 = vadd.f32 0.0, %v3682
  %v3684 = vpop.f32.mrf.mxu0
  %v3685 = vadd.f32 0.0, %v3684
  %3686 = vmatmul.bf16.gmra.mxu0 %v2837
  %v3687 = vpop.f32.mrf.mxu0
  %v3688 = vadd.f32 0.0, %v3687
  %v3689 = vpop.f32.mrf.mxu0
  %v3690 = vadd.f32 0.0, %v3689
  %3691 = vmatmul.bf16.gmra.mxu0 %v3482
  %v3692 = vpop.f32.mrf.mxu0
  %v3693 = vadd.f32 0.0, %v3692
  %v3694 = vpop.f32.mrf.mxu0
  %v3695 = vadd.f32 0.0, %v3694
  %3696 = vdwg.mxu0
  %3697 = vmatpush.bf16.msra.mxu0 0
  %3698 = vmatpush.bf16.msra.mxu0 %v3633
  %3699 = vmatpush.bf16.msra.mxu0 %v3631
  %3700 = vmatpush.bf16.msra.mxu0 %v3629
  %3701 = vmatpush.bf16.msra.mxu0 %v3627
  %3702 = vmatpush.bf16.msra.mxu0 %v3625
  %3703 = vmatpush.bf16.msra.mxu0 %v3623
  %3704 = vmatpush.bf16.msra.mxu0 %v3621
  %3705 = vmatmul.bf16.gmra.mxu0 %v3024
  %v3706 = vpop.f32.mrf.mxu0
  %v3707 = vadd.f32 %v3678, %v3706
  %v3708 = vpop.f32.mrf.mxu0
  %v3709 = vadd.f32 %v3680, %v3708
  %3710 = vmatmul.bf16.gmra.mxu0 %v3027
  %v3711 = vpop.f32.mrf.mxu0
  %v3712 = vadd.f32 %v3683, %v3711
  %v3713 = vpop.f32.mrf.mxu0
  %v3714 = vadd.f32 %v3685, %v3713
  %3715 = vmatmul.bf16.gmra.mxu0 %v3030
  %v3716 = vpop.f32.mrf.mxu0
  %v3717 = vadd.f32 %v3688, %v3716
  %v3718 = vpop.f32.mrf.mxu0
  %v3719 = vadd.f32 %v3690, %v3718
  %3720 = vmatmul.bf16.gmra.mxu0 %v3666
  %v3721 = vpop.f32.mrf.mxu0
  %v3722 = vadd.f32 %v3693, %v3721
  %v3723 = vpop.f32.mrf.mxu0
  %v3724 = vadd.f32 %v3695, %v3723
  %3725 = vdwg.mxu0
  %3726 = vmatpush.bf16.msra.mxu0 %v3620
  %3727 = vmatpush.bf16.msra.mxu0 %v3618
  %3728 = vmatpush.bf16.msra.mxu0 %v3616
  %3729 = vmatpush.bf16.msra.mxu0 %v3614
  %3730 = vmatpush.bf16.msra.mxu0 %v3612
  %3731 = vmatpush.bf16.msra.mxu0 %v3610
  %3732 = vmatpush.bf16.msra.mxu0 %v3608
  %3733 = vmatpush.bf16.msra.mxu0 %v3606
  %3734 = vmatmul.bf16.gmra.mxu0 %v2833
  %v3735 = vpop.f32.mrf.mxu0
  %v3736 = vadd.f32 0.0, %v3735
  %v3737 = vpop.f32.mrf.mxu0
  %v3738 = vadd.f32 0.0, %v3737
  %3739 = vmatmul.bf16.gmra.mxu0 %v2835
  %v3740 = vpop.f32.mrf.mxu0
  %v3741 = vadd.f32 0.0, %v3740
  %v3742 = vpop.f32.mrf.mxu0
  %v3743 = vadd.f32 0.0, %v3742
  %3744 = vmatmul.bf16.gmra.mxu0 %v2837
  %v3745 = vpop.f32.mrf.mxu0
  %v3746 = vadd.f32 0.0, %v3745
  %v3747 = vpop.f32.mrf.mxu0
  %v3748 = vadd.f32 0.0, %v3747
  %3749 = vmatmul.bf16.gmra.mxu0 %v3482
  %v3750 = vpop.f32.mrf.mxu0
  %v3751 = vadd.f32 0.0, %v3750
  %v3752 = vpop.f32.mrf.mxu0
  %v3753 = vadd.f32 0.0, %v3752
  %3754 = vdwg.mxu0
  %3755 = vmatpush.bf16.msra.mxu0 0
  %3756 = vmatpush.bf16.msra.mxu0 %v3634
  %3757 = vmatpush.bf16.msra.mxu0 %v3632
  %3758 = vmatpush.bf16.msra.mxu0 %v3630
  %3759 = vmatpush.bf16.msra.mxu0 %v3628
  %3760 = vmatpush.bf16.msra.mxu0 %v3626
  %3761 = vmatpush.bf16.msra.mxu0 %v3624
  %3762 = vmatpush.bf16.msra.mxu0 %v3622
  %3763 = vmatmul.bf16.gmra.mxu0 %v3024
  %v3764 = vpop.f32.mrf.mxu0
  %v3765 = vadd.f32 %v3736, %v3764
  %v3766 = vpop.f32.mrf.mxu0
  %v3767 = vadd.f32 %v3738, %v3766
  %3768 = vmatmul.bf16.gmra.mxu0 %v3027
  %v3769 = vpop.f32.mrf.mxu0
  %v3770 = vadd.f32 %v3741, %v3769
  %v3771 = vpop.f32.mrf.mxu0
  %v3772 = vadd.f32 %v3743, %v3771
  %3773 = vmatmul.bf16.gmra.mxu0 %v3030
  %v3774 = vpop.f32.mrf.mxu0
  %v3775 = vadd.f32 %v3746, %v3774
  %v3776 = vpop.f32.mrf.mxu0
  %v3777 = vadd.f32 %v3748, %v3776
  %3778 = vmatmul.bf16.gmra.mxu0 %v3666
  %v3779 = vpop.f32.mrf.mxu0
  %v3780 = vadd.f32 %v3751, %v3779
  %v3781 = vpop.f32.mrf.mxu0
  %v3782 = vadd.f32 %v3753, %v3781
  %3783 = vdwg.mxu0
  %v3784 = vadd.f32 %v3466, %v3707
  %v3785 = vadd.f32 %v3467, %v3765
  %v3786 = vadd.f32 %v3468, %v3709
  %v3787 = vadd.f32 %v3469, %v3767
  %v3788 = vadd.f32 %v3470, %v3712
  %v3789 = vadd.f32 %v3471, %v3770
  %v3790 = vadd.f32 %v3472, %v3714
  %v3791 = vadd.f32 %v3473, %v3772
  %v3792 = vadd.f32 %v3474, %v3717
  %v3793 = vadd.f32 %v3475, %v3775
  %v3794 = vadd.f32 %v3476, %v3719
  %v3795 = vadd.f32 %v3477, %v3777
  %v3796 = vadd.f32 %v3478, %v3722
  %v3797 = vadd.f32 %v3479, %v3780
  %v3798 = vadd.f32 %v3480, %v3724
  %v3799 = vadd.f32 %v3481, %v3782
  %v3800 = vpack.c.bf16 %v2488, %v2486
  %v3801 = vpack.c.bf16 %v2489, %v2487
  %s3802 = scalar_lea.vmem %s3, 960
  %v3803 = vld [vmem:[%s3802] sm:$0xff]
  %v3804 = vld [vmem:[%s3802 + $0x8] sm:$0xff]
  %v3805 = vld [vmem:[%s3802 + $0x10] sm:$0xff]
  %v3806 = vld [vmem:[%s3802 + $0x18] sm:$0xff]
  %v3807 = vld [vmem:[%s3802 + $0x20] sm:$0xff]
  %v3808 = vld [vmem:[%s3802 + $0x28] sm:$0xff]
  %v3809 = vld [vmem:[%s3802 + $0x30] sm:$0xff]
  %v3810 = vld [vmem:[%s3802 + $0x38] sm:$0xff]
  %v3811 = vld [vmem:[%s3802 + $0x40] sm:$0xff]
  %v3812 = vld [vmem:[%s3802 + $0x48] sm:$0xff]
  %v3813 = vld [vmem:[%s3802 + $0x50] sm:$0xff]
  %v3814 = vld [vmem:[%s3802 + $0x58] sm:$0xff]
  %v3815 = vld [vmem:[%s3802 + $0x60] sm:$0xff]
  %v3816 = vld [vmem:[%s3802 + $0x68] sm:$0xff]
  %v3817 = vld [vmem:[%s3802 + $0x70] sm:$0xff]
  %v3818 = vld [vmem:[%s3802 + $0x78] sm:$0xff]
  %v3819 = vld [vmem:[%s3802 + $0x80] sm:$0xff]
  %v3820 = vld [vmem:[%s3802 + $0x88] sm:$0xff]
  %v3821 = vld [vmem:[%s3802 + $0x90] sm:$0xff]
  %v3822 = vld [vmem:[%s3802 + $0x98] sm:$0xff]
  %v3823 = vld [vmem:[%s3802 + $0xa0] sm:$0xff]
  %v3824 = vld [vmem:[%s3802 + $0xa8] sm:$0xff]
  %v3825 = vld [vmem:[%s3802 + $0xb0] sm:$0xff]
  %v3826 = vld [vmem:[%s3802 + $0xb8] sm:$0xff]
  %v3827 = vld [vmem:[%s3802 + $0xc0] sm:$0xff]
  %v3828 = vld [vmem:[%s3802 + $0xc8] sm:$0xff]
  %v3829 = vld [vmem:[%s3802 + $0xd0] sm:$0xff]
  %v3830 = vld [vmem:[%s3802 + $0xd8] sm:$0xff]
  %v3831 = vld [vmem:[%s3802 + $0xe0] sm:$0xff]
  %v3832 = vld [vmem:[%s3802 + $0xe8] sm:$0xff]
  %v3863 = vunpack.c.l.b16 %v3803
  %v3864 = vunpack.c.h.b16 %v3803
  %v3865 = vunpack.c.l.b16 %v3804
  %v3866 = vunpack.c.h.b16 %v3804
  %v3867 = vunpack.c.l.b16 %v3805
  %v3868 = vunpack.c.h.b16 %v3805
  %v3869 = vunpack.c.l.b16 %v3806
  %v3870 = vunpack.c.h.b16 %v3806
  %v3871 = vunpack.c.l.b16 %v3807
  %v3872 = vunpack.c.h.b16 %v3807
  %v3873 = vunpack.c.l.b16 %v3808
  %v3874 = vunpack.c.h.b16 %v3808
  %v3875 = vunpack.c.l.b16 %v3809
  %v3876 = vunpack.c.h.b16 %v3809
  %v3877 = vunpack.c.l.b16 %v3810
  %v3878 = vunpack.c.h.b16 %v3810
  %v3879 = vunpack.c.l.b16 %v3811
  %v3880 = vunpack.c.h.b16 %v3811
  %v3881 = vunpack.c.l.b16 %v3812
  %v3882 = vunpack.c.h.b16 %v3812
  %v3883 = vunpack.c.l.b16 %v3813
  %v3884 = vunpack.c.h.b16 %v3813
  %v3885 = vunpack.c.l.b16 %v3814
  %v3886 = vunpack.c.h.b16 %v3814
  %v3887 = vunpack.c.l.b16 %v3815
  %v3888 = vunpack.c.h.b16 %v3815
  %v3889 = vunpack.c.l.b16 %v3816
  %v3890 = vunpack.c.h.b16 %v3816
  %v3891 = vunpack.c.l.b16 %v3817
  %v3892 = vunpack.c.h.b16 %v3817
  %v3893 = vunpack.c.l.b16 %v3818
  %v3894 = vunpack.c.h.b16 %v3818
  %v3895 = vunpack.c.l.b16 %v3819
  %v3896 = vunpack.c.h.b16 %v3819
  %v3897 = vunpack.c.l.b16 %v3820
  %v3898 = vunpack.c.h.b16 %v3820
  %v3899 = vunpack.c.l.b16 %v3821
  %v3900 = vunpack.c.h.b16 %v3821
  %v3901 = vunpack.c.l.b16 %v3822
  %v3902 = vunpack.c.h.b16 %v3822
  %v3903 = vunpack.c.l.b16 %v3823
  %v3904 = vunpack.c.h.b16 %v3823
  %v3905 = vunpack.c.l.b16 %v3824
  %v3906 = vunpack.c.h.b16 %v3824
  %v3907 = vunpack.c.l.b16 %v3825
  %v3908 = vunpack.c.h.b16 %v3825
  %v3909 = vunpack.c.l.b16 %v3826
  %v3910 = vunpack.c.h.b16 %v3826
  %v3911 = vunpack.c.l.b16 %v3827
  %v3912 = vunpack.c.h.b16 %v3827
  %v3913 = vunpack.c.l.b16 %v3828
  %v3914 = vunpack.c.h.b16 %v3828
  %v3915 = vunpack.c.l.b16 %v3829
  %v3916 = vunpack.c.h.b16 %v3829
  %v3917 = vunpack.c.l.b16 %v3830
  %v3918 = vunpack.c.h.b16 %v3830
  %v3919 = vunpack.c.l.b16 %v3831
  %v3920 = vunpack.c.h.b16 %v3831
  %v3921 = vunpack.c.l.b16 %v3832
  %v3922 = vunpack.c.h.b16 %v3832
  %v3923 = vpack.c.b16 %v3865, %v3863
  %v3924 = vpack.c.b16 %v3866, %v3864
  %v3925 = vpack.c.b16 %v3869, %v3867
  %v3926 = vpack.c.b16 %v3870, %v3868
  %v3927 = vpack.c.b16 %v3873, %v3871
  %v3928 = vpack.c.b16 %v3874, %v3872
  %v3929 = vpack.c.b16 %v3877, %v3875
  %v3930 = vpack.c.b16 %v3878, %v3876
  %v3931 = vpack.c.b16 %v3881, %v3879
  %v3932 = vpack.c.b16 %v3882, %v3880
  %v3933 = vpack.c.b16 %v3885, %v3883
  %v3934 = vpack.c.b16 %v3886, %v3884
  %v3935 = vpack.c.b16 %v3889, %v3887
  %v3936 = vpack.c.b16 %v3890, %v3888
  %v3937 = vpack.c.b16 %v3893, %v3891
  %v3938 = vpack.c.b16 %v3894, %v3892
  %v3939 = vpack.c.b16 %v3897, %v3895
  %v3940 = vpack.c.b16 %v3898, %v3896
  %v3941 = vpack.c.b16 %v3901, %v3899
  %v3942 = vpack.c.b16 %v3902, %v3900
  %v3943 = vpack.c.b16 %v3905, %v3903
  %v3944 = vpack.c.b16 %v3906, %v3904
  %v3945 = vpack.c.b16 %v3909, %v3907
  %v3946 = vpack.c.b16 %v3910, %v3908
  %v3947 = vpack.c.b16 %v3913, %v3911
  %v3948 = vpack.c.b16 %v3914, %v3912
  %v3949 = vpack.c.b16 %v3917, %v3915
  %v3950 = vpack.c.b16 %v3918, %v3916
  %v3951 = vpack.c.b16 %v3921, %v3919
  %v3952 = vpack.c.b16 %v3922, %v3920
  %v3984 = vsel %vm2686, %v3801, 0
  %3986 = vmatpush.bf16.msra.mxu0 %v3937
  %3987 = vmatpush.bf16.msra.mxu0 %v3935
  %3988 = vmatpush.bf16.msra.mxu0 %v3933
  %3989 = vmatpush.bf16.msra.mxu0 %v3931
  %3990 = vmatpush.bf16.msra.mxu0 %v3929
  %3991 = vmatpush.bf16.msra.mxu0 %v3927
  %3992 = vmatpush.bf16.msra.mxu0 %v3925
  %3993 = vmatpush.bf16.msra.mxu0 %v3923
  %3994 = vmatmul.bf16.gmra.mxu0 %v2502
  %v3995 = vpop.f32.mrf.mxu0
  %v3996 = vadd.f32 0.0, %v3995
  %v3997 = vpop.f32.mrf.mxu0
  %v3998 = vadd.f32 0.0, %v3997
  %3999 = vmatmul.bf16.gmra.mxu0 %v2504
  %v4000 = vpop.f32.mrf.mxu0
  %v4001 = vadd.f32 0.0, %v4000
  %v4002 = vpop.f32.mrf.mxu0
  %v4003 = vadd.f32 0.0, %v4002
  %4004 = vmatmul.bf16.gmra.mxu0 %v3164
  %v4005 = vpop.f32.mrf.mxu0
  %v4006 = vadd.f32 0.0, %v4005
  %v4007 = vpop.f32.mrf.mxu0
  %v4008 = vadd.f32 0.0, %v4007
  %4009 = vmatmul.bf16.gmra.mxu0 %v3800
  %v4010 = vpop.f32.mrf.mxu0
  %v4011 = vadd.f32 0.0, %v4010
  %v4012 = vpop.f32.mrf.mxu0
  %v4013 = vadd.f32 0.0, %v4012
  %4014 = vdwg.mxu0
  %4015 = vmatpush.bf16.msra.mxu0 0
  %4016 = vmatpush.bf16.msra.mxu0 %v3951
  %4017 = vmatpush.bf16.msra.mxu0 %v3949
  %4018 = vmatpush.bf16.msra.mxu0 %v3947
  %4019 = vmatpush.bf16.msra.mxu0 %v3945
  %4020 = vmatpush.bf16.msra.mxu0 %v3943
  %4021 = vmatpush.bf16.msra.mxu0 %v3941
  %4022 = vmatpush.bf16.msra.mxu0 %v3939
  %4023 = vmatmul.bf16.gmra.mxu0 %v2694
  %v4024 = vpop.f32.mrf.mxu0
  %v4025 = vadd.f32 %v3996, %v4024
  %v4026 = vpop.f32.mrf.mxu0
  %v4027 = vadd.f32 %v3998, %v4026
  %4028 = vmatmul.bf16.gmra.mxu0 %v2697
  %v4029 = vpop.f32.mrf.mxu0
  %v4030 = vadd.f32 %v4001, %v4029
  %v4031 = vpop.f32.mrf.mxu0
  %v4032 = vadd.f32 %v4003, %v4031
  %4033 = vmatmul.bf16.gmra.mxu0 %v3348
  %v4034 = vpop.f32.mrf.mxu0
  %v4035 = vadd.f32 %v4006, %v4034
  %v4036 = vpop.f32.mrf.mxu0
  %v4037 = vadd.f32 %v4008, %v4036
  %4038 = vmatmul.bf16.gmra.mxu0 %v3984
  %v4039 = vpop.f32.mrf.mxu0
  %v4040 = vadd.f32 %v4011, %v4039
  %v4041 = vpop.f32.mrf.mxu0
  %v4042 = vadd.f32 %v4013, %v4041
  %4043 = vdwg.mxu0
  %4044 = vmatpush.bf16.msra.mxu0 %v3938
  %4045 = vmatpush.bf16.msra.mxu0 %v3936
  %4046 = vmatpush.bf16.msra.mxu0 %v3934
  %4047 = vmatpush.bf16.msra.mxu0 %v3932
  %4048 = vmatpush.bf16.msra.mxu0 %v3930
  %4049 = vmatpush.bf16.msra.mxu0 %v3928
  %4050 = vmatpush.bf16.msra.mxu0 %v3926
  %4051 = vmatpush.bf16.msra.mxu0 %v3924
  %4052 = vmatmul.bf16.gmra.mxu0 %v2502
  %v4053 = vpop.f32.mrf.mxu0
  %v4054 = vadd.f32 0.0, %v4053
  %v4055 = vpop.f32.mrf.mxu0
  %v4056 = vadd.f32 0.0, %v4055
  %4057 = vmatmul.bf16.gmra.mxu0 %v2504
  %v4058 = vpop.f32.mrf.mxu0
  %v4059 = vadd.f32 0.0, %v4058
  %v4060 = vpop.f32.mrf.mxu0
  %v4061 = vadd.f32 0.0, %v4060
  %4062 = vmatmul.bf16.gmra.mxu0 %v3164
  %v4063 = vpop.f32.mrf.mxu0
  %v4064 = vadd.f32 0.0, %v4063
  %v4065 = vpop.f32.mrf.mxu0
  %v4066 = vadd.f32 0.0, %v4065
  %4067 = vmatmul.bf16.gmra.mxu0 %v3800
  %v4068 = vpop.f32.mrf.mxu0
  %v4069 = vadd.f32 0.0, %v4068
  %v4070 = vpop.f32.mrf.mxu0
  %v4071 = vadd.f32 0.0, %v4070
  %4072 = vdwg.mxu0
  %4073 = vmatpush.bf16.msra.mxu0 0
  %4074 = vmatpush.bf16.msra.mxu0 %v3952
  %4075 = vmatpush.bf16.msra.mxu0 %v3950
  %4076 = vmatpush.bf16.msra.mxu0 %v3948
  %4077 = vmatpush.bf16.msra.mxu0 %v3946
  %4078 = vmatpush.bf16.msra.mxu0 %v3944
  %4079 = vmatpush.bf16.msra.mxu0 %v3942
  %4080 = vmatpush.bf16.msra.mxu0 %v3940
  %4081 = vmatmul.bf16.gmra.mxu0 %v2694
  %v4082 = vpop.f32.mrf.mxu0
  %v4083 = vadd.f32 %v4054, %v4082
  %v4084 = vpop.f32.mrf.mxu0
  %v4085 = vadd.f32 %v4056, %v4084
  %4086 = vmatmul.bf16.gmra.mxu0 %v2697
  %v4087 = vpop.f32.mrf.mxu0
  %v4088 = vadd.f32 %v4059, %v4087
  %v4089 = vpop.f32.mrf.mxu0
  %v4090 = vadd.f32 %v4061, %v4089
  %4091 = vmatmul.bf16.gmra.mxu0 %v3348
  %v4092 = vpop.f32.mrf.mxu0
  %v4093 = vadd.f32 %v4064, %v4092
  %v4094 = vpop.f32.mrf.mxu0
  %v4095 = vadd.f32 %v4066, %v4094
  %4096 = vmatmul.bf16.gmra.mxu0 %v3984
  %v4097 = vpop.f32.mrf.mxu0
  %v4098 = vadd.f32 %v4069, %v4097
  %v4099 = vpop.f32.mrf.mxu0
  %v4100 = vadd.f32 %v4071, %v4099
  %4101 = vdwg.mxu0
  %v4102 = vadd.f32 %v3784, %v4025
  %v4103 = vadd.f32 %v3785, %v4083
  %v4104 = vadd.f32 %v3786, %v4027
  %v4105 = vadd.f32 %v3787, %v4085
  %v4106 = vadd.f32 %v3788, %v4030
  %v4107 = vadd.f32 %v3789, %v4088
  %v4108 = vadd.f32 %v3790, %v4032
  %v4109 = vadd.f32 %v3791, %v4090
  %v4110 = vadd.f32 %v3792, %v4035
  %v4111 = vadd.f32 %v3793, %v4093
  %v4112 = vadd.f32 %v3794, %v4037
  %v4113 = vadd.f32 %v3795, %v4095
  %v4114 = vadd.f32 %v3796, %v4040
  %v4115 = vadd.f32 %v3797, %v4098
  %v4116 = vadd.f32 %v3798, %v4042
  %v4117 = vadd.f32 %v3799, %v4100
  %v4118 = vmax.f32 %v4102, 0.0
  %v4119 = vmax.f32 %v4103, 0.0
  %v4120 = vmax.f32 %v4104, 0.0
  %v4121 = vmax.f32 %v4105, 0.0
  %v4122 = vmax.f32 %v4106, 0.0
  %v4123 = vmax.f32 %v4107, 0.0
  %v4124 = vmax.f32 %v4108, 0.0
  %v4125 = vmax.f32 %v4109, 0.0
  %v4126 = vmax.f32 %v4110, 0.0
  %v4127 = vmax.f32 %v4111, 0.0
  %v4128 = vmax.f32 %v4112, 0.0
  %v4129 = vmax.f32 %v4113, 0.0
  %v4130 = vmax.f32 %v4114, 0.0
  %v4131 = vmax.f32 %v4115, 0.0
  %v4132 = vmax.f32 %v4116, 0.0
  %v4133 = vmax.f32 %v4117, 0.0
  %s4134 = scalar_lea.vmem %s3, 1200
  %v4135 = vld [vmem:[%s4134] sm:$0xff]
  %v4136 = vld [vmem:[%s4134 + $0x8] sm:$0xff]
  %v4137 = vld [vmem:[%s4134 + $0x10] sm:$0xff]
  %v4138 = vld [vmem:[%s4134 + $0x18] sm:$0xff]
  %v4139 = vld [vmem:[%s4134 + $0x20] sm:$0xff]
  %v4140 = vld [vmem:[%s4134 + $0x28] sm:$0xff]
  %v4141 = vld [vmem:[%s4134 + $0x30] sm:$0xff]
  %v4142 = vld [vmem:[%s4134 + $0x38] sm:$0xff]
  %v4143 = vld [vmem:[%s4134 + $0x40] sm:$0xff]
  %v4144 = vld [vmem:[%s4134 + $0x48] sm:$0xff]
  %v4145 = vld [vmem:[%s4134 + $0x50] sm:$0xff]
  %v4146 = vld [vmem:[%s4134 + $0x58] sm:$0xff]
  %v4147 = vld [vmem:[%s4134 + $0x60] sm:$0xff]
  %v4148 = vld [vmem:[%s4134 + $0x68] sm:$0xff]
  %v4149 = vld [vmem:[%s4134 + $0x70] sm:$0xff]
  %v4150 = vld [vmem:[%s4134 + $0x78] sm:$0xff]
  %v4151 = vld [vmem:[%s4134 + $0x80] sm:$0xff]
  %v4152 = vld [vmem:[%s4134 + $0x88] sm:$0xff]
  %v4153 = vld [vmem:[%s4134 + $0x90] sm:$0xff]
  %v4154 = vld [vmem:[%s4134 + $0x98] sm:$0xff]
  %v4155 = vld [vmem:[%s4134 + $0xa0] sm:$0xff]
  %v4156 = vld [vmem:[%s4134 + $0xa8] sm:$0xff]
  %v4157 = vld [vmem:[%s4134 + $0xb0] sm:$0xff]
  %v4158 = vld [vmem:[%s4134 + $0xb8] sm:$0xff]
  %v4159 = vld [vmem:[%s4134 + $0xc0] sm:$0xff]
  %v4160 = vld [vmem:[%s4134 + $0xc8] sm:$0xff]
  %v4161 = vld [vmem:[%s4134 + $0xd0] sm:$0xff]
  %v4162 = vld [vmem:[%s4134 + $0xd8] sm:$0xff]
  %v4163 = vld [vmem:[%s4134 + $0xe0] sm:$0xff]
  %v4164 = vld [vmem:[%s4134 + $0xe8] sm:$0xff]
  %v4195 = vunpack.c.l.b16 %v4135
  %v4196 = vunpack.c.h.b16 %v4135
  %v4197 = vunpack.c.l.b16 %v4136
  %v4198 = vunpack.c.h.b16 %v4136
  %v4199 = vunpack.c.l.b16 %v4137
  %v4200 = vunpack.c.h.b16 %v4137
  %v4201 = vunpack.c.l.b16 %v4138
  %v4202 = vunpack.c.h.b16 %v4138
  %v4203 = vunpack.c.l.b16 %v4139
  %v4204 = vunpack.c.h.b16 %v4139
  %v4205 = vunpack.c.l.b16 %v4140
  %v4206 = vunpack.c.h.b16 %v4140
  %v4207 = vunpack.c.l.b16 %v4141
  %v4208 = vunpack.c.h.b16 %v4141
  %v4209 = vunpack.c.l.b16 %v4142
  %v4210 = vunpack.c.h.b16 %v4142
  %v4211 = vunpack.c.l.b16 %v4143
  %v4212 = vunpack.c.h.b16 %v4143
  %v4213 = vunpack.c.l.b16 %v4144
  %v4214 = vunpack.c.h.b16 %v4144
  %v4215 = vunpack.c.l.b16 %v4145
  %v4216 = vunpack.c.h.b16 %v4145
  %v4217 = vunpack.c.l.b16 %v4146
  %v4218 = vunpack.c.h.b16 %v4146
  %v4219 = vunpack.c.l.b16 %v4147
  %v4220 = vunpack.c.h.b16 %v4147
  %v4221 = vunpack.c.l.b16 %v4148
  %v4222 = vunpack.c.h.b16 %v4148
  %v4223 = vunpack.c.l.b16 %v4149
  %v4224 = vunpack.c.h.b16 %v4149
  %v4225 = vunpack.c.l.b16 %v4150
  %v4226 = vunpack.c.h.b16 %v4150
  %v4227 = vunpack.c.l.b16 %v4151
  %v4228 = vunpack.c.h.b16 %v4151
  %v4229 = vunpack.c.l.b16 %v4152
  %v4230 = vunpack.c.h.b16 %v4152
  %v4231 = vunpack.c.l.b16 %v4153
  %v4232 = vunpack.c.h.b16 %v4153
  %v4233 = vunpack.c.l.b16 %v4154
  %v4234 = vunpack.c.h.b16 %v4154
  %v4235 = vunpack.c.l.b16 %v4155
  %v4236 = vunpack.c.h.b16 %v4155
  %v4237 = vunpack.c.l.b16 %v4156
  %v4238 = vunpack.c.h.b16 %v4156
  %v4239 = vunpack.c.l.b16 %v4157
  %v4240 = vunpack.c.h.b16 %v4157
  %v4241 = vunpack.c.l.b16 %v4158
  %v4242 = vunpack.c.h.b16 %v4158
  %v4243 = vunpack.c.l.b16 %v4159
  %v4244 = vunpack.c.h.b16 %v4159
  %v4245 = vunpack.c.l.b16 %v4160
  %v4246 = vunpack.c.h.b16 %v4160
  %v4247 = vunpack.c.l.b16 %v4161
  %v4248 = vunpack.c.h.b16 %v4161
  %v4249 = vunpack.c.l.b16 %v4162
  %v4250 = vunpack.c.h.b16 %v4162
  %v4251 = vunpack.c.l.b16 %v4163
  %v4252 = vunpack.c.h.b16 %v4163
  %v4253 = vunpack.c.l.b16 %v4164
  %v4254 = vunpack.c.h.b16 %v4164
  %v4255 = vpack.c.b16 %v4197, %v4195
  %v4256 = vpack.c.b16 %v4198, %v4196
  %v4257 = vpack.c.b16 %v4201, %v4199
  %v4258 = vpack.c.b16 %v4202, %v4200
  %v4259 = vpack.c.b16 %v4205, %v4203
  %v4260 = vpack.c.b16 %v4206, %v4204
  %v4261 = vpack.c.b16 %v4209, %v4207
  %v4262 = vpack.c.b16 %v4210, %v4208
  %v4263 = vpack.c.b16 %v4213, %v4211
  %v4264 = vpack.c.b16 %v4214, %v4212
  %v4265 = vpack.c.b16 %v4217, %v4215
  %v4266 = vpack.c.b16 %v4218, %v4216
  %v4267 = vpack.c.b16 %v4221, %v4219
  %v4268 = vpack.c.b16 %v4222, %v4220
  %v4269 = vpack.c.b16 %v4225, %v4223
  %v4270 = vpack.c.b16 %v4226, %v4224
  %v4271 = vpack.c.b16 %v4229, %v4227
  %v4272 = vpack.c.b16 %v4230, %v4228
  %v4273 = vpack.c.b16 %v4233, %v4231
  %v4274 = vpack.c.b16 %v4234, %v4232
  %v4275 = vpack.c.b16 %v4237, %v4235
  %v4276 = vpack.c.b16 %v4238, %v4236
  %v4277 = vpack.c.b16 %v4241, %v4239
  %v4278 = vpack.c.b16 %v4242, %v4240
  %v4279 = vpack.c.b16 %v4245, %v4243
  %v4280 = vpack.c.b16 %v4246, %v4244
  %v4281 = vpack.c.b16 %v4249, %v4247
  %v4282 = vpack.c.b16 %v4250, %v4248
  %v4283 = vpack.c.b16 %v4253, %v4251
  %v4284 = vpack.c.b16 %v4254, %v4252
  %4315 = vmatpush.bf16.msra.mxu0 %v4269
  %4316 = vmatpush.bf16.msra.mxu0 %v4267
  %4317 = vmatpush.bf16.msra.mxu0 %v4265
  %4318 = vmatpush.bf16.msra.mxu0 %v4263
  %4319 = vmatpush.bf16.msra.mxu0 %v4261
  %4320 = vmatpush.bf16.msra.mxu0 %v4259
  %4321 = vmatpush.bf16.msra.mxu0 %v4257
  %4322 = vmatpush.bf16.msra.mxu0 %v4255
  %4323 = vmatmul.bf16.gmra.mxu0 %v2498
  %v4324 = vpop.f32.mrf.mxu0
  %v4325 = vadd.f32 0.0, %v4324
  %v4326 = vpop.f32.mrf.mxu0
  %v4327 = vadd.f32 0.0, %v4326
  %4328 = vmatmul.bf16.gmra.mxu0 %v2500
  %v4329 = vpop.f32.mrf.mxu0
  %v4330 = vadd.f32 0.0, %v4329
  %v4331 = vpop.f32.mrf.mxu0
  %v4332 = vadd.f32 0.0, %v4331
  %4333 = vmatmul.bf16.gmra.mxu0 %v2502
  %v4334 = vpop.f32.mrf.mxu0
  %v4335 = vadd.f32 0.0, %v4334
  %v4336 = vpop.f32.mrf.mxu0
  %v4337 = vadd.f32 0.0, %v4336
  %4338 = vmatmul.bf16.gmra.mxu0 %v2504
  %v4339 = vpop.f32.mrf.mxu0
  %v4340 = vadd.f32 0.0, %v4339
  %v4341 = vpop.f32.mrf.mxu0
  %v4342 = vadd.f32 0.0, %v4341
  %4343 = vdwg.mxu0
  %4344 = vmatpush.bf16.msra.mxu0 0
  %4345 = vmatpush.bf16.msra.mxu0 %v4283
  %4346 = vmatpush.bf16.msra.mxu0 %v4281
  %4347 = vmatpush.bf16.msra.mxu0 %v4279
  %4348 = vmatpush.bf16.msra.mxu0 %v4277
  %4349 = vmatpush.bf16.msra.mxu0 %v4275
  %4350 = vmatpush.bf16.msra.mxu0 %v4273
  %4351 = vmatpush.bf16.msra.mxu0 %v4271
  %4352 = vmatmul.bf16.gmra.mxu0 %v2688
  %v4353 = vpop.f32.mrf.mxu0
  %v4354 = vadd.f32 %v4325, %v4353
  %v4355 = vpop.f32.mrf.mxu0
  %v4356 = vadd.f32 %v4327, %v4355
  %4357 = vmatmul.bf16.gmra.mxu0 %v2691
  %v4358 = vpop.f32.mrf.mxu0
  %v4359 = vadd.f32 %v4330, %v4358
  %v4360 = vpop.f32.mrf.mxu0
  %v4361 = vadd.f32 %v4332, %v4360
  %4362 = vmatmul.bf16.gmra.mxu0 %v2694
  %v4363 = vpop.f32.mrf.mxu0
  %v4364 = vadd.f32 %v4335, %v4363
  %v4365 = vpop.f32.mrf.mxu0
  %v4366 = vadd.f32 %v4337, %v4365
  %4367 = vmatmul.bf16.gmra.mxu0 %v2697
  %v4368 = vpop.f32.mrf.mxu0
  %v4369 = vadd.f32 %v4340, %v4368
  %v4370 = vpop.f32.mrf.mxu0
  %v4371 = vadd.f32 %v4342, %v4370
  %4372 = vdwg.mxu0
  %4373 = vmatpush.bf16.msra.mxu0 %v4270
  %4374 = vmatpush.bf16.msra.mxu0 %v4268
  %4375 = vmatpush.bf16.msra.mxu0 %v4266
  %4376 = vmatpush.bf16.msra.mxu0 %v4264
  %4377 = vmatpush.bf16.msra.mxu0 %v4262
  %4378 = vmatpush.bf16.msra.mxu0 %v4260
  %4379 = vmatpush.bf16.msra.mxu0 %v4258
  %4380 = vmatpush.bf16.msra.mxu0 %v4256
  %4381 = vmatmul.bf16.gmra.mxu0 %v2498
  %v4382 = vpop.f32.mrf.mxu0
  %v4383 = vadd.f32 0.0, %v4382
  %v4384 = vpop.f32.mrf.mxu0
  %v4385 = vadd.f32 0.0, %v4384
  %4386 = vmatmul.bf16.gmra.mxu0 %v2500
  %v4387 = vpop.f32.mrf.mxu0
  %v4388 = vadd.f32 0.0, %v4387
  %v4389 = vpop.f32.mrf.mxu0
  %v4390 = vadd.f32 0.0, %v4389
  %4391 = vmatmul.bf16.gmra.mxu0 %v2502
  %v4392 = vpop.f32.mrf.mxu0
  %v4393 = vadd.f32 0.0, %v4392
  %v4394 = vpop.f32.mrf.mxu0
  %v4395 = vadd.f32 0.0, %v4394
  %4396 = vmatmul.bf16.gmra.mxu0 %v2504
  %v4397 = vpop.f32.mrf.mxu0
  %v4398 = vadd.f32 0.0, %v4397
  %v4399 = vpop.f32.mrf.mxu0
  %v4400 = vadd.f32 0.0, %v4399
  %4401 = vdwg.mxu0
  %4402 = vmatpush.bf16.msra.mxu0 0
  %4403 = vmatpush.bf16.msra.mxu0 %v4284
  %4404 = vmatpush.bf16.msra.mxu0 %v4282
  %4405 = vmatpush.bf16.msra.mxu0 %v4280
  %4406 = vmatpush.bf16.msra.mxu0 %v4278
  %4407 = vmatpush.bf16.msra.mxu0 %v4276
  %4408 = vmatpush.bf16.msra.mxu0 %v4274
  %4409 = vmatpush.bf16.msra.mxu0 %v4272
  %4410 = vmatmul.bf16.gmra.mxu0 %v2688
  %v4411 = vpop.f32.mrf.mxu0
  %v4412 = vadd.f32 %v4383, %v4411
  %v4413 = vpop.f32.mrf.mxu0
  %v4414 = vadd.f32 %v4385, %v4413
  %4415 = vmatmul.bf16.gmra.mxu0 %v2691
  %v4416 = vpop.f32.mrf.mxu0
  %v4417 = vadd.f32 %v4388, %v4416
  %v4418 = vpop.f32.mrf.mxu0
  %v4419 = vadd.f32 %v4390, %v4418
  %4420 = vmatmul.bf16.gmra.mxu0 %v2694
  %v4421 = vpop.f32.mrf.mxu0
  %v4422 = vadd.f32 %v4393, %v4421
  %v4423 = vpop.f32.mrf.mxu0
  %v4424 = vadd.f32 %v4395, %v4423
  %4425 = vmatmul.bf16.gmra.mxu0 %v2697
  %v4426 = vpop.f32.mrf.mxu0
  %v4427 = vadd.f32 %v4398, %v4426
  %v4428 = vpop.f32.mrf.mxu0
  %v4429 = vadd.f32 %v4400, %v4428
  %4430 = vdwg.mxu0
  %v4431 = vadd.f32 %v2496, %v4354
  %v4432 = vadd.f32 %v2497, %v4412
  %v4433 = vadd.f32 %v2496, %v4356
  %v4434 = vadd.f32 %v2497, %v4414
  %v4435 = vadd.f32 %v2496, %v4359
  %v4436 = vadd.f32 %v2497, %v4417
  %v4437 = vadd.f32 %v2496, %v4361
  %v4438 = vadd.f32 %v2497, %v4419
  %v4439 = vadd.f32 %v2496, %v4364
  %v4440 = vadd.f32 %v2497, %v4422
  %v4441 = vadd.f32 %v2496, %v4366
  %v4442 = vadd.f32 %v2497, %v4424
  %v4443 = vadd.f32 %v2496, %v4369
  %v4444 = vadd.f32 %v2497, %v4427
  %v4445 = vadd.f32 %v2496, %v4371
  %v4446 = vadd.f32 %v2497, %v4429
  %s4447 = scalar_lea.vmem %s3, 1440
  %v4448 = vld [vmem:[%s4447] sm:$0xff]
  %v4449 = vld [vmem:[%s4447 + $0x8] sm:$0xff]
  %v4450 = vld [vmem:[%s4447 + $0x10] sm:$0xff]
  %v4451 = vld [vmem:[%s4447 + $0x18] sm:$0xff]
  %v4452 = vld [vmem:[%s4447 + $0x20] sm:$0xff]
  %v4453 = vld [vmem:[%s4447 + $0x28] sm:$0xff]
  %v4454 = vld [vmem:[%s4447 + $0x30] sm:$0xff]
  %v4455 = vld [vmem:[%s4447 + $0x38] sm:$0xff]
  %v4456 = vld [vmem:[%s4447 + $0x40] sm:$0xff]
  %v4457 = vld [vmem:[%s4447 + $0x48] sm:$0xff]
  %v4458 = vld [vmem:[%s4447 + $0x50] sm:$0xff]
  %v4459 = vld [vmem:[%s4447 + $0x58] sm:$0xff]
  %v4460 = vld [vmem:[%s4447 + $0x60] sm:$0xff]
  %v4461 = vld [vmem:[%s4447 + $0x68] sm:$0xff]
  %v4462 = vld [vmem:[%s4447 + $0x70] sm:$0xff]
  %v4463 = vld [vmem:[%s4447 + $0x78] sm:$0xff]
  %v4464 = vld [vmem:[%s4447 + $0x80] sm:$0xff]
  %v4465 = vld [vmem:[%s4447 + $0x88] sm:$0xff]
  %v4466 = vld [vmem:[%s4447 + $0x90] sm:$0xff]
  %v4467 = vld [vmem:[%s4447 + $0x98] sm:$0xff]
  %v4468 = vld [vmem:[%s4447 + $0xa0] sm:$0xff]
  %v4469 = vld [vmem:[%s4447 + $0xa8] sm:$0xff]
  %v4470 = vld [vmem:[%s4447 + $0xb0] sm:$0xff]
  %v4471 = vld [vmem:[%s4447 + $0xb8] sm:$0xff]
  %v4472 = vld [vmem:[%s4447 + $0xc0] sm:$0xff]
  %v4473 = vld [vmem:[%s4447 + $0xc8] sm:$0xff]
  %v4474 = vld [vmem:[%s4447 + $0xd0] sm:$0xff]
  %v4475 = vld [vmem:[%s4447 + $0xd8] sm:$0xff]
  %v4476 = vld [vmem:[%s4447 + $0xe0] sm:$0xff]
  %v4477 = vld [vmem:[%s4447 + $0xe8] sm:$0xff]
  %v4508 = vunpack.c.l.b16 %v4448
  %v4509 = vunpack.c.h.b16 %v4448
  %v4510 = vunpack.c.l.b16 %v4449
  %v4511 = vunpack.c.h.b16 %v4449
  %v4512 = vunpack.c.l.b16 %v4450
  %v4513 = vunpack.c.h.b16 %v4450
  %v4514 = vunpack.c.l.b16 %v4451
  %v4515 = vunpack.c.h.b16 %v4451
  %v4516 = vunpack.c.l.b16 %v4452
  %v4517 = vunpack.c.h.b16 %v4452
  %v4518 = vunpack.c.l.b16 %v4453
  %v4519 = vunpack.c.h.b16 %v4453
  %v4520 = vunpack.c.l.b16 %v4454
  %v4521 = vunpack.c.h.b16 %v4454
  %v4522 = vunpack.c.l.b16 %v4455
  %v4523 = vunpack.c.h.b16 %v4455
  %v4524 = vunpack.c.l.b16 %v4456
  %v4525 = vunpack.c.h.b16 %v4456
  %v4526 = vunpack.c.l.b16 %v4457
  %v4527 = vunpack.c.h.b16 %v4457
  %v4528 = vunpack.c.l.b16 %v4458
  %v4529 = vunpack.c.h.b16 %v4458
  %v4530 = vunpack.c.l.b16 %v4459
  %v4531 = vunpack.c.h.b16 %v4459
  %v4532 = vunpack.c.l.b16 %v4460
  %v4533 = vunpack.c.h.b16 %v4460
  %v4534 = vunpack.c.l.b16 %v4461
  %v4535 = vunpack.c.h.b16 %v4461
  %v4536 = vunpack.c.l.b16 %v4462
  %v4537 = vunpack.c.h.b16 %v4462
  %v4538 = vunpack.c.l.b16 %v4463
  %v4539 = vunpack.c.h.b16 %v4463
  %v4540 = vunpack.c.l.b16 %v4464
  %v4541 = vunpack.c.h.b16 %v4464
  %v4542 = vunpack.c.l.b16 %v4465
  %v4543 = vunpack.c.h.b16 %v4465
  %v4544 = vunpack.c.l.b16 %v4466
  %v4545 = vunpack.c.h.b16 %v4466
  %v4546 = vunpack.c.l.b16 %v4467
  %v4547 = vunpack.c.h.b16 %v4467
  %v4548 = vunpack.c.l.b16 %v4468
  %v4549 = vunpack.c.h.b16 %v4468
  %v4550 = vunpack.c.l.b16 %v4469
  %v4551 = vunpack.c.h.b16 %v4469
  %v4552 = vunpack.c.l.b16 %v4470
  %v4553 = vunpack.c.h.b16 %v4470
  %v4554 = vunpack.c.l.b16 %v4471
  %v4555 = vunpack.c.h.b16 %v4471
  %v4556 = vunpack.c.l.b16 %v4472
  %v4557 = vunpack.c.h.b16 %v4472
  %v4558 = vunpack.c.l.b16 %v4473
  %v4559 = vunpack.c.h.b16 %v4473
  %v4560 = vunpack.c.l.b16 %v4474
  %v4561 = vunpack.c.h.b16 %v4474
  %v4562 = vunpack.c.l.b16 %v4475
  %v4563 = vunpack.c.h.b16 %v4475
  %v4564 = vunpack.c.l.b16 %v4476
  %v4565 = vunpack.c.h.b16 %v4476
  %v4566 = vunpack.c.l.b16 %v4477
  %v4567 = vunpack.c.h.b16 %v4477
  %v4568 = vpack.c.b16 %v4510, %v4508
  %v4569 = vpack.c.b16 %v4511, %v4509
  %v4570 = vpack.c.b16 %v4514, %v4512
  %v4571 = vpack.c.b16 %v4515, %v4513
  %v4572 = vpack.c.b16 %v4518, %v4516
  %v4573 = vpack.c.b16 %v4519, %v4517
  %v4574 = vpack.c.b16 %v4522, %v4520
  %v4575 = vpack.c.b16 %v4523, %v4521
  %v4576 = vpack.c.b16 %v4526, %v4524
  %v4577 = vpack.c.b16 %v4527, %v4525
  %v4578 = vpack.c.b16 %v4530, %v4528
  %v4579 = vpack.c.b16 %v4531, %v4529
  %v4580 = vpack.c.b16 %v4534, %v4532
  %v4581 = vpack.c.b16 %v4535, %v4533
  %v4582 = vpack.c.b16 %v4538, %v4536
  %v4583 = vpack.c.b16 %v4539, %v4537
  %v4584 = vpack.c.b16 %v4542, %v4540
  %v4585 = vpack.c.b16 %v4543, %v4541
  %v4586 = vpack.c.b16 %v4546, %v4544
  %v4587 = vpack.c.b16 %v4547, %v4545
  %v4588 = vpack.c.b16 %v4550, %v4548
  %v4589 = vpack.c.b16 %v4551, %v4549
  %v4590 = vpack.c.b16 %v4554, %v4552
  %v4591 = vpack.c.b16 %v4555, %v4553
  %v4592 = vpack.c.b16 %v4558, %v4556
  %v4593 = vpack.c.b16 %v4559, %v4557
  %v4594 = vpack.c.b16 %v4562, %v4560
  %v4595 = vpack.c.b16 %v4563, %v4561
  %v4596 = vpack.c.b16 %v4566, %v4564
  %v4597 = vpack.c.b16 %v4567, %v4565
  %4628 = vmatpush.bf16.msra.mxu0 %v4582
  %4629 = vmatpush.bf16.msra.mxu0 %v4580
  %4630 = vmatpush.bf16.msra.mxu0 %v4578
  %4631 = vmatpush.bf16.msra.mxu0 %v4576
  %4632 = vmatpush.bf16.msra.mxu0 %v4574
  %4633 = vmatpush.bf16.msra.mxu0 %v4572
  %4634 = vmatpush.bf16.msra.mxu0 %v4570
  %4635 = vmatpush.bf16.msra.mxu0 %v4568
  %4636 = vmatmul.bf16.gmra.mxu0 %v2831
  %v4637 = vpop.f32.mrf.mxu0
  %v4638 = vadd.f32 0.0, %v4637
  %v4639 = vpop.f32.mrf.mxu0
  %v4640 = vadd.f32 0.0, %v4639
  %4641 = vmatmul.bf16.gmra.mxu0 %v2833
  %v4642 = vpop.f32.mrf.mxu0
  %v4643 = vadd.f32 0.0, %v4642
  %v4644 = vpop.f32.mrf.mxu0
  %v4645 = vadd.f32 0.0, %v4644
  %4646 = vmatmul.bf16.gmra.mxu0 %v2835
  %v4647 = vpop.f32.mrf.mxu0
  %v4648 = vadd.f32 0.0, %v4647
  %v4649 = vpop.f32.mrf.mxu0
  %v4650 = vadd.f32 0.0, %v4649
  %4651 = vmatmul.bf16.gmra.mxu0 %v2837
  %v4652 = vpop.f32.mrf.mxu0
  %v4653 = vadd.f32 0.0, %v4652
  %v4654 = vpop.f32.mrf.mxu0
  %v4655 = vadd.f32 0.0, %v4654
  %4656 = vdwg.mxu0
  %4657 = vmatpush.bf16.msra.mxu0 0
  %4658 = vmatpush.bf16.msra.mxu0 %v4596
  %4659 = vmatpush.bf16.msra.mxu0 %v4594
  %4660 = vmatpush.bf16.msra.mxu0 %v4592
  %4661 = vmatpush.bf16.msra.mxu0 %v4590
  %4662 = vmatpush.bf16.msra.mxu0 %v4588
  %4663 = vmatpush.bf16.msra.mxu0 %v4586
  %4664 = vmatpush.bf16.msra.mxu0 %v4584
  %4665 = vmatmul.bf16.gmra.mxu0 %v3021
  %v4666 = vpop.f32.mrf.mxu0
  %v4667 = vadd.f32 %v4638, %v4666
  %v4668 = vpop.f32.mrf.mxu0
  %v4669 = vadd.f32 %v4640, %v4668
  %4670 = vmatmul.bf16.gmra.mxu0 %v3024
  %v4671 = vpop.f32.mrf.mxu0
  %v4672 = vadd.f32 %v4643, %v4671
  %v4673 = vpop.f32.mrf.mxu0
  %v4674 = vadd.f32 %v4645, %v4673
  %4675 = vmatmul.bf16.gmra.mxu0 %v3027
  %v4676 = vpop.f32.mrf.mxu0
  %v4677 = vadd.f32 %v4648, %v4676
  %v4678 = vpop.f32.mrf.mxu0
  %v4679 = vadd.f32 %v4650, %v4678
  %4680 = vmatmul.bf16.gmra.mxu0 %v3030
  %v4681 = vpop.f32.mrf.mxu0
  %v4682 = vadd.f32 %v4653, %v4681
  %v4683 = vpop.f32.mrf.mxu0
  %v4684 = vadd.f32 %v4655, %v4683
  %4685 = vdwg.mxu0
  %4686 = vmatpush.bf16.msra.mxu0 %v4583
  %4687 = vmatpush.bf16.msra.mxu0 %v4581
  %4688 = vmatpush.bf16.msra.mxu0 %v4579
  %4689 = vmatpush.bf16.msra.mxu0 %v4577
  %4690 = vmatpush.bf16.msra.mxu0 %v4575
  %4691 = vmatpush.bf16.msra.mxu0 %v4573
  %4692 = vmatpush.bf16.msra.mxu0 %v4571
  %4693 = vmatpush.bf16.msra.mxu0 %v4569
  %4694 = vmatmul.bf16.gmra.mxu0 %v2831
  %v4695 = vpop.f32.mrf.mxu0
  %v4696 = vadd.f32 0.0, %v4695
  %v4697 = vpop.f32.mrf.mxu0
  %v4698 = vadd.f32 0.0, %v4697
  %4699 = vmatmul.bf16.gmra.mxu0 %v2833
  %v4700 = vpop.f32.mrf.mxu0
  %v4701 = vadd.f32 0.0, %v4700
  %v4702 = vpop.f32.mrf.mxu0
  %v4703 = vadd.f32 0.0, %v4702
  %4704 = vmatmul.bf16.gmra.mxu0 %v2835
  %v4705 = vpop.f32.mrf.mxu0
  %v4706 = vadd.f32 0.0, %v4705
  %v4707 = vpop.f32.mrf.mxu0
  %v4708 = vadd.f32 0.0, %v4707
  %4709 = vmatmul.bf16.gmra.mxu0 %v2837
  %v4710 = vpop.f32.mrf.mxu0
  %v4711 = vadd.f32 0.0, %v4710
  %v4712 = vpop.f32.mrf.mxu0
  %v4713 = vadd.f32 0.0, %v4712
  %4714 = vdwg.mxu0
  %4715 = vmatpush.bf16.msra.mxu0 0
  %4716 = vmatpush.bf16.msra.mxu0 %v4597
  %4717 = vmatpush.bf16.msra.mxu0 %v4595
  %4718 = vmatpush.bf16.msra.mxu0 %v4593
  %4719 = vmatpush.bf16.msra.mxu0 %v4591
  %4720 = vmatpush.bf16.msra.mxu0 %v4589
  %4721 = vmatpush.bf16.msra.mxu0 %v4587
  %4722 = vmatpush.bf16.msra.mxu0 %v4585
  %4723 = vmatmul.bf16.gmra.mxu0 %v3021
  %v4724 = vpop.f32.mrf.mxu0
  %v4725 = vadd.f32 %v4696, %v4724
  %v4726 = vpop.f32.mrf.mxu0
  %v4727 = vadd.f32 %v4698, %v4726
  %4728 = vmatmul.bf16.gmra.mxu0 %v3024
  %v4729 = vpop.f32.mrf.mxu0
  %v4730 = vadd.f32 %v4701, %v4729
  %v4731 = vpop.f32.mrf.mxu0
  %v4732 = vadd.f32 %v4703, %v4731
  %4733 = vmatmul.bf16.gmra.mxu0 %v3027
  %v4734 = vpop.f32.mrf.mxu0
  %v4735 = vadd.f32 %v4706, %v4734
  %v4736 = vpop.f32.mrf.mxu0
  %v4737 = vadd.f32 %v4708, %v4736
  %4738 = vmatmul.bf16.gmra.mxu0 %v3030
  %v4739 = vpop.f32.mrf.mxu0
  %v4740 = vadd.f32 %v4711, %v4739
  %v4741 = vpop.f32.mrf.mxu0
  %v4742 = vadd.f32 %v4713, %v4741
  %4743 = vdwg.mxu0
  %v4744 = vadd.f32 %v4431, %v4667
  %v4745 = vadd.f32 %v4432, %v4725
  %v4746 = vadd.f32 %v4433, %v4669
  %v4747 = vadd.f32 %v4434, %v4727
  %v4748 = vadd.f32 %v4435, %v4672
  %v4749 = vadd.f32 %v4436, %v4730
  %v4750 = vadd.f32 %v4437, %v4674
  %v4751 = vadd.f32 %v4438, %v4732
  %v4752 = vadd.f32 %v4439, %v4677
  %v4753 = vadd.f32 %v4440, %v4735
  %v4754 = vadd.f32 %v4441, %v4679
  %v4755 = vadd.f32 %v4442, %v4737
  %v4756 = vadd.f32 %v4443, %v4682
  %v4757 = vadd.f32 %v4444, %v4740
  %v4758 = vadd.f32 %v4445, %v4684
  %v4759 = vadd.f32 %v4446, %v4742
  %s4760 = scalar_lea.vmem %s3, 1680
  %v4761 = vld [vmem:[%s4760] sm:$0xff]
  %v4762 = vld [vmem:[%s4760 + $0x8] sm:$0xff]
  %v4763 = vld [vmem:[%s4760 + $0x10] sm:$0xff]
  %v4764 = vld [vmem:[%s4760 + $0x18] sm:$0xff]
  %v4765 = vld [vmem:[%s4760 + $0x20] sm:$0xff]
  %v4766 = vld [vmem:[%s4760 + $0x28] sm:$0xff]
  %v4767 = vld [vmem:[%s4760 + $0x30] sm:$0xff]
  %v4768 = vld [vmem:[%s4760 + $0x38] sm:$0xff]
  %v4769 = vld [vmem:[%s4760 + $0x40] sm:$0xff]
  %v4770 = vld [vmem:[%s4760 + $0x48] sm:$0xff]
  %v4771 = vld [vmem:[%s4760 + $0x50] sm:$0xff]
  %v4772 = vld [vmem:[%s4760 + $0x58] sm:$0xff]
  %v4773 = vld [vmem:[%s4760 + $0x60] sm:$0xff]
  %v4774 = vld [vmem:[%s4760 + $0x68] sm:$0xff]
  %v4775 = vld [vmem:[%s4760 + $0x70] sm:$0xff]
  %v4776 = vld [vmem:[%s4760 + $0x78] sm:$0xff]
  %v4777 = vld [vmem:[%s4760 + $0x80] sm:$0xff]
  %v4778 = vld [vmem:[%s4760 + $0x88] sm:$0xff]
  %v4779 = vld [vmem:[%s4760 + $0x90] sm:$0xff]
  %v4780 = vld [vmem:[%s4760 + $0x98] sm:$0xff]
  %v4781 = vld [vmem:[%s4760 + $0xa0] sm:$0xff]
  %v4782 = vld [vmem:[%s4760 + $0xa8] sm:$0xff]
  %v4783 = vld [vmem:[%s4760 + $0xb0] sm:$0xff]
  %v4784 = vld [vmem:[%s4760 + $0xb8] sm:$0xff]
  %v4785 = vld [vmem:[%s4760 + $0xc0] sm:$0xff]
  %v4786 = vld [vmem:[%s4760 + $0xc8] sm:$0xff]
  %v4787 = vld [vmem:[%s4760 + $0xd0] sm:$0xff]
  %v4788 = vld [vmem:[%s4760 + $0xd8] sm:$0xff]
  %v4789 = vld [vmem:[%s4760 + $0xe0] sm:$0xff]
  %v4790 = vld [vmem:[%s4760 + $0xe8] sm:$0xff]
  %v4821 = vunpack.c.l.b16 %v4761
  %v4822 = vunpack.c.h.b16 %v4761
  %v4823 = vunpack.c.l.b16 %v4762
  %v4824 = vunpack.c.h.b16 %v4762
  %v4825 = vunpack.c.l.b16 %v4763
  %v4826 = vunpack.c.h.b16 %v4763
  %v4827 = vunpack.c.l.b16 %v4764
  %v4828 = vunpack.c.h.b16 %v4764
  %v4829 = vunpack.c.l.b16 %v4765
  %v4830 = vunpack.c.h.b16 %v4765
  %v4831 = vunpack.c.l.b16 %v4766
  %v4832 = vunpack.c.h.b16 %v4766
  %v4833 = vunpack.c.l.b16 %v4767
  %v4834 = vunpack.c.h.b16 %v4767
  %v4835 = vunpack.c.l.b16 %v4768
  %v4836 = vunpack.c.h.b16 %v4768
  %v4837 = vunpack.c.l.b16 %v4769
  %v4838 = vunpack.c.h.b16 %v4769
  %v4839 = vunpack.c.l.b16 %v4770
  %v4840 = vunpack.c.h.b16 %v4770
  %v4841 = vunpack.c.l.b16 %v4771
  %v4842 = vunpack.c.h.b16 %v4771
  %v4843 = vunpack.c.l.b16 %v4772
  %v4844 = vunpack.c.h.b16 %v4772
  %v4845 = vunpack.c.l.b16 %v4773
  %v4846 = vunpack.c.h.b16 %v4773
  %v4847 = vunpack.c.l.b16 %v4774
  %v4848 = vunpack.c.h.b16 %v4774
  %v4849 = vunpack.c.l.b16 %v4775
  %v4850 = vunpack.c.h.b16 %v4775
  %v4851 = vunpack.c.l.b16 %v4776
  %v4852 = vunpack.c.h.b16 %v4776
  %v4853 = vunpack.c.l.b16 %v4777
  %v4854 = vunpack.c.h.b16 %v4777
  %v4855 = vunpack.c.l.b16 %v4778
  %v4856 = vunpack.c.h.b16 %v4778
  %v4857 = vunpack.c.l.b16 %v4779
  %v4858 = vunpack.c.h.b16 %v4779
  %v4859 = vunpack.c.l.b16 %v4780
  %v4860 = vunpack.c.h.b16 %v4780
  %v4861 = vunpack.c.l.b16 %v4781
  %v4862 = vunpack.c.h.b16 %v4781
  %v4863 = vunpack.c.l.b16 %v4782
  %v4864 = vunpack.c.h.b16 %v4782
  %v4865 = vunpack.c.l.b16 %v4783
  %v4866 = vunpack.c.h.b16 %v4783
  %v4867 = vunpack.c.l.b16 %v4784
  %v4868 = vunpack.c.h.b16 %v4784
  %v4869 = vunpack.c.l.b16 %v4785
  %v4870 = vunpack.c.h.b16 %v4785
  %v4871 = vunpack.c.l.b16 %v4786
  %v4872 = vunpack.c.h.b16 %v4786
  %v4873 = vunpack.c.l.b16 %v4787
  %v4874 = vunpack.c.h.b16 %v4787
  %v4875 = vunpack.c.l.b16 %v4788
  %v4876 = vunpack.c.h.b16 %v4788
  %v4877 = vunpack.c.l.b16 %v4789
  %v4878 = vunpack.c.h.b16 %v4789
  %v4879 = vunpack.c.l.b16 %v4790
  %v4880 = vunpack.c.h.b16 %v4790
  %v4881 = vpack.c.b16 %v4823, %v4821
  %v4882 = vpack.c.b16 %v4824, %v4822
  %v4883 = vpack.c.b16 %v4827, %v4825
  %v4884 = vpack.c.b16 %v4828, %v4826
  %v4885 = vpack.c.b16 %v4831, %v4829
  %v4886 = vpack.c.b16 %v4832, %v4830
  %v4887 = vpack.c.b16 %v4835, %v4833
  %v4888 = vpack.c.b16 %v4836, %v4834
  %v4889 = vpack.c.b16 %v4839, %v4837
  %v4890 = vpack.c.b16 %v4840, %v4838
  %v4891 = vpack.c.b16 %v4843, %v4841
  %v4892 = vpack.c.b16 %v4844, %v4842
  %v4893 = vpack.c.b16 %v4847, %v4845
  %v4894 = vpack.c.b16 %v4848, %v4846
  %v4895 = vpack.c.b16 %v4851, %v4849
  %v4896 = vpack.c.b16 %v4852, %v4850
  %v4897 = vpack.c.b16 %v4855, %v4853
  %v4898 = vpack.c.b16 %v4856, %v4854
  %v4899 = vpack.c.b16 %v4859, %v4857
  %v4900 = vpack.c.b16 %v4860, %v4858
  %v4901 = vpack.c.b16 %v4863, %v4861
  %v4902 = vpack.c.b16 %v4864, %v4862
  %v4903 = vpack.c.b16 %v4867, %v4865
  %v4904 = vpack.c.b16 %v4868, %v4866
  %v4905 = vpack.c.b16 %v4871, %v4869
  %v4906 = vpack.c.b16 %v4872, %v4870
  %v4907 = vpack.c.b16 %v4875, %v4873
  %v4908 = vpack.c.b16 %v4876, %v4874
  %v4909 = vpack.c.b16 %v4879, %v4877
  %v4910 = vpack.c.b16 %v4880, %v4878
  %4941 = vmatpush.bf16.msra.mxu0 %v4895
  %4942 = vmatpush.bf16.msra.mxu0 %v4893
  %4943 = vmatpush.bf16.msra.mxu0 %v4891
  %4944 = vmatpush.bf16.msra.mxu0 %v4889
  %4945 = vmatpush.bf16.msra.mxu0 %v4887
  %4946 = vmatpush.bf16.msra.mxu0 %v4885
  %4947 = vmatpush.bf16.msra.mxu0 %v4883
  %4948 = vmatpush.bf16.msra.mxu0 %v4881
  %4949 = vmatmul.bf16.gmra.mxu0 %v2500
  %v4950 = vpop.f32.mrf.mxu0
  %v4951 = vadd.f32 0.0, %v4950
  %v4952 = vpop.f32.mrf.mxu0
  %v4953 = vadd.f32 0.0, %v4952
  %4954 = vmatmul.bf16.gmra.mxu0 %v2502
  %v4955 = vpop.f32.mrf.mxu0
  %v4956 = vadd.f32 0.0, %v4955
  %v4957 = vpop.f32.mrf.mxu0
  %v4958 = vadd.f32 0.0, %v4957
  %4959 = vmatmul.bf16.gmra.mxu0 %v2504
  %v4960 = vpop.f32.mrf.mxu0
  %v4961 = vadd.f32 0.0, %v4960
  %v4962 = vpop.f32.mrf.mxu0
  %v4963 = vadd.f32 0.0, %v4962
  %4964 = vmatmul.bf16.gmra.mxu0 %v3164
  %v4965 = vpop.f32.mrf.mxu0
  %v4966 = vadd.f32 0.0, %v4965
  %v4967 = vpop.f32.mrf.mxu0
  %v4968 = vadd.f32 0.0, %v4967
  %4969 = vdwg.mxu0
  %4970 = vmatpush.bf16.msra.mxu0 0
  %4971 = vmatpush.bf16.msra.mxu0 %v4909
  %4972 = vmatpush.bf16.msra.mxu0 %v4907
  %4973 = vmatpush.bf16.msra.mxu0 %v4905
  %4974 = vmatpush.bf16.msra.mxu0 %v4903
  %4975 = vmatpush.bf16.msra.mxu0 %v4901
  %4976 = vmatpush.bf16.msra.mxu0 %v4899
  %4977 = vmatpush.bf16.msra.mxu0 %v4897
  %4978 = vmatmul.bf16.gmra.mxu0 %v2691
  %v4979 = vpop.f32.mrf.mxu0
  %v4980 = vadd.f32 %v4951, %v4979
  %v4981 = vpop.f32.mrf.mxu0
  %v4982 = vadd.f32 %v4953, %v4981
  %4983 = vmatmul.bf16.gmra.mxu0 %v2694
  %v4984 = vpop.f32.mrf.mxu0
  %v4985 = vadd.f32 %v4956, %v4984
  %v4986 = vpop.f32.mrf.mxu0
  %v4987 = vadd.f32 %v4958, %v4986
  %4988 = vmatmul.bf16.gmra.mxu0 %v2697
  %v4989 = vpop.f32.mrf.mxu0
  %v4990 = vadd.f32 %v4961, %v4989
  %v4991 = vpop.f32.mrf.mxu0
  %v4992 = vadd.f32 %v4963, %v4991
  %4993 = vmatmul.bf16.gmra.mxu0 %v3348
  %v4994 = vpop.f32.mrf.mxu0
  %v4995 = vadd.f32 %v4966, %v4994
  %v4996 = vpop.f32.mrf.mxu0
  %v4997 = vadd.f32 %v4968, %v4996
  %4998 = vdwg.mxu0
  %4999 = vmatpush.bf16.msra.mxu0 %v4896
  %5000 = vmatpush.bf16.msra.mxu0 %v4894
  %5001 = vmatpush.bf16.msra.mxu0 %v4892
  %5002 = vmatpush.bf16.msra.mxu0 %v4890
  %5003 = vmatpush.bf16.msra.mxu0 %v4888
  %5004 = vmatpush.bf16.msra.mxu0 %v4886
  %5005 = vmatpush.bf16.msra.mxu0 %v4884
  %5006 = vmatpush.bf16.msra.mxu0 %v4882
  %5007 = vmatmul.bf16.gmra.mxu0 %v2500
  %v5008 = vpop.f32.mrf.mxu0
  %v5009 = vadd.f32 0.0, %v5008
  %v5010 = vpop.f32.mrf.mxu0
  %v5011 = vadd.f32 0.0, %v5010
  %5012 = vmatmul.bf16.gmra.mxu0 %v2502
  %v5013 = vpop.f32.mrf.mxu0
  %v5014 = vadd.f32 0.0, %v5013
  %v5015 = vpop.f32.mrf.mxu0
  %v5016 = vadd.f32 0.0, %v5015
  %5017 = vmatmul.bf16.gmra.mxu0 %v2504
  %v5018 = vpop.f32.mrf.mxu0
  %v5019 = vadd.f32 0.0, %v5018
  %v5020 = vpop.f32.mrf.mxu0
  %v5021 = vadd.f32 0.0, %v5020
  %5022 = vmatmul.bf16.gmra.mxu0 %v3164
  %v5023 = vpop.f32.mrf.mxu0
  %v5024 = vadd.f32 0.0, %v5023
  %v5025 = vpop.f32.mrf.mxu0
  %v5026 = vadd.f32 0.0, %v5025
  %5027 = vdwg.mxu0
  %5028 = vmatpush.bf16.msra.mxu0 0
  %5029 = vmatpush.bf16.msra.mxu0 %v4910
  %5030 = vmatpush.bf16.msra.mxu0 %v4908
  %5031 = vmatpush.bf16.msra.mxu0 %v4906
  %5032 = vmatpush.bf16.msra.mxu0 %v4904
  %5033 = vmatpush.bf16.msra.mxu0 %v4902
  %5034 = vmatpush.bf16.msra.mxu0 %v4900
  %5035 = vmatpush.bf16.msra.mxu0 %v4898
  %5036 = vmatmul.bf16.gmra.mxu0 %v2691
  %v5037 = vpop.f32.mrf.mxu0
  %v5038 = vadd.f32 %v5009, %v5037
  %v5039 = vpop.f32.mrf.mxu0
  %v5040 = vadd.f32 %v5011, %v5039
  %5041 = vmatmul.bf16.gmra.mxu0 %v2694
  %v5042 = vpop.f32.mrf.mxu0
  %v5043 = vadd.f32 %v5014, %v5042
  %v5044 = vpop.f32.mrf.mxu0
  %v5045 = vadd.f32 %v5016, %v5044
  %5046 = vmatmul.bf16.gmra.mxu0 %v2697
  %v5047 = vpop.f32.mrf.mxu0
  %v5048 = vadd.f32 %v5019, %v5047
  %v5049 = vpop.f32.mrf.mxu0
  %v5050 = vadd.f32 %v5021, %v5049
  %5051 = vmatmul.bf16.gmra.mxu0 %v3348
  %v5052 = vpop.f32.mrf.mxu0
  %v5053 = vadd.f32 %v5024, %v5052
  %v5054 = vpop.f32.mrf.mxu0
  %v5055 = vadd.f32 %v5026, %v5054
  %5056 = vdwg.mxu0
  %v5057 = vadd.f32 %v4744, %v4980
  %v5058 = vadd.f32 %v4745, %v5038
  %v5059 = vadd.f32 %v4746, %v4982
  %v5060 = vadd.f32 %v4747, %v5040
  %v5061 = vadd.f32 %v4748, %v4985
  %v5062 = vadd.f32 %v4749, %v5043
  %v5063 = vadd.f32 %v4750, %v4987
  %v5064 = vadd.f32 %v4751, %v5045
  %v5065 = vadd.f32 %v4752, %v4990
  %v5066 = vadd.f32 %v4753, %v5048
  %v5067 = vadd.f32 %v4754, %v4992
  %v5068 = vadd.f32 %v4755, %v5050
  %v5069 = vadd.f32 %v4756, %v4995
  %v5070 = vadd.f32 %v4757, %v5053
  %v5071 = vadd.f32 %v4758, %v4997
  %v5072 = vadd.f32 %v4759, %v5055
  %s5073 = scalar_lea.vmem %s3, 1920
  %v5074 = vld [vmem:[%s5073] sm:$0xff]
  %v5075 = vld [vmem:[%s5073 + $0x8] sm:$0xff]
  %v5076 = vld [vmem:[%s5073 + $0x10] sm:$0xff]
  %v5077 = vld [vmem:[%s5073 + $0x18] sm:$0xff]
  %v5078 = vld [vmem:[%s5073 + $0x20] sm:$0xff]
  %v5079 = vld [vmem:[%s5073 + $0x28] sm:$0xff]
  %v5080 = vld [vmem:[%s5073 + $0x30] sm:$0xff]
  %v5081 = vld [vmem:[%s5073 + $0x38] sm:$0xff]
  %v5082 = vld [vmem:[%s5073 + $0x40] sm:$0xff]
  %v5083 = vld [vmem:[%s5073 + $0x48] sm:$0xff]
  %v5084 = vld [vmem:[%s5073 + $0x50] sm:$0xff]
  %v5085 = vld [vmem:[%s5073 + $0x58] sm:$0xff]
  %v5086 = vld [vmem:[%s5073 + $0x60] sm:$0xff]
  %v5087 = vld [vmem:[%s5073 + $0x68] sm:$0xff]
  %v5088 = vld [vmem:[%s5073 + $0x70] sm:$0xff]
  %v5089 = vld [vmem:[%s5073 + $0x78] sm:$0xff]
  %v5090 = vld [vmem:[%s5073 + $0x80] sm:$0xff]
  %v5091 = vld [vmem:[%s5073 + $0x88] sm:$0xff]
  %v5092 = vld [vmem:[%s5073 + $0x90] sm:$0xff]
  %v5093 = vld [vmem:[%s5073 + $0x98] sm:$0xff]
  %v5094 = vld [vmem:[%s5073 + $0xa0] sm:$0xff]
  %v5095 = vld [vmem:[%s5073 + $0xa8] sm:$0xff]
  %v5096 = vld [vmem:[%s5073 + $0xb0] sm:$0xff]
  %v5097 = vld [vmem:[%s5073 + $0xb8] sm:$0xff]
  %v5098 = vld [vmem:[%s5073 + $0xc0] sm:$0xff]
  %v5099 = vld [vmem:[%s5073 + $0xc8] sm:$0xff]
  %v5100 = vld [vmem:[%s5073 + $0xd0] sm:$0xff]
  %v5101 = vld [vmem:[%s5073 + $0xd8] sm:$0xff]
  %v5102 = vld [vmem:[%s5073 + $0xe0] sm:$0xff]
  %v5103 = vld [vmem:[%s5073 + $0xe8] sm:$0xff]
  %v5134 = vunpack.c.l.b16 %v5074
  %v5135 = vunpack.c.h.b16 %v5074
  %v5136 = vunpack.c.l.b16 %v5075
  %v5137 = vunpack.c.h.b16 %v5075
  %v5138 = vunpack.c.l.b16 %v5076
  %v5139 = vunpack.c.h.b16 %v5076
  %v5140 = vunpack.c.l.b16 %v5077
  %v5141 = vunpack.c.h.b16 %v5077
  %v5142 = vunpack.c.l.b16 %v5078
  %v5143 = vunpack.c.h.b16 %v5078
  %v5144 = vunpack.c.l.b16 %v5079
  %v5145 = vunpack.c.h.b16 %v5079
  %v5146 = vunpack.c.l.b16 %v5080
  %v5147 = vunpack.c.h.b16 %v5080
  %v5148 = vunpack.c.l.b16 %v5081
  %v5149 = vunpack.c.h.b16 %v5081
  %v5150 = vunpack.c.l.b16 %v5082
  %v5151 = vunpack.c.h.b16 %v5082
  %v5152 = vunpack.c.l.b16 %v5083
  %v5153 = vunpack.c.h.b16 %v5083
  %v5154 = vunpack.c.l.b16 %v5084
  %v5155 = vunpack.c.h.b16 %v5084
  %v5156 = vunpack.c.l.b16 %v5085
  %v5157 = vunpack.c.h.b16 %v5085
  %v5158 = vunpack.c.l.b16 %v5086
  %v5159 = vunpack.c.h.b16 %v5086
  %v5160 = vunpack.c.l.b16 %v5087
  %v5161 = vunpack.c.h.b16 %v5087
  %v5162 = vunpack.c.l.b16 %v5088
  %v5163 = vunpack.c.h.b16 %v5088
  %v5164 = vunpack.c.l.b16 %v5089
  %v5165 = vunpack.c.h.b16 %v5089
  %v5166 = vunpack.c.l.b16 %v5090
  %v5167 = vunpack.c.h.b16 %v5090
  %v5168 = vunpack.c.l.b16 %v5091
  %v5169 = vunpack.c.h.b16 %v5091
  %v5170 = vunpack.c.l.b16 %v5092
  %v5171 = vunpack.c.h.b16 %v5092
  %v5172 = vunpack.c.l.b16 %v5093
  %v5173 = vunpack.c.h.b16 %v5093
  %v5174 = vunpack.c.l.b16 %v5094
  %v5175 = vunpack.c.h.b16 %v5094
  %v5176 = vunpack.c.l.b16 %v5095
  %v5177 = vunpack.c.h.b16 %v5095
  %v5178 = vunpack.c.l.b16 %v5096
  %v5179 = vunpack.c.h.b16 %v5096
  %v5180 = vunpack.c.l.b16 %v5097
  %v5181 = vunpack.c.h.b16 %v5097
  %v5182 = vunpack.c.l.b16 %v5098
  %v5183 = vunpack.c.h.b16 %v5098
  %v5184 = vunpack.c.l.b16 %v5099
  %v5185 = vunpack.c.h.b16 %v5099
  %v5186 = vunpack.c.l.b16 %v5100
  %v5187 = vunpack.c.h.b16 %v5100
  %v5188 = vunpack.c.l.b16 %v5101
  %v5189 = vunpack.c.h.b16 %v5101
  %v5190 = vunpack.c.l.b16 %v5102
  %v5191 = vunpack.c.h.b16 %v5102
  %v5192 = vunpack.c.l.b16 %v5103
  %v5193 = vunpack.c.h.b16 %v5103
  %v5194 = vpack.c.b16 %v5136, %v5134
  %v5195 = vpack.c.b16 %v5137, %v5135
  %v5196 = vpack.c.b16 %v5140, %v5138
  %v5197 = vpack.c.b16 %v5141, %v5139
  %v5198 = vpack.c.b16 %v5144, %v5142
  %v5199 = vpack.c.b16 %v5145, %v5143
  %v5200 = vpack.c.b16 %v5148, %v5146
  %v5201 = vpack.c.b16 %v5149, %v5147
  %v5202 = vpack.c.b16 %v5152, %v5150
  %v5203 = vpack.c.b16 %v5153, %v5151
  %v5204 = vpack.c.b16 %v5156, %v5154
  %v5205 = vpack.c.b16 %v5157, %v5155
  %v5206 = vpack.c.b16 %v5160, %v5158
  %v5207 = vpack.c.b16 %v5161, %v5159
  %v5208 = vpack.c.b16 %v5164, %v5162
  %v5209 = vpack.c.b16 %v5165, %v5163
  %v5210 = vpack.c.b16 %v5168, %v5166
  %v5211 = vpack.c.b16 %v5169, %v5167
  %v5212 = vpack.c.b16 %v5172, %v5170
  %v5213 = vpack.c.b16 %v5173, %v5171
  %v5214 = vpack.c.b16 %v5176, %v5174
  %v5215 = vpack.c.b16 %v5177, %v5175
  %v5216 = vpack.c.b16 %v5180, %v5178
  %v5217 = vpack.c.b16 %v5181, %v5179
  %v5218 = vpack.c.b16 %v5184, %v5182
  %v5219 = vpack.c.b16 %v5185, %v5183
  %v5220 = vpack.c.b16 %v5188, %v5186
  %v5221 = vpack.c.b16 %v5189, %v5187
  %v5222 = vpack.c.b16 %v5192, %v5190
  %v5223 = vpack.c.b16 %v5193, %v5191
  %5254 = vmatpush.bf16.msra.mxu0 %v5208
  %5255 = vmatpush.bf16.msra.mxu0 %v5206
  %5256 = vmatpush.bf16.msra.mxu0 %v5204
  %5257 = vmatpush.bf16.msra.mxu0 %v5202
  %5258 = vmatpush.bf16.msra.mxu0 %v5200
  %5259 = vmatpush.bf16.msra.mxu0 %v5198
  %5260 = vmatpush.bf16.msra.mxu0 %v5196
  %5261 = vmatpush.bf16.msra.mxu0 %v5194
  %5262 = vmatmul.bf16.gmra.mxu0 %v2833
  %v5263 = vpop.f32.mrf.mxu0
  %v5264 = vadd.f32 0.0, %v5263
  %v5265 = vpop.f32.mrf.mxu0
  %v5266 = vadd.f32 0.0, %v5265
  %5267 = vmatmul.bf16.gmra.mxu0 %v2835
  %v5268 = vpop.f32.mrf.mxu0
  %v5269 = vadd.f32 0.0, %v5268
  %v5270 = vpop.f32.mrf.mxu0
  %v5271 = vadd.f32 0.0, %v5270
  %5272 = vmatmul.bf16.gmra.mxu0 %v2837
  %v5273 = vpop.f32.mrf.mxu0
  %v5274 = vadd.f32 0.0, %v5273
  %v5275 = vpop.f32.mrf.mxu0
  %v5276 = vadd.f32 0.0, %v5275
  %5277 = vmatmul.bf16.gmra.mxu0 %v3482
  %v5278 = vpop.f32.mrf.mxu0
  %v5279 = vadd.f32 0.0, %v5278
  %v5280 = vpop.f32.mrf.mxu0
  %v5281 = vadd.f32 0.0, %v5280
  %5282 = vdwg.mxu0
  %5283 = vmatpush.bf16.msra.mxu0 0
  %5284 = vmatpush.bf16.msra.mxu0 %v5222
  %5285 = vmatpush.bf16.msra.mxu0 %v5220
  %5286 = vmatpush.bf16.msra.mxu0 %v5218
  %5287 = vmatpush.bf16.msra.mxu0 %v5216
  %5288 = vmatpush.bf16.msra.mxu0 %v5214
  %5289 = vmatpush.bf16.msra.mxu0 %v5212
  %5290 = vmatpush.bf16.msra.mxu0 %v5210
  %5291 = vmatmul.bf16.gmra.mxu0 %v3024
  %v5292 = vpop.f32.mrf.mxu0
  %v5293 = vadd.f32 %v5264, %v5292
  %v5294 = vpop.f32.mrf.mxu0
  %v5295 = vadd.f32 %v5266, %v5294
  %5296 = vmatmul.bf16.gmra.mxu0 %v3027
  %v5297 = vpop.f32.mrf.mxu0
  %v5298 = vadd.f32 %v5269, %v5297
  %v5299 = vpop.f32.mrf.mxu0
  %v5300 = vadd.f32 %v5271, %v5299
  %5301 = vmatmul.bf16.gmra.mxu0 %v3030
  %v5302 = vpop.f32.mrf.mxu0
  %v5303 = vadd.f32 %v5274, %v5302
  %v5304 = vpop.f32.mrf.mxu0
  %v5305 = vadd.f32 %v5276, %v5304
  %5306 = vmatmul.bf16.gmra.mxu0 %v3666
  %v5307 = vpop.f32.mrf.mxu0
  %v5308 = vadd.f32 %v5279, %v5307
  %v5309 = vpop.f32.mrf.mxu0
  %v5310 = vadd.f32 %v5281, %v5309
  %5311 = vdwg.mxu0
  %5312 = vmatpush.bf16.msra.mxu0 %v5209
  %5313 = vmatpush.bf16.msra.mxu0 %v5207
  %5314 = vmatpush.bf16.msra.mxu0 %v5205
  %5315 = vmatpush.bf16.msra.mxu0 %v5203
  %5316 = vmatpush.bf16.msra.mxu0 %v5201
  %5317 = vmatpush.bf16.msra.mxu0 %v5199
  %5318 = vmatpush.bf16.msra.mxu0 %v5197
  %5319 = vmatpush.bf16.msra.mxu0 %v5195
  %5320 = vmatmul.bf16.gmra.mxu0 %v2833
  %v5321 = vpop.f32.mrf.mxu0
  %v5322 = vadd.f32 0.0, %v5321
  %v5323 = vpop.f32.mrf.mxu0
  %v5324 = vadd.f32 0.0, %v5323
  %5325 = vmatmul.bf16.gmra.mxu0 %v2835
  %v5326 = vpop.f32.mrf.mxu0
  %v5327 = vadd.f32 0.0, %v5326
  %v5328 = vpop.f32.mrf.mxu0
  %v5329 = vadd.f32 0.0, %v5328
  %5330 = vmatmul.bf16.gmra.mxu0 %v2837
  %v5331 = vpop.f32.mrf.mxu0
  %v5332 = vadd.f32 0.0, %v5331
  %v5333 = vpop.f32.mrf.mxu0
  %v5334 = vadd.f32 0.0, %v5333
  %5335 = vmatmul.bf16.gmra.mxu0 %v3482
  %v5336 = vpop.f32.mrf.mxu0
  %v5337 = vadd.f32 0.0, %v5336
  %v5338 = vpop.f32.mrf.mxu0
  %v5339 = vadd.f32 0.0, %v5338
  %5340 = vdwg.mxu0
  %5341 = vmatpush.bf16.msra.mxu0 0
  %5342 = vmatpush.bf16.msra.mxu0 %v5223
  %5343 = vmatpush.bf16.msra.mxu0 %v5221
  %5344 = vmatpush.bf16.msra.mxu0 %v5219
  %5345 = vmatpush.bf16.msra.mxu0 %v5217
  %5346 = vmatpush.bf16.msra.mxu0 %v5215
  %5347 = vmatpush.bf16.msra.mxu0 %v5213
  %5348 = vmatpush.bf16.msra.mxu0 %v5211
  %5349 = vmatmul.bf16.gmra.mxu0 %v3024
  %v5350 = vpop.f32.mrf.mxu0
  %v5351 = vadd.f32 %v5322, %v5350
  %v5352 = vpop.f32.mrf.mxu0
  %v5353 = vadd.f32 %v5324, %v5352
  %5354 = vmatmul.bf16.gmra.mxu0 %v3027
  %v5355 = vpop.f32.mrf.mxu0
  %v5356 = vadd.f32 %v5327, %v5355
  %v5357 = vpop.f32.mrf.mxu0
  %v5358 = vadd.f32 %v5329, %v5357
  %5359 = vmatmul.bf16.gmra.mxu0 %v3030
  %v5360 = vpop.f32.mrf.mxu0
  %v5361 = vadd.f32 %v5332, %v5360
  %v5362 = vpop.f32.mrf.mxu0
  %v5363 = vadd.f32 %v5334, %v5362
  %5364 = vmatmul.bf16.gmra.mxu0 %v3666
  %v5365 = vpop.f32.mrf.mxu0
  %v5366 = vadd.f32 %v5337, %v5365
  %v5367 = vpop.f32.mrf.mxu0
  %v5368 = vadd.f32 %v5339, %v5367
  %5369 = vdwg.mxu0
  %v5370 = vadd.f32 %v5057, %v5293
  %v5371 = vadd.f32 %v5058, %v5351
  %v5372 = vadd.f32 %v5059, %v5295
  %v5373 = vadd.f32 %v5060, %v5353
  %v5374 = vadd.f32 %v5061, %v5298
  %v5375 = vadd.f32 %v5062, %v5356
  %v5376 = vadd.f32 %v5063, %v5300
  %v5377 = vadd.f32 %v5064, %v5358
  %v5378 = vadd.f32 %v5065, %v5303
  %v5379 = vadd.f32 %v5066, %v5361
  %v5380 = vadd.f32 %v5067, %v5305
  %v5381 = vadd.f32 %v5068, %v5363
  %v5382 = vadd.f32 %v5069, %v5308
  %v5383 = vadd.f32 %v5070, %v5366
  %v5384 = vadd.f32 %v5071, %v5310
  %v5385 = vadd.f32 %v5072, %v5368
  %s5386 = scalar_lea.vmem %s3, 2160
  %v5387 = vld [vmem:[%s5386] sm:$0xff]
  %v5388 = vld [vmem:[%s5386 + $0x8] sm:$0xff]
  %v5389 = vld [vmem:[%s5386 + $0x10] sm:$0xff]
  %v5390 = vld [vmem:[%s5386 + $0x18] sm:$0xff]
  %v5391 = vld [vmem:[%s5386 + $0x20] sm:$0xff]
  %v5392 = vld [vmem:[%s5386 + $0x28] sm:$0xff]
  %v5393 = vld [vmem:[%s5386 + $0x30] sm:$0xff]
  %v5394 = vld [vmem:[%s5386 + $0x38] sm:$0xff]
  %v5395 = vld [vmem:[%s5386 + $0x40] sm:$0xff]
  %v5396 = vld [vmem:[%s5386 + $0x48] sm:$0xff]
  %v5397 = vld [vmem:[%s5386 + $0x50] sm:$0xff]
  %v5398 = vld [vmem:[%s5386 + $0x58] sm:$0xff]
  %v5399 = vld [vmem:[%s5386 + $0x60] sm:$0xff]
  %v5400 = vld [vmem:[%s5386 + $0x68] sm:$0xff]
  %v5401 = vld [vmem:[%s5386 + $0x70] sm:$0xff]
  %v5402 = vld [vmem:[%s5386 + $0x78] sm:$0xff]
  %v5403 = vld [vmem:[%s5386 + $0x80] sm:$0xff]
  %v5404 = vld [vmem:[%s5386 + $0x88] sm:$0xff]
  %v5405 = vld [vmem:[%s5386 + $0x90] sm:$0xff]
  %v5406 = vld [vmem:[%s5386 + $0x98] sm:$0xff]
  %v5407 = vld [vmem:[%s5386 + $0xa0] sm:$0xff]
  %v5408 = vld [vmem:[%s5386 + $0xa8] sm:$0xff]
  %v5409 = vld [vmem:[%s5386 + $0xb0] sm:$0xff]
  %v5410 = vld [vmem:[%s5386 + $0xb8] sm:$0xff]
  %v5411 = vld [vmem:[%s5386 + $0xc0] sm:$0xff]
  %v5412 = vld [vmem:[%s5386 + $0xc8] sm:$0xff]
  %v5413 = vld [vmem:[%s5386 + $0xd0] sm:$0xff]
  %v5414 = vld [vmem:[%s5386 + $0xd8] sm:$0xff]
  %v5415 = vld [vmem:[%s5386 + $0xe0] sm:$0xff]
  %v5416 = vld [vmem:[%s5386 + $0xe8] sm:$0xff]
  %v5447 = vunpack.c.l.b16 %v5387
  %v5448 = vunpack.c.h.b16 %v5387
  %v5449 = vunpack.c.l.b16 %v5388
  %v5450 = vunpack.c.h.b16 %v5388
  %v5451 = vunpack.c.l.b16 %v5389
  %v5452 = vunpack.c.h.b16 %v5389
  %v5453 = vunpack.c.l.b16 %v5390
  %v5454 = vunpack.c.h.b16 %v5390
  %v5455 = vunpack.c.l.b16 %v5391
  %v5456 = vunpack.c.h.b16 %v5391
  %v5457 = vunpack.c.l.b16 %v5392
  %v5458 = vunpack.c.h.b16 %v5392
  %v5459 = vunpack.c.l.b16 %v5393
  %v5460 = vunpack.c.h.b16 %v5393
  %v5461 = vunpack.c.l.b16 %v5394
  %v5462 = vunpack.c.h.b16 %v5394
  %v5463 = vunpack.c.l.b16 %v5395
  %v5464 = vunpack.c.h.b16 %v5395
  %v5465 = vunpack.c.l.b16 %v5396
  %v5466 = vunpack.c.h.b16 %v5396
  %v5467 = vunpack.c.l.b16 %v5397
  %v5468 = vunpack.c.h.b16 %v5397
  %v5469 = vunpack.c.l.b16 %v5398
  %v5470 = vunpack.c.h.b16 %v5398
  %v5471 = vunpack.c.l.b16 %v5399
  %v5472 = vunpack.c.h.b16 %v5399
  %v5473 = vunpack.c.l.b16 %v5400
  %v5474 = vunpack.c.h.b16 %v5400
  %v5475 = vunpack.c.l.b16 %v5401
  %v5476 = vunpack.c.h.b16 %v5401
  %v5477 = vunpack.c.l.b16 %v5402
  %v5478 = vunpack.c.h.b16 %v5402
  %v5479 = vunpack.c.l.b16 %v5403
  %v5480 = vunpack.c.h.b16 %v5403
  %v5481 = vunpack.c.l.b16 %v5404
  %v5482 = vunpack.c.h.b16 %v5404
  %v5483 = vunpack.c.l.b16 %v5405
  %v5484 = vunpack.c.h.b16 %v5405
  %v5485 = vunpack.c.l.b16 %v5406
  %v5486 = vunpack.c.h.b16 %v5406
  %v5487 = vunpack.c.l.b16 %v5407
  %v5488 = vunpack.c.h.b16 %v5407
  %v5489 = vunpack.c.l.b16 %v5408
  %v5490 = vunpack.c.h.b16 %v5408
  %v5491 = vunpack.c.l.b16 %v5409
  %v5492 = vunpack.c.h.b16 %v5409
  %v5493 = vunpack.c.l.b16 %v5410
  %v5494 = vunpack.c.h.b16 %v5410
  %v5495 = vunpack.c.l.b16 %v5411
  %v5496 = vunpack.c.h.b16 %v5411
  %v5497 = vunpack.c.l.b16 %v5412
  %v5498 = vunpack.c.h.b16 %v5412
  %v5499 = vunpack.c.l.b16 %v5413
  %v5500 = vunpack.c.h.b16 %v5413
  %v5501 = vunpack.c.l.b16 %v5414
  %v5502 = vunpack.c.h.b16 %v5414
  %v5503 = vunpack.c.l.b16 %v5415
  %v5504 = vunpack.c.h.b16 %v5415
  %v5505 = vunpack.c.l.b16 %v5416
  %v5506 = vunpack.c.h.b16 %v5416
  %v5507 = vpack.c.b16 %v5449, %v5447
  %v5508 = vpack.c.b16 %v5450, %v5448
  %v5509 = vpack.c.b16 %v5453, %v5451
  %v5510 = vpack.c.b16 %v5454, %v5452
  %v5511 = vpack.c.b16 %v5457, %v5455
  %v5512 = vpack.c.b16 %v5458, %v5456
  %v5513 = vpack.c.b16 %v5461, %v5459
  %v5514 = vpack.c.b16 %v5462, %v5460
  %v5515 = vpack.c.b16 %v5465, %v5463
  %v5516 = vpack.c.b16 %v5466, %v5464
  %v5517 = vpack.c.b16 %v5469, %v5467
  %v5518 = vpack.c.b16 %v5470, %v5468
  %v5519 = vpack.c.b16 %v5473, %v5471
  %v5520 = vpack.c.b16 %v5474, %v5472
  %v5521 = vpack.c.b16 %v5477, %v5475
  %v5522 = vpack.c.b16 %v5478, %v5476
  %v5523 = vpack.c.b16 %v5481, %v5479
  %v5524 = vpack.c.b16 %v5482, %v5480
  %v5525 = vpack.c.b16 %v5485, %v5483
  %v5526 = vpack.c.b16 %v5486, %v5484
  %v5527 = vpack.c.b16 %v5489, %v5487
  %v5528 = vpack.c.b16 %v5490, %v5488
  %v5529 = vpack.c.b16 %v5493, %v5491
  %v5530 = vpack.c.b16 %v5494, %v5492
  %v5531 = vpack.c.b16 %v5497, %v5495
  %v5532 = vpack.c.b16 %v5498, %v5496
  %v5533 = vpack.c.b16 %v5501, %v5499
  %v5534 = vpack.c.b16 %v5502, %v5500
  %v5535 = vpack.c.b16 %v5505, %v5503
  %v5536 = vpack.c.b16 %v5506, %v5504
  %5567 = vmatpush.bf16.msra.mxu0 %v5521
  %5568 = vmatpush.bf16.msra.mxu0 %v5519
  %5569 = vmatpush.bf16.msra.mxu0 %v5517
  %5570 = vmatpush.bf16.msra.mxu0 %v5515
  %5571 = vmatpush.bf16.msra.mxu0 %v5513
  %5572 = vmatpush.bf16.msra.mxu0 %v5511
  %5573 = vmatpush.bf16.msra.mxu0 %v5509
  %5574 = vmatpush.bf16.msra.mxu0 %v5507
  %5575 = vmatmul.bf16.gmra.mxu0 %v2502
  %v5576 = vpop.f32.mrf.mxu0
  %v5577 = vadd.f32 0.0, %v5576
  %v5578 = vpop.f32.mrf.mxu0
  %v5579 = vadd.f32 0.0, %v5578
  %5580 = vmatmul.bf16.gmra.mxu0 %v2504
  %v5581 = vpop.f32.mrf.mxu0
  %v5582 = vadd.f32 0.0, %v5581
  %v5583 = vpop.f32.mrf.mxu0
  %v5584 = vadd.f32 0.0, %v5583
  %5585 = vmatmul.bf16.gmra.mxu0 %v3164
  %v5586 = vpop.f32.mrf.mxu0
  %v5587 = vadd.f32 0.0, %v5586
  %v5588 = vpop.f32.mrf.mxu0
  %v5589 = vadd.f32 0.0, %v5588
  %5590 = vmatmul.bf16.gmra.mxu0 %v3800
  %v5591 = vpop.f32.mrf.mxu0
  %v5592 = vadd.f32 0.0, %v5591
  %v5593 = vpop.f32.mrf.mxu0
  %v5594 = vadd.f32 0.0, %v5593
  %5595 = vdwg.mxu0
  %5596 = vmatpush.bf16.msra.mxu0 0
  %5597 = vmatpush.bf16.msra.mxu0 %v5535
  %5598 = vmatpush.bf16.msra.mxu0 %v5533
  %5599 = vmatpush.bf16.msra.mxu0 %v5531
  %5600 = vmatpush.bf16.msra.mxu0 %v5529
  %5601 = vmatpush.bf16.msra.mxu0 %v5527
  %5602 = vmatpush.bf16.msra.mxu0 %v5525
  %5603 = vmatpush.bf16.msra.mxu0 %v5523
  %5604 = vmatmul.bf16.gmra.mxu0 %v2694
  %v5605 = vpop.f32.mrf.mxu0
  %v5606 = vadd.f32 %v5577, %v5605
  %v5607 = vpop.f32.mrf.mxu0
  %v5608 = vadd.f32 %v5579, %v5607
  %5609 = vmatmul.bf16.gmra.mxu0 %v2697
  %v5610 = vpop.f32.mrf.mxu0
  %v5611 = vadd.f32 %v5582, %v5610
  %v5612 = vpop.f32.mrf.mxu0
  %v5613 = vadd.f32 %v5584, %v5612
  %5614 = vmatmul.bf16.gmra.mxu0 %v3348
  %v5615 = vpop.f32.mrf.mxu0
  %v5616 = vadd.f32 %v5587, %v5615
  %v5617 = vpop.f32.mrf.mxu0
  %v5618 = vadd.f32 %v5589, %v5617
  %5619 = vmatmul.bf16.gmra.mxu0 %v3984
  %v5620 = vpop.f32.mrf.mxu0
  %v5621 = vadd.f32 %v5592, %v5620
  %v5622 = vpop.f32.mrf.mxu0
  %v5623 = vadd.f32 %v5594, %v5622
  %5624 = vdwg.mxu0
  %5625 = vmatpush.bf16.msra.mxu0 %v5522
  %5626 = vmatpush.bf16.msra.mxu0 %v5520
  %5627 = vmatpush.bf16.msra.mxu0 %v5518
  %5628 = vmatpush.bf16.msra.mxu0 %v5516
  %5629 = vmatpush.bf16.msra.mxu0 %v5514
  %5630 = vmatpush.bf16.msra.mxu0 %v5512
  %5631 = vmatpush.bf16.msra.mxu0 %v5510
  %5632 = vmatpush.bf16.msra.mxu0 %v5508
  %5633 = vmatmul.bf16.gmra.mxu0 %v2502
  %v5634 = vpop.f32.mrf.mxu0
  %v5635 = vadd.f32 0.0, %v5634
  %v5636 = vpop.f32.mrf.mxu0
  %v5637 = vadd.f32 0.0, %v5636
  %5638 = vmatmul.bf16.gmra.mxu0 %v2504
  %v5639 = vpop.f32.mrf.mxu0
  %v5640 = vadd.f32 0.0, %v5639
  %v5641 = vpop.f32.mrf.mxu0
  %v5642 = vadd.f32 0.0, %v5641
  %5643 = vmatmul.bf16.gmra.mxu0 %v3164
  %v5644 = vpop.f32.mrf.mxu0
  %v5645 = vadd.f32 0.0, %v5644
  %v5646 = vpop.f32.mrf.mxu0
  %v5647 = vadd.f32 0.0, %v5646
  %5648 = vmatmul.bf16.gmra.mxu0 %v3800
  %v5649 = vpop.f32.mrf.mxu0
  %v5650 = vadd.f32 0.0, %v5649
  %v5651 = vpop.f32.mrf.mxu0
  %v5652 = vadd.f32 0.0, %v5651
  %5653 = vdwg.mxu0
  %5654 = vmatpush.bf16.msra.mxu0 0
  %5655 = vmatpush.bf16.msra.mxu0 %v5536
  %5656 = vmatpush.bf16.msra.mxu0 %v5534
  %5657 = vmatpush.bf16.msra.mxu0 %v5532
  %5658 = vmatpush.bf16.msra.mxu0 %v5530
  %5659 = vmatpush.bf16.msra.mxu0 %v5528
  %5660 = vmatpush.bf16.msra.mxu0 %v5526
  %5661 = vmatpush.bf16.msra.mxu0 %v5524
  %5662 = vmatmul.bf16.gmra.mxu0 %v2694
  %v5663 = vpop.f32.mrf.mxu0
  %v5664 = vadd.f32 %v5635, %v5663
  %v5665 = vpop.f32.mrf.mxu0
  %v5666 = vadd.f32 %v5637, %v5665
  %5667 = vmatmul.bf16.gmra.mxu0 %v2697
  %v5668 = vpop.f32.mrf.mxu0
  %v5669 = vadd.f32 %v5640, %v5668
  %v5670 = vpop.f32.mrf.mxu0
  %v5671 = vadd.f32 %v5642, %v5670
  %5672 = vmatmul.bf16.gmra.mxu0 %v3348
  %v5673 = vpop.f32.mrf.mxu0
  %v5674 = vadd.f32 %v5645, %v5673
  %v5675 = vpop.f32.mrf.mxu0
  %v5676 = vadd.f32 %v5647, %v5675
  %5677 = vmatmul.bf16.gmra.mxu0 %v3984
  %v5678 = vpop.f32.mrf.mxu0
  %v5679 = vadd.f32 %v5650, %v5678
  %v5680 = vpop.f32.mrf.mxu0
  %v5681 = vadd.f32 %v5652, %v5680
  %5682 = vdwg.mxu0
  %v5683 = vadd.f32 %v5370, %v5606
  %v5684 = vadd.f32 %v5371, %v5664
  %v5685 = vadd.f32 %v5372, %v5608
  %v5686 = vadd.f32 %v5373, %v5666
  %v5687 = vadd.f32 %v5374, %v5611
  %v5688 = vadd.f32 %v5375, %v5669
  %v5689 = vadd.f32 %v5376, %v5613
  %v5690 = vadd.f32 %v5377, %v5671
  %v5691 = vadd.f32 %v5378, %v5616
  %v5692 = vadd.f32 %v5379, %v5674
  %v5693 = vadd.f32 %v5380, %v5618
  %v5694 = vadd.f32 %v5381, %v5676
  %v5695 = vadd.f32 %v5382, %v5621
  %v5696 = vadd.f32 %v5383, %v5679
  %v5697 = vadd.f32 %v5384, %v5623
  %v5698 = vadd.f32 %v5385, %v5681
  %v5699 = vmax.f32 %v5683, 0.0
  %v5700 = vmax.f32 %v5684, 0.0
  %v5701 = vmax.f32 %v5685, 0.0
  %v5702 = vmax.f32 %v5686, 0.0
  %v5703 = vmax.f32 %v5687, 0.0
  %v5704 = vmax.f32 %v5688, 0.0
  %v5705 = vmax.f32 %v5689, 0.0
  %v5706 = vmax.f32 %v5690, 0.0
  %v5707 = vmax.f32 %v5691, 0.0
  %v5708 = vmax.f32 %v5692, 0.0
  %v5709 = vmax.f32 %v5693, 0.0
  %v5710 = vmax.f32 %v5694, 0.0
  %v5711 = vmax.f32 %v5695, 0.0
  %v5712 = vmax.f32 %v5696, 0.0
  %v5713 = vmax.f32 %v5697, 0.0
  %v5714 = vmax.f32 %v5698, 0.0
  %v5715 = vmax.f32 %v4118, %v5699
  %v5716 = vmax.f32 %v4119, %v5700
  %v5717 = vmax.f32 %v4120, %v5701
  %v5718 = vmax.f32 %v4121, %v5702
  %v5719 = vmax.f32 %v4122, %v5703
  %v5720 = vmax.f32 %v4123, %v5704
  %v5721 = vmax.f32 %v4124, %v5705
  %v5722 = vmax.f32 %v4125, %v5706
  %v5723 = vmax.f32 %v4126, %v5707
  %v5724 = vmax.f32 %v4127, %v5708
  %v5725 = vmax.f32 %v4128, %v5709
  %v5726 = vmax.f32 %v4129, %v5710
  %v5727 = vmax.f32 %v4130, %v5711
  %v5728 = vmax.f32 %v4131, %v5712
  %v5729 = vmax.f32 %v4132, %v5713
  %v5730 = vmax.f32 %v4133, %v5714
  %v5731 = vmax.f32 %v5715, %v5717
  %v5732 = vmax.f32 %v5716, %v5718
  %v5733 = vmax.f32 %v5719, %v5721
  %v5734 = vmax.f32 %v5720, %v5722
  %v5735 = vmax.f32 %v5723, %v5725
  %v5736 = vmax.f32 %v5724, %v5726
  %v5737 = vmax.f32 %v5727, %v5729
  %v5738 = vmax.f32 %v5728, %v5730
  %v5739 = vld [vmem:[%s6] sm:$0x1]
  %v5741 = vperm.slane %v5739, 0
  %v5743 = vadd.f32 %v5741, 0.0
  %v5744 = vpack.c.bf16 %v5731, %v5731
  %v5745 = vpack.c.bf16 %v5732, %v5732
  %v5746 = vld [vmem:[%s5] sm:$0xf]
  %v5747 = vld [vmem:[%s5 + $0x4] sm:$0xf]
  %v5748 = vld [vmem:[%s5 + $0x8] sm:$0xf]
  %v5749 = vld [vmem:[%s5 + $0xc] sm:$0xf]
  %v5750 = vld [vmem:[%s5 + $0x10] sm:$0xf]
  %v5751 = vld [vmem:[%s5 + $0x14] sm:$0xf]
  %v5752 = vld [vmem:[%s5 + $0x18] sm:$0xf]
  %v5753 = vld [vmem:[%s5 + $0x1c] sm:$0xf]
  %v5754 = vld [vmem:[%s5 + $0x20] sm:$0xf]
  %v5755 = vld [vmem:[%s5 + $0x24] sm:$0xf]
  %v5756 = vld [vmem:[%s5 + $0x28] sm:$0xf]
  %v5757 = vld [vmem:[%s5 + $0x2c] sm:$0xf]
  %v5758 = vld [vmem:[%s5 + $0x30] sm:$0xf]
  %v5759 = vld [vmem:[%s5 + $0x34] sm:$0xf]
  %v5760 = vld [vmem:[%s5 + $0x38] sm:$0xf]
  %v5761 = vld [vmem:[%s5 + $0x3c] sm:$0xf]
  %v5762 = vld [vmem:[%s5 + $0x40] sm:$0xf]
  %v5763 = vld [vmem:[%s5 + $0x44] sm:$0xf]
  %v5764 = vld [vmem:[%s5 + $0x48] sm:$0xf]
  %v5765 = vld [vmem:[%s5 + $0x4c] sm:$0xf]
  %v5766 = vld [vmem:[%s5 + $0x50] sm:$0xf]
  %v5767 = vld [vmem:[%s5 + $0x54] sm:$0xf]
  %v5768 = vld [vmem:[%s5 + $0x58] sm:$0xf]
  %v5769 = vld [vmem:[%s5 + $0x5c] sm:$0xf]
  %v5770 = vld [vmem:[%s5 + $0x60] sm:$0xf]
  %v5796 = vunpack.c.l.b16 %v5746
  %v5797 = vunpack.c.l.b16 %v5747
  %v5798 = vunpack.c.l.b16 %v5748
  %v5799 = vunpack.c.l.b16 %v5749
  %v5800 = vunpack.c.l.b16 %v5750
  %v5801 = vunpack.c.l.b16 %v5751
  %v5802 = vunpack.c.l.b16 %v5752
  %v5803 = vunpack.c.l.b16 %v5753
  %v5804 = vunpack.c.l.b16 %v5754
  %v5805 = vunpack.c.l.b16 %v5755
  %v5806 = vunpack.c.l.b16 %v5756
  %v5807 = vunpack.c.l.b16 %v5757
  %v5808 = vunpack.c.l.b16 %v5758
  %v5809 = vunpack.c.l.b16 %v5759
  %v5810 = vunpack.c.l.b16 %v5760
  %v5811 = vunpack.c.l.b16 %v5761
  %v5812 = vunpack.c.l.b16 %v5762
  %v5813 = vunpack.c.l.b16 %v5763
  %v5814 = vunpack.c.l.b16 %v5764
  %v5815 = vunpack.c.l.b16 %v5765
  %v5816 = vunpack.c.l.b16 %v5766
  %v5817 = vunpack.c.l.b16 %v5767
  %v5818 = vunpack.c.l.b16 %v5768
  %v5819 = vunpack.c.l.b16 %v5769
  %v5820 = vunpack.c.l.b16 %v5770
  %v5821 = vpack.c.b16 %v5797, %v5796
  %v5822 = vpack.c.b16 %v5799, %v5798
  %v5823 = vpack.c.b16 %v5801, %v5800
  %v5824 = vpack.c.b16 %v5803, %v5802
  %v5825 = vpack.c.b16 %v5805, %v5804
  %v5826 = vpack.c.b16 %v5807, %v5806
  %v5827 = vpack.c.b16 %v5809, %v5808
  %v5828 = vpack.c.b16 %v5811, %v5810
  %v5829 = vpack.c.b16 %v5813, %v5812
  %v5830 = vpack.c.b16 %v5815, %v5814
  %v5831 = vpack.c.b16 %v5817, %v5816
  %v5832 = vpack.c.b16 %v5819, %v5818
  %v5833 = vpack.c.b16 %v5820, %v5820
  %vm5846 = vcmask 588800
  %v5848 = vsel %vm5846, %v5745, 0
  %vm5850 = vcmask 1043456
  %v5852 = vsel %vm5850, %v5833, 0
  %5854 = vmatpush.bf16.msra.mxu0 %v5828
  %5855 = vmatpush.bf16.msra.mxu0 %v5827
  %5856 = vmatpush.bf16.msra.mxu0 %v5826
  %5857 = vmatpush.bf16.msra.mxu0 %v5825
  %5858 = vmatpush.bf16.msra.mxu0 %v5824
  %5859 = vmatpush.bf16.msra.mxu0 %v5823
  %5860 = vmatpush.bf16.msra.mxu0 %v5822
  %5861 = vmatpush.bf16.msra.mxu0 %v5821
  %5862 = vmatmul.bf16.gmra.mxu0 %v5744
  %v5863 = vpop.f32.mrf.mxu0
  %v5864 = vadd.f32 0.0, %v5863
  %v5865 = vpop.f32.mrf.mxu0
  %5866 = vdwg.mxu0
  %5867 = vmatpush.bf16.msra.mxu0 0
  %5868 = vmatpush.bf16.msra.mxu0 0
  %5869 = vmatpush.bf16.msra.mxu0 0
  %5870 = vmatpush.bf16.msra.mxu0 %v5852
  %5871 = vmatpush.bf16.msra.mxu0 %v5832
  %5872 = vmatpush.bf16.msra.mxu0 %v5831
  %5873 = vmatpush.bf16.msra.mxu0 %v5830
  %5874 = vmatpush.bf16.msra.mxu0 %v5829
  %5875 = vmatmul.bf16.gmra.mxu0 %v5848
  %v5876 = vpop.f32.mrf.mxu0
  %v5877 = vadd.f32 %v5864, %v5876
  %v5878 = vpop.f32.mrf.mxu0
  %5879 = vdwg.mxu0
  %v5880 = vadd.f32 %v5743, %v5877
  %v5881 = vpack.c.bf16 %v5733, %v5733
  %v5882 = vpack.c.bf16 %v5734, %v5734
  %s5883 = scalar_lea.vmem %s5, 100
  %v5884 = vld [vmem:[%s5883] sm:$0xf]
  %v5885 = vld [vmem:[%s5883 + $0x4] sm:$0xf]
  %v5886 = vld [vmem:[%s5883 + $0x8] sm:$0xf]
  %v5887 = vld [vmem:[%s5883 + $0xc] sm:$0xf]
  %v5888 = vld [vmem:[%s5883 + $0x10] sm:$0xf]
  %v5889 = vld [vmem:[%s5883 + $0x14] sm:$0xf]
  %v5890 = vld [vmem:[%s5883 + $0x18] sm:$0xf]
  %v5891 = vld [vmem:[%s5883 + $0x1c] sm:$0xf]
  %v5892 = vld [vmem:[%s5883 + $0x20] sm:$0xf]
  %v5893 = vld [vmem:[%s5883 + $0x24] sm:$0xf]
  %v5894 = vld [vmem:[%s5883 + $0x28] sm:$0xf]
  %v5895 = vld [vmem:[%s5883 + $0x2c] sm:$0xf]
  %v5896 = vld [vmem:[%s5883 + $0x30] sm:$0xf]
  %v5897 = vld [vmem:[%s5883 + $0x34] sm:$0xf]
  %v5898 = vld [vmem:[%s5883 + $0x38] sm:$0xf]
  %v5899 = vld [vmem:[%s5883 + $0x3c] sm:$0xf]
  %v5900 = vld [vmem:[%s5883 + $0x40] sm:$0xf]
  %v5901 = vld [vmem:[%s5883 + $0x44] sm:$0xf]
  %v5902 = vld [vmem:[%s5883 + $0x48] sm:$0xf]
  %v5903 = vld [vmem:[%s5883 + $0x4c] sm:$0xf]
  %v5904 = vld [vmem:[%s5883 + $0x50] sm:$0xf]
  %v5905 = vld [vmem:[%s5883 + $0x54] sm:$0xf]
  %v5906 = vld [vmem:[%s5883 + $0x58] sm:$0xf]
  %v5907 = vld [vmem:[%s5883 + $0x5c] sm:$0xf]
  %v5908 = vld [vmem:[%s5883 + $0x60] sm:$0xf]
  %v5934 = vunpack.c.l.b16 %v5884
  %v5935 = vunpack.c.l.b16 %v5885
  %v5936 = vunpack.c.l.b16 %v5886
  %v5937 = vunpack.c.l.b16 %v5887
  %v5938 = vunpack.c.l.b16 %v5888
  %v5939 = vunpack.c.l.b16 %v5889
  %v5940 = vunpack.c.l.b16 %v5890
  %v5941 = vunpack.c.l.b16 %v5891
  %v5942 = vunpack.c.l.b16 %v5892
  %v5943 = vunpack.c.l.b16 %v5893
  %v5944 = vunpack.c.l.b16 %v5894
  %v5945 = vunpack.c.l.b16 %v5895
  %v5946 = vunpack.c.l.b16 %v5896
  %v5947 = vunpack.c.l.b16 %v5897
  %v5948 = vunpack.c.l.b16 %v5898
  %v5949 = vunpack.c.l.b16 %v5899
  %v5950 = vunpack.c.l.b16 %v5900
  %v5951 = vunpack.c.l.b16 %v5901
  %v5952 = vunpack.c.l.b16 %v5902
  %v5953 = vunpack.c.l.b16 %v5903
  %v5954 = vunpack.c.l.b16 %v5904
  %v5955 = vunpack.c.l.b16 %v5905
  %v5956 = vunpack.c.l.b16 %v5906
  %v5957 = vunpack.c.l.b16 %v5907
  %v5958 = vunpack.c.l.b16 %v5908
  %v5959 = vpack.c.b16 %v5935, %v5934
  %v5960 = vpack.c.b16 %v5937, %v5936
  %v5961 = vpack.c.b16 %v5939, %v5938
  %v5962 = vpack.c.b16 %v5941, %v5940
  %v5963 = vpack.c.b16 %v5943, %v5942
  %v5964 = vpack.c.b16 %v5945, %v5944
  %v5965 = vpack.c.b16 %v5947, %v5946
  %v5966 = vpack.c.b16 %v5949, %v5948
  %v5967 = vpack.c.b16 %v5951, %v5950
  %v5968 = vpack.c.b16 %v5953, %v5952
  %v5969 = vpack.c.b16 %v5955, %v5954
  %v5970 = vpack.c.b16 %v5957, %v5956
  %v5971 = vpack.c.b16 %v5958, %v5958
  %v5985 = vsel %vm5846, %v5882, 0
  %v5988 = vsel %vm5850, %v5971, 0
  %5990 = vmatpush.bf16.msra.mxu0 %v5966
  %5991 = vmatpush.bf16.msra.mxu0 %v5965
  %5992 = vmatpush.bf16.msra.mxu0 %v5964
  %5993 = vmatpush.bf16.msra.mxu0 %v5963
  %5994 = vmatpush.bf16.msra.mxu0 %v5962
  %5995 = vmatpush.bf16.msra.mxu0 %v5961
  %5996 = vmatpush.bf16.msra.mxu0 %v5960
  %5997 = vmatpush.bf16.msra.mxu0 %v5959
  %5998 = vmatmul.bf16.gmra.mxu0 %v5881
  %v5999 = vpop.f32.mrf.mxu0
  %v6000 = vadd.f32 0.0, %v5999
  %v6001 = vpop.f32.mrf.mxu0
  %6002 = vdwg.mxu0
  %6003 = vmatpush.bf16.msra.mxu0 0
  %6004 = vmatpush.bf16.msra.mxu0 0
  %6005 = vmatpush.bf16.msra.mxu0 0
  %6006 = vmatpush.bf16.msra.mxu0 %v5988
  %6007 = vmatpush.bf16.msra.mxu0 %v5970
  %6008 = vmatpush.bf16.msra.mxu0 %v5969
  %6009 = vmatpush.bf16.msra.mxu0 %v5968
  %6010 = vmatpush.bf16.msra.mxu0 %v5967
  %6011 = vmatmul.bf16.gmra.mxu0 %v5985
  %v6012 = vpop.f32.mrf.mxu0
  %v6013 = vadd.f32 %v6000, %v6012
  %v6014 = vpop.f32.mrf.mxu0
  %6015 = vdwg.mxu0
  %v6016 = vadd.f32 %v5880, %v6013
  %v6017 = vpack.c.bf16 %v5735, %v5735
  %v6018 = vpack.c.bf16 %v5736, %v5736
  %s6019 = scalar_lea.vmem %s5, 200
  %v6020 = vld [vmem:[%s6019] sm:$0xf]
  %v6021 = vld [vmem:[%s6019 + $0x4] sm:$0xf]
  %v6022 = vld [vmem:[%s6019 + $0x8] sm:$0xf]
  %v6023 = vld [vmem:[%s6019 + $0xc] sm:$0xf]
  %v6024 = vld [vmem:[%s6019 + $0x10] sm:$0xf]
  %v6025 = vld [vmem:[%s6019 + $0x14] sm:$0xf]
  %v6026 = vld [vmem:[%s6019 + $0x18] sm:$0xf]
  %v6027 = vld [vmem:[%s6019 + $0x1c] sm:$0xf]
  %v6028 = vld [vmem:[%s6019 + $0x20] sm:$0xf]
  %v6029 = vld [vmem:[%s6019 + $0x24] sm:$0xf]
  %v6030 = vld [vmem:[%s6019 + $0x28] sm:$0xf]
  %v6031 = vld [vmem:[%s6019 + $0x2c] sm:$0xf]
  %v6032 = vld [vmem:[%s6019 + $0x30] sm:$0xf]
  %v6033 = vld [vmem:[%s6019 + $0x34] sm:$0xf]
  %v6034 = vld [vmem:[%s6019 + $0x38] sm:$0xf]
  %v6035 = vld [vmem:[%s6019 + $0x3c] sm:$0xf]
  %v6036 = vld [vmem:[%s6019 + $0x40] sm:$0xf]
  %v6037 = vld [vmem:[%s6019 + $0x44] sm:$0xf]
  %v6038 = vld [vmem:[%s6019 + $0x48] sm:$0xf]
  %v6039 = vld [vmem:[%s6019 + $0x4c] sm:$0xf]
  %v6040 = vld [vmem:[%s6019 + $0x50] sm:$0xf]
  %v6041 = vld [vmem:[%s6019 + $0x54] sm:$0xf]
  %v6042 = vld [vmem:[%s6019 + $0x58] sm:$0xf]
  %v6043 = vld [vmem:[%s6019 + $0x5c] sm:$0xf]
  %v6044 = vld [vmem:[%s6019 + $0x60] sm:$0xf]
  %v6070 = vunpack.c.l.b16 %v6020
  %v6071 = vunpack.c.l.b16 %v6021
  %v6072 = vunpack.c.l.b16 %v6022
  %v6073 = vunpack.c.l.b16 %v6023
  %v6074 = vunpack.c.l.b16 %v6024
  %v6075 = vunpack.c.l.b16 %v6025
  %v6076 = vunpack.c.l.b16 %v6026
  %v6077 = vunpack.c.l.b16 %v6027
  %v6078 = vunpack.c.l.b16 %v6028
  %v6079 = vunpack.c.l.b16 %v6029
  %v6080 = vunpack.c.l.b16 %v6030
  %v6081 = vunpack.c.l.b16 %v6031
  %v6082 = vunpack.c.l.b16 %v6032
  %v6083 = vunpack.c.l.b16 %v6033
  %v6084 = vunpack.c.l.b16 %v6034
  %v6085 = vunpack.c.l.b16 %v6035
  %v6086 = vunpack.c.l.b16 %v6036
  %v6087 = vunpack.c.l.b16 %v6037
  %v6088 = vunpack.c.l.b16 %v6038
  %v6089 = vunpack.c.l.b16 %v6039
  %v6090 = vunpack.c.l.b16 %v6040
  %v6091 = vunpack.c.l.b16 %v6041
  %v6092 = vunpack.c.l.b16 %v6042
  %v6093 = vunpack.c.l.b16 %v6043
  %v6094 = vunpack.c.l.b16 %v6044
  %v6095 = vpack.c.b16 %v6071, %v6070
  %v6096 = vpack.c.b16 %v6073, %v6072
  %v6097 = vpack.c.b16 %v6075, %v6074
  %v6098 = vpack.c.b16 %v6077, %v6076
  %v6099 = vpack.c.b16 %v6079, %v6078
  %v6100 = vpack.c.b16 %v6081, %v6080
  %v6101 = vpack.c.b16 %v6083, %v6082
  %v6102 = vpack.c.b16 %v6085, %v6084
  %v6103 = vpack.c.b16 %v6087, %v6086
  %v6104 = vpack.c.b16 %v6089, %v6088
  %v6105 = vpack.c.b16 %v6091, %v6090
  %v6106 = vpack.c.b16 %v6093, %v6092
  %v6107 = vpack.c.b16 %v6094, %v6094
  %v6121 = vsel %vm5846, %v6018, 0
  %v6124 = vsel %vm5850, %v6107, 0
  %6126 = vmatpush.bf16.msra.mxu0 %v6102
  %6127 = vmatpush.bf16.msra.mxu0 %v6101
  %6128 = vmatpush.bf16.msra.mxu0 %v6100
  %6129 = vmatpush.bf16.msra.mxu0 %v6099
  %6130 = vmatpush.bf16.msra.mxu0 %v6098
  %6131 = vmatpush.bf16.msra.mxu0 %v6097
  %6132 = vmatpush.bf16.msra.mxu0 %v6096
  %6133 = vmatpush.bf16.msra.mxu0 %v6095
  %6134 = vmatmul.bf16.gmra.mxu0 %v6017
  %v6135 = vpop.f32.mrf.mxu0
  %v6136 = vadd.f32 0.0, %v6135
  %v6137 = vpop.f32.mrf.mxu0
  %6138 = vdwg.mxu0
  %6139 = vmatpush.bf16.msra.mxu0 0
  %6140 = vmatpush.bf16.msra.mxu0 0
  %6141 = vmatpush.bf16.msra.mxu0 0
  %6142 = vmatpush.bf16.msra.mxu0 %v6124
  %6143 = vmatpush.bf16.msra.mxu0 %v6106
  %6144 = vmatpush.bf16.msra.mxu0 %v6105
  %6145 = vmatpush.bf16.msra.mxu0 %v6104
  %6146 = vmatpush.bf16.msra.mxu0 %v6103
  %6147 = vmatmul.bf16.gmra.mxu0 %v6121
  %v6148 = vpop.f32.mrf.mxu0
  %v6149 = vadd.f32 %v6136, %v6148
  %v6150 = vpop.f32.mrf.mxu0
  %6151 = vdwg.mxu0
  %v6152 = vadd.f32 %v6016, %v6149
  %v6153 = vpack.c.bf16 %v5737, %v5737
  %v6154 = vpack.c.bf16 %v5738, %v5738
  %s6155 = scalar_lea.vmem %s5, 300
  %v6156 = vld [vmem:[%s6155] sm:$0xf]
  %v6157 = vld [vmem:[%s6155 + $0x4] sm:$0xf]
  %v6158 = vld [vmem:[%s6155 + $0x8] sm:$0xf]
  %v6159 = vld [vmem:[%s6155 + $0xc] sm:$0xf]
  %v6160 = vld [vmem:[%s6155 + $0x10] sm:$0xf]
  %v6161 = vld [vmem:[%s6155 + $0x14] sm:$0xf]
  %v6162 = vld [vmem:[%s6155 + $0x18] sm:$0xf]
  %v6163 = vld [vmem:[%s6155 + $0x1c] sm:$0xf]
  %v6164 = vld [vmem:[%s6155 + $0x20] sm:$0xf]
  %v6165 = vld [vmem:[%s6155 + $0x24] sm:$0xf]
  %v6166 = vld [vmem:[%s6155 + $0x28] sm:$0xf]
  %v6167 = vld [vmem:[%s6155 + $0x2c] sm:$0xf]
  %v6168 = vld [vmem:[%s6155 + $0x30] sm:$0xf]
  %v6169 = vld [vmem:[%s6155 + $0x34] sm:$0xf]
  %v6170 = vld [vmem:[%s6155 + $0x38] sm:$0xf]
  %v6171 = vld [vmem:[%s6155 + $0x3c] sm:$0xf]
  %v6172 = vld [vmem:[%s6155 + $0x40] sm:$0xf]
  %v6173 = vld [vmem:[%s6155 + $0x44] sm:$0xf]
  %v6174 = vld [vmem:[%s6155 + $0x48] sm:$0xf]
  %v6175 = vld [vmem:[%s6155 + $0x4c] sm:$0xf]
  %v6176 = vld [vmem:[%s6155 + $0x50] sm:$0xf]
  %v6177 = vld [vmem:[%s6155 + $0x54] sm:$0xf]
  %v6178 = vld [vmem:[%s6155 + $0x58] sm:$0xf]
  %v6179 = vld [vmem:[%s6155 + $0x5c] sm:$0xf]
  %v6180 = vld [vmem:[%s6155 + $0x60] sm:$0xf]
  %v6206 = vunpack.c.l.b16 %v6156
  %v6207 = vunpack.c.l.b16 %v6157
  %v6208 = vunpack.c.l.b16 %v6158
  %v6209 = vunpack.c.l.b16 %v6159
  %v6210 = vunpack.c.l.b16 %v6160
  %v6211 = vunpack.c.l.b16 %v6161
  %v6212 = vunpack.c.l.b16 %v6162
  %v6213 = vunpack.c.l.b16 %v6163
  %v6214 = vunpack.c.l.b16 %v6164
  %v6215 = vunpack.c.l.b16 %v6165
  %v6216 = vunpack.c.l.b16 %v6166
  %v6217 = vunpack.c.l.b16 %v6167
  %v6218 = vunpack.c.l.b16 %v6168
  %v6219 = vunpack.c.l.b16 %v6169
  %v6220 = vunpack.c.l.b16 %v6170
  %v6221 = vunpack.c.l.b16 %v6171
  %v6222 = vunpack.c.l.b16 %v6172
  %v6223 = vunpack.c.l.b16 %v6173
  %v6224 = vunpack.c.l.b16 %v6174
  %v6225 = vunpack.c.l.b16 %v6175
  %v6226 = vunpack.c.l.b16 %v6176
  %v6227 = vunpack.c.l.b16 %v6177
  %v6228 = vunpack.c.l.b16 %v6178
  %v6229 = vunpack.c.l.b16 %v6179
  %v6230 = vunpack.c.l.b16 %v6180
  %v6231 = vpack.c.b16 %v6207, %v6206
  %v6232 = vpack.c.b16 %v6209, %v6208
  %v6233 = vpack.c.b16 %v6211, %v6210
  %v6234 = vpack.c.b16 %v6213, %v6212
  %v6235 = vpack.c.b16 %v6215, %v6214
  %v6236 = vpack.c.b16 %v6217, %v6216
  %v6237 = vpack.c.b16 %v6219, %v6218
  %v6238 = vpack.c.b16 %v6221, %v6220
  %v6239 = vpack.c.b16 %v6223, %v6222
  %v6240 = vpack.c.b16 %v6225, %v6224
  %v6241 = vpack.c.b16 %v6227, %v6226
  %v6242 = vpack.c.b16 %v6229, %v6228
  %v6243 = vpack.c.b16 %v6230, %v6230
  %v6257 = vsel %vm5846, %v6154, 0
  %v6260 = vsel %vm5850, %v6243, 0
  %6262 = vmatpush.bf16.msra.mxu0 %v6238
  %6263 = vmatpush.bf16.msra.mxu0 %v6237
  %6264 = vmatpush.bf16.msra.mxu0 %v6236
  %6265 = vmatpush.bf16.msra.mxu0 %v6235
  %6266 = vmatpush.bf16.msra.mxu0 %v6234
  %6267 = vmatpush.bf16.msra.mxu0 %v6233
  %6268 = vmatpush.bf16.msra.mxu0 %v6232
  %6269 = vmatpush.bf16.msra.mxu0 %v6231
  %6270 = vmatmul.bf16.gmra.mxu0 %v6153
  %v6271 = vpop.f32.mrf.mxu0
  %v6272 = vadd.f32 0.0, %v6271
  %v6273 = vpop.f32.mrf.mxu0
  %6274 = vdwg.mxu0
  %6275 = vmatpush.bf16.msra.mxu0 0
  %6276 = vmatpush.bf16.msra.mxu0 0
  %6277 = vmatpush.bf16.msra.mxu0 0
  %6278 = vmatpush.bf16.msra.mxu0 %v6260
  %6279 = vmatpush.bf16.msra.mxu0 %v6242
  %6280 = vmatpush.bf16.msra.mxu0 %v6241
  %6281 = vmatpush.bf16.msra.mxu0 %v6240
  %6282 = vmatpush.bf16.msra.mxu0 %v6239
  %6283 = vmatmul.bf16.gmra.mxu0 %v6257
  %v6284 = vpop.f32.mrf.mxu0
  %v6285 = vadd.f32 %v6272, %v6284
  %v6286 = vpop.f32.mrf.mxu0
  %6287 = vdwg.mxu0
  %v6288 = vadd.f32 %v6152, %v6285
  %6289 = vst [vmem:[%s7] sm:$0xff] %v6288
  // Predicated region
  $region30: #{_lambda_.1} parent=0 // pred_check
    _
  $region31: #{_lambda_.1} parent=0 // pred_check_branch
    %6291 = sbr.rel (0) target = $region33
  $region32: #{_lambda_.1} parent=0 // pred_region
    _
  $region33: #{_lambda_.1} parent=0 // pred_fallthru
    _
  // Predicated region
  $region34: #{_lambda_.1} parent=0 // pred_check
    _
  $region35: #{_lambda_.1} parent=0 // pred_check_branch
    %6293 = sbr.rel (0) target = $region37
  $region36: #{_lambda_.1} parent=0 // pred_region
    _
  $region37: #{_lambda_.1} parent=0 // pred_fallthru
    _

</llo_original>
